<compile_context>
chip_gen: v7x
topology: tpu7x:2x2x1
jax: 0.10.0
libtpu: 0.0.40
codegen_flags: <defaults>
</compile_context>

<pallas_src>
import functools
import math

import jax
import jax.numpy as jnp
from jax import lax
from jax.experimental import pallas as pl
from jax.experimental.pallas import tpu as pltpu

_TM = 256      # token-tile target
_TN = 512      # output-feature tile target (elementwise epilogue kernels only)
_TV = 2048     # vocab tile target for the logits head


def _tile(dim, target):
    """Largest tile <= target that evenly divides dim (falls back to the full dim)."""
    if dim <= target:
        return dim
    if dim % target == 0:
        return target
    return dim


# ----------------------------------------------------------------------------
# In-kernel math helpers
# ----------------------------------------------------------------------------
def _gelu(x):
    # tanh-approximate gelu -> transcendental goes to the EUP slot.
    # TODO(synk): reference mptb gelu uses erf; tanh approx differs by ~1e-3.
    return 0.5 * x * (1.0 + jnp.tanh(0.7978845608028654 * (x + 0.044715 * x * x * x)))


def _layernorm(x, gamma, beta, eps):
    u = jnp.mean(x, axis=-1, keepdims=True)
    d = x - u
    s = jnp.mean(d * d, axis=-1, keepdims=True)
    return gamma * (d * lax.rsqrt(s + eps)) + beta


def _dot_nt(x, w):
    """x[M,K] contracted with w[N,K] on K (PyTorch nn.Linear layout, no transpose)."""
    return lax.dot_general(x, w, (((1,), (1,)), ((), ())),
                           preferred_element_type=jnp.float32)


# ----------------------------------------------------------------------------
# Kernel bodies
# ----------------------------------------------------------------------------
def _qkv_kernel(x_ref, wq_ref, wk_ref, wv_ref, bq_ref, bk_ref, bv_ref,
                q_ref, k_ref, v_ref):
    x = x_ref[...]                                     # read activation once
    q_ref[...] = (_dot_nt(x, wq_ref[...]) + bq_ref[...]).astype(q_ref.dtype)
    k_ref[...] = (_dot_nt(x, wk_ref[...]) + bk_ref[...]).astype(k_ref.dtype)
    v_ref[...] = (_dot_nt(x, wv_ref[...]) + bv_ref[...]).astype(v_ref.dtype)


def _attention_kernel(q_ref, k_ref, v_ref, m_ref, o_ref, *, heads, dh, scale):
    q = q_ref[...]                                     # [S, heads*dh] bf16
    k = k_ref[...]
    v = v_ref[...]
    m = m_ref[0]                                       # [1, S] additive mask (f32)
    parts = []
    for h in range(heads):                             # static unroll over grouped heads
        sl = slice(h * dh, (h + 1) * dh)
        s = _dot_nt(q[:, sl], k[:, sl]) * scale + m    # Q@K^T without any transpose
        s = s - jnp.max(s, axis=-1, keepdims=True)
        p = jnp.exp(s)
        p = p * pl.reciprocal(jnp.sum(p, axis=-1, keepdims=True), approx=True)
        parts.append(jnp.dot(p.astype(v.dtype), v[:, sl],
                             preferred_element_type=jnp.float32))
    o_ref[...] = jnp.concatenate(parts, axis=-1).astype(o_ref.dtype)


def _linear_act_kernel(x_ref, w_ref, b_ref, o_ref, *, activation):
    y = _dot_nt(x_ref[...], w_ref[...]) + b_ref[...]
    if activation == "gelu":
        y = _gelu(y)
    o_ref[...] = y.astype(o_ref.dtype)


def _linear_res_ln_kernel(x_ref, w_ref, b_ref, res_ref, g_ref, bt_ref, o_ref,
                          *, eps, activation):
    y = _dot_nt(x_ref[...], w_ref[...]) + b_ref[...]
    if activation == "gelu":
        y = _gelu(y)
    y = y + res_ref[...].astype(jnp.float32)
    o_ref[...] = _layernorm(y, g_ref[...], bt_ref[...], eps).astype(o_ref.dtype)


def _linear_ln_kernel(x_ref, w_ref, b_ref, g_ref, bt_ref, o_ref, *, eps, activation):
    y = _dot_nt(x_ref[...], w_ref[...]) + b_ref[...]
    if activation == "gelu":
        y = _gelu(y)
    o_ref[...] = _layernorm(y, g_ref[...], bt_ref[...], eps).astype(o_ref.dtype)


def _mlm_logits_kernel(h_ref, pw_ref, we_ref, b_ref, o_ref, e_ref):
    # e = LN(gelu(dense(h))) @ proj_w, computed once per M-tile, cached in VMEM scratch.
    @pl.when(pl.program_id(1) == 0)
    def _():
        e = lax.dot_general(h_ref[...], pw_ref[...], (((1,), (0,)), ((), ())),
                            preferred_element_type=jnp.float32)
        e_ref[...] = e.astype(e_ref.dtype)
    logits = _dot_nt(e_ref[...], we_ref[...]) + b_ref[...]   # e @ word_emb.T (no .T copy)
    o_ref[...] = logits.astype(o_ref.dtype)


# ----------------------------------------------------------------------------
# pallas_call wrappers
# ----------------------------------------------------------------------------
def pallas_qkv(x, wq, wk, wv, bq, bk, bv):
    M, K = x.shape
    H = wq.shape[0]
    tm = _tile(M, _TM)
    xspec = pl.BlockSpec((tm, K), lambda i: (i, 0))
    wspec = pl.BlockSpec((H, K), lambda i: (0, 0))
    bspec = pl.BlockSpec((1, H), lambda i: (0, 0))
    ospec = pl.BlockSpec((tm, H), lambda i: (i, 0))
    shp = jax.ShapeDtypeStruct((M, H), jnp.bfloat16)
    return pl.pallas_call(
        _qkv_kernel,
        out_shape=(shp, shp, shp),
        grid=(M // tm,),
        in_specs=[xspec, wspec, wspec, wspec, bspec, bspec, bspec],
        out_specs=(ospec, ospec, ospec),
        compiler_params=pltpu.CompilerParams(dimension_semantics=("parallel",)),
    )(x, wq, wk, wv, bq, bk, bv)


def pallas_attention(q, k, v, mask, *, B, S, H, nh, dh):
    M = q.shape[0]
    hb = min(nh, max(1, 128 // dh))          # heads per grid step -> lane-dense blocks
    while nh % hb:
        hb -= 1
    if (hb * dh) % 128 != 0 and hb * dh != H:
        hb = nh                              # fall back to full-H blocks
    bw = hb * dh
    blk = pl.BlockSpec((S, bw), lambda b, g: (b, g))
    kern = functools.partial(_attention_kernel, heads=hb, dh=dh,
                             scale=1.0 / math.sqrt(dh))
    return pl.pallas_call(
        kern,
        out_shape=jax.ShapeDtypeStruct((M, H), jnp.bfloat16),
        grid=(B, nh // hb),
        in_specs=[blk, blk, blk,
                  pl.BlockSpec((1, 1, S), lambda b, g: (b, 0, 0))],
        out_specs=blk,
        compiler_params=pltpu.CompilerParams(
            dimension_semantics=("parallel", "parallel")),
    )(q, k, v, mask)


def pallas_linear(x, w, b, *, activation=None):
    M, K = x.shape
    N = w.shape[0]
    tm = _tile(M, _TM)
    tn = _tile(N, _TN)
    return pl.pallas_call(
        functools.partial(_linear_act_kernel, activation=activation),
        out_shape=jax.ShapeDtypeStruct((M, N), jnp.bfloat16),
        grid=(M // tm, N // tn),
        in_specs=[pl.BlockSpec((tm, K), lambda i, j: (i, 0)),
                  pl.BlockSpec((tn, K), lambda i, j: (j, 0)),
                  pl.BlockSpec((1, tn), lambda i, j: (0, j))],
        out_specs=pl.BlockSpec((tm, tn), lambda i, j: (i, j)),
        compiler_params=pltpu.CompilerParams(
            dimension_semantics=("parallel", "parallel")),
    )(x, w, b)


def pallas_linear_res_ln(x, w, b, res, gamma, beta, *, activation=None, eps=1e-12):
    M, K = x.shape
    N = w.shape[0]
    tm = _tile(M, _TM)
    return pl.pallas_call(
        functools.partial(_linear_res_ln_kernel, eps=eps, activation=activation),
        out_shape=jax.ShapeDtypeStruct((M, N), jnp.bfloat16),
        grid=(M // tm,),
        in_specs=[pl.BlockSpec((tm, K), lambda i: (i, 0)),
                  pl.BlockSpec((N, K), lambda i: (0, 0)),
                  pl.BlockSpec((1, N), lambda i: (0, 0)),
                  pl.BlockSpec((tm, N), lambda i: (i, 0)),
                  pl.BlockSpec((1, N), lambda i: (0, 0)),
                  pl.BlockSpec((1, N), lambda i: (0, 0))],
        out_specs=pl.BlockSpec((tm, N), lambda i: (i, 0)),
        compiler_params=pltpu.CompilerParams(dimension_semantics=("parallel",)),
    )(x, w, b, res, gamma, beta)


def pallas_linear_ln(x, w, b, gamma, beta, *, activation=None, eps=1e-12):
    M, K = x.shape
    N = w.shape[0]
    tm = _tile(M, _TM)
    return pl.pallas_call(
        functools.partial(_linear_ln_kernel, eps=eps, activation=activation),
        out_shape=jax.ShapeDtypeStruct((M, N), jnp.bfloat16),
        grid=(M // tm,),
        in_specs=[pl.BlockSpec((tm, K), lambda i: (i, 0)),
                  pl.BlockSpec((N, K), lambda i: (0, 0)),
                  pl.BlockSpec((1, N), lambda i: (0, 0)),
                  pl.BlockSpec((1, N), lambda i: (0, 0)),
                  pl.BlockSpec((1, N), lambda i: (0, 0))],
        out_specs=pl.BlockSpec((tm, N), lambda i: (i, 0)),
        compiler_params=pltpu.CompilerParams(dimension_semantics=("parallel",)),
    )(x, w, b, gamma, beta)


def pallas_mlm_logits(h, proj_w, word_emb, bias):
    M, H = h.shape
    E = proj_w.shape[1]
    V = word_emb.shape[0]
    tm = _tile(M, _TM)
    tv = _tile(V, _TV)
    return pl.pallas_call(
        _mlm_logits_kernel,
        out_shape=jax.ShapeDtypeStruct((M, V), jnp.float32),
        grid=(M // tm, V // tv),
        in_specs=[pl.BlockSpec((tm, H), lambda i, j: (i, 0)),
                  pl.BlockSpec((H, E), lambda i, j: (0, 0)),
                  pl.BlockSpec((tv, E), lambda i, j: (j, 0)),
                  pl.BlockSpec((1, tv), lambda i, j: (0, j))],
        out_specs=pl.BlockSpec((tm, tv), lambda i, j: (i, j)),
        scratch_shapes=[pltpu.VMEM((tm, E), jnp.bfloat16)],
        compiler_params=pltpu.CompilerParams(
            dimension_semantics=("parallel", "arbitrary")),
    )(h, proj_w, word_emb, bias)


# ----------------------------------------------------------------------------
# Parameters (deterministic synthetic init mirroring the module's __init__)
# ----------------------------------------------------------------------------
def init_params(cfg, seed=0):
    std = cfg["initializer_range"]
    ks = jax.random.split(jax.random.PRNGKey(seed), 16)

    def nrm(k, shape):
        return jax.random.normal(k, shape, jnp.float32) * std

    V, E, H = cfg["vocab_size"], cfg["embedding_size"], cfg["hidden_size"]
    I, P, T = cfg["intermediate_size"], cfg["max_position_embeddings"], cfg["type_vocab_size"]

    word_emb = nrm(ks[0], (V, E)).at[0].set(0.0)      # padding_idx=0 row zeroed
    return {
        "word_emb": word_emb,
        "proj_w": nrm(ks[1], (H, E)),                 # nn.Linear(E, H, bias=False).weight
        "tok_emb": nrm(ks[2], (T, H)),
        "pos_emb": nrm(ks[3], (P, H)),
        "emb_ln_g": jnp.ones((H,), jnp.float32), "emb_ln_b": jnp.zeros((H,), jnp.float32),
        "wq": nrm(ks[4], (H, H)), "bq": jnp.zeros((H,), jnp.float32),
        "wk": nrm(ks[5], (H, H)), "bk": jnp.zeros((H,), jnp.float32),
        "wv": nrm(ks[6], (H, H)), "bv": jnp.zeros((H,), jnp.float32),
        "wo": nrm(ks[7], (H, H)), "bo": jnp.zeros((H,), jnp.float32),
        "attn_ln_g": jnp.ones((H,), jnp.float32), "attn_ln_b": jnp.zeros((H,), jnp.float32),
        "inter_w": nrm(ks[8], (I, H)), "inter_b": jnp.zeros((I,), jnp.float32),
        "out_w": nrm(ks[9], (H, I)), "out_b": jnp.zeros((H,), jnp.float32),
        "ffn_ln_g": jnp.ones((H,), jnp.float32), "ffn_ln_b": jnp.zeros((H,), jnp.float32),
        "mlm_dense_w": nrm(ks[10], (H, H)), "mlm_dense_b": jnp.zeros((H,), jnp.float32),
        "mlm_ln_g": jnp.ones((H,), jnp.float32), "mlm_ln_b": jnp.zeros((H,), jnp.float32),
        "mlm_bias": jnp.zeros((V,), jnp.float32),
    }


def prepare_params(p):
    """One-time prep (hoisted out of the layer loop): bf16 matmul operands,
    (1, N)-shaped f32 biases / LN params.  Weights stay in PyTorch [N, K] layout
    (kernels contract with dot_general, no transposes)."""
    bf = lambda a: a.astype(jnp.bfloat16)
    r = lambda a: a.reshape(1, -1)
    H = p["wq"].shape[0]
    return {
        "word_emb": bf(p["word_emb"]),
        "proj_w": bf(p["proj_w"]),
        "tok_emb": p["tok_emb"], "pos_emb": p["pos_emb"],
        "emb_ln_g": r(p["emb_ln_g"]), "emb_ln_b": r(p["emb_ln_b"]),
        "wq": bf(p["wq"]), "wk": bf(p["wk"]), "wv": bf(p["wv"]),
        "bq": r(p["bq"]), "bk": r(p["bk"]), "bv": r(p["bv"]),
        "wo": bf(p["wo"]), "bo": r(p["bo"]),
        "attn_ln_g": r(p["attn_ln_g"]), "attn_ln_b": r(p["attn_ln_b"]),
        "inter_w": bf(p["inter_w"]), "inter_b": r(p["inter_b"]),
        "out_w": bf(p["out_w"]), "out_b": r(p["out_b"]),
        "ffn_ln_g": r(p["ffn_ln_g"]), "ffn_ln_b": r(p["ffn_ln_b"]),
        "mlm_dense_w": bf(p["mlm_dense_w"]), "mlm_dense_b": r(p["mlm_dense_b"]),
        "mlm_ln_g": r(p["mlm_ln_g"]), "mlm_ln_b": r(p["mlm_ln_b"]),
        "mlm_bias": r(p["mlm_bias"]),
        "zero_h": jnp.zeros((1, H), jnp.float32),     # projection linear has no bias
    }


# ----------------------------------------------------------------------------
# Forward pass
# ----------------------------------------------------------------------------
def transformer_block(p, x, ext_mask, *, B, S, H, nh, dh):
    q, k, v = pallas_qkv(x, p["wq"], p["wk"], p["wv"], p["bq"], p["bk"], p["bv"])
    ctx = pallas_attention(q, k, v, ext_mask, B=B, S=S, H=H, nh=nh, dh=dh)
    attn_out = pallas_linear_res_ln(ctx, p["wo"], p["bo"], x,
                                    p["attn_ln_g"], p["attn_ln_b"])
    inter = pallas_linear(attn_out, p["inter_w"], p["inter_b"], activation="gelu")
    return pallas_linear_res_ln(inter, p["out_w"], p["out_b"], attn_out,
                                p["ffn_ln_g"], p["ffn_ln_b"])


def projection_only_masked_lm_forward(p, input_ids, segment_ids, input_mask, cfg):
    B, S = input_ids.shape
    H, V = cfg["hidden_size"], cfg["vocab_size"]
    nh = cfg["num_attention_heads"]
    dh = H // nh
    M = B * S

    # ---- ProjectionEmbeddings: gathers in XLA glue, proj+add+LN fused in Pallas ----
    we = jnp.take(p["word_emb"], input_ids, axis=0).reshape(M, -1)          # [M,E] bf16
    pos_ids = jnp.arange(S, dtype=jnp.int32)
    addend = (jnp.take(p["tok_emb"], segment_ids, axis=0)
              + jnp.take(p["pos_emb"], pos_ids, axis=0)[None, :, :])
    addend = addend.reshape(M, H).astype(jnp.bfloat16)
    x = pallas_linear_res_ln(we, p["proj_w"], p["zero_h"], addend,
                             p["emb_ln_g"], p["emb_ln_b"])                   # [M,H] bf16
    # dropout: identity (inference)

    # ---- extended attention mask: (1 - mask) * -10000, [B, 1, S] additive ----
    ext = ((1.0 - input_mask.astype(jnp.float32)) * -10000.0)[:, None, :]

    # ---- OneLayerEncoder: shared ALBERT block applied num_hidden_layers times ----
    for _ in range(cfg["num_hidden_layers"]):
        x = transformer_block(p, x, ext, B=B, S=S, H=H, nh=nh, dh=dh)

    # ---- ProjectionMaskedLM head ----
    h = pallas_linear_ln(x, p["mlm_dense_w"], p["mlm_dense_b"],
                         p["mlm_ln_g"], p["mlm_ln_b"], activation="gelu")
    logits = pallas_mlm_logits(h, p["proj_w"], p["word_emb"], p["mlm_bias"])
    return logits.reshape(B, S, V), None


# ----------------------------------------------------------------------------
if __name__ == "__main__":
    cfg = dict(
        vocab_size=64,
        embedding_size=16,
        hidden_size=32,
        num_attention_heads=4,
        intermediate_size=64,
        max_position_embeddings=16,
        type_vocab_size=2,
        num_hidden_layers=2,
        hidden_dropout_prob=0.0,
        initializer_range=0.02,
    )
    B, S = 2, 8

    params = prepare_params(init_params(cfg, seed=0))

    key = jax.random.PRNGKey(0)
    k1, k2 = jax.random.split(key)
    input_ids = jax.random.randint(k1, (B, S), 1, cfg["vocab_size"], dtype=jnp.int32)
    segment_ids = jax.random.randint(k2, (B, S), 0, cfg["type_vocab_size"], dtype=jnp.int32)
    input_mask = jnp.concatenate(
        [jnp.ones((B, S - 2), jnp.float32), jnp.zeros((B, 2), jnp.float32)], axis=1)

    @jax.jit
    def fwd(p, ids, seg, mask):
        return projection_only_masked_lm_forward(p, ids, seg, mask, cfg)

    logits_lm, sop = fwd(params, input_ids, segment_ids, input_mask)
    jax.block_until_ready(logits_lm)

    assert logits_lm.shape == (B, S, cfg["vocab_size"])
    assert sop is None
    assert bool(jnp.all(jnp.isfinite(logits_lm)))
    print("KERNEL_OK")
</pallas_src>

<mosaic_0001>
module attributes {stable_mosaic.version = 11 : i64} {
  func.func @_qkv_kernel(%arg0: i32, %arg1: memref<16x32xbf16, #tpu.memory_space<vmem>>, %arg2: memref<32x32xbf16, #tpu.memory_space<vmem>>, %arg3: memref<32x32xbf16, #tpu.memory_space<vmem>>, %arg4: memref<32x32xbf16, #tpu.memory_space<vmem>>, %arg5: memref<1x32xf32, #tpu.memory_space<vmem>>, %arg6: memref<1x32xf32, #tpu.memory_space<vmem>>, %arg7: memref<1x32xf32, #tpu.memory_space<vmem>>, %arg8: memref<16x32xbf16, #tpu.memory_space<vmem>>, %arg9: memref<16x32xbf16, #tpu.memory_space<vmem>>, %arg10: memref<16x32xbf16, #tpu.memory_space<vmem>>) attributes {dimension_semantics = [#tpu.dimension_semantics<parallel>], iteration_bounds = array<i64: 1>, scalar_prefetch = 0 : i64, scratch_operands = 0 : i64, tpu.core_type = #tpu.core_type<tc>, window_params = [{transform_indices = @transform_0, window_bounds = array<i64: 16, 32>}, {pipeline_mode = #tpu.pipeline_mode<synchronous>, transform_indices = @transform_1, window_bounds = array<i64: 32, 32>}, {pipeline_mode = #tpu.pipeline_mode<synchronous>, transform_indices = @transform_2, window_bounds = array<i64: 32, 32>}, {pipeline_mode = #tpu.pipeline_mode<synchronous>, transform_indices = @transform_3, window_bounds = array<i64: 32, 32>}, {pipeline_mode = #tpu.pipeline_mode<synchronous>, transform_indices = @transform_4, window_bounds = array<i64: 1, 32>}, {pipeline_mode = #tpu.pipeline_mode<synchronous>, transform_indices = @transform_5, window_bounds = array<i64: 1, 32>}, {pipeline_mode = #tpu.pipeline_mode<synchronous>, transform_indices = @transform_6, window_bounds = array<i64: 1, 32>}, {transform_indices = @transform_7, window_bounds = array<i64: 16, 32>}, {transform_indices = @transform_8, window_bounds = array<i64: 16, 32>}, {transform_indices = @transform_9, window_bounds = array<i64: 16, 32>}]} {
    %c0 = arith.constant 0 : index
    %c0_0 = arith.constant 0 : index
    %0 = vector.load %arg1[%c0, %c0_0] : memref<16x32xbf16, #tpu.memory_space<vmem>>, vector<16x32xbf16>
    %c0_1 = arith.constant 0 : index
    %c0_2 = arith.constant 0 : index
    %1 = vector.load %arg2[%c0_1, %c0_2] : memref<32x32xbf16, #tpu.memory_space<vmem>>, vector<32x32xbf16>
    %cst = arith.constant dense<0.000000e+00> : vector<16x32xf32>
    %2 = tpu.matmul %0, %1, %cst {dimension_numbers = #tpu.dot_dimension_numbers<[1], [1], [0], [0], [0, 0, 1, 0], [], []>} : vector<16x32xbf16>, vector<32x32xbf16>, vector<16x32xf32> -> vector<16x32xf32>
    %c0_3 = arith.constant 0 : index
    %c0_4 = arith.constant 0 : index
    %3 = vector.load %arg5[%c0_3, %c0_4] : memref<1x32xf32, #tpu.memory_space<vmem>>, vector<1x32xf32>
    %4 = vector.broadcast %3 : vector<1x32xf32> to vector<16x32xf32>
    %5 = arith.addf %2, %4 : vector<16x32xf32>
    %6 = arith.truncf %5 : vector<16x32xf32> to vector<16x32xbf16>
    %c0_5 = arith.constant 0 : index
    %c0_6 = arith.constant 0 : index
    %7 = vector.load %arg8[%c0_5, %c0_6] : memref<16x32xbf16, #tpu.memory_space<vmem>>, vector<16x32xbf16>
    tpu.vector_store %arg8[%c0_5, %c0_6], %6 {strides = array<i32>} : memref<16x32xbf16, #tpu.memory_space<vmem>>, vector<16x32xbf16>,
    %c0_7 = arith.constant 0 : index
    %c0_8 = arith.constant 0 : index
    %8 = vector.load %arg3[%c0_7, %c0_8] : memref<32x32xbf16, #tpu.memory_space<vmem>>, vector<32x32xbf16>
    %cst_9 = arith.constant dense<0.000000e+00> : vector<16x32xf32>
    %9 = tpu.matmul %0, %8, %cst_9 {dimension_numbers = #tpu.dot_dimension_numbers<[1], [1], [0], [0], [0, 0, 1, 0], [], []>} : vector<16x32xbf16>, vector<32x32xbf16>, vector<16x32xf32> -> vector<16x32xf32>
    %c0_10 = arith.constant 0 : index
    %c0_11 = arith.constant 0 : index
    %10 = vector.load %arg6[%c0_10, %c0_11] : memref<1x32xf32, #tpu.memory_space<vmem>>, vector<1x32xf32>
    %11 = vector.broadcast %10 : vector<1x32xf32> to vector<16x32xf32>
    %12 = arith.addf %9, %11 : vector<16x32xf32>
    %13 = arith.truncf %12 : vector<16x32xf32> to vector<16x32xbf16>
    %c0_12 = arith.constant 0 : index
    %c0_13 = arith.constant 0 : index
    %14 = vector.load %arg9[%c0_12, %c0_13] : memref<16x32xbf16, #tpu.memory_space<vmem>>, vector<16x32xbf16>
    tpu.vector_store %arg9[%c0_12, %c0_13], %13 {strides = array<i32>} : memref<16x32xbf16, #tpu.memory_space<vmem>>, vector<16x32xbf16>,
    %c0_14 = arith.constant 0 : index
    %c0_15 = arith.constant 0 : index
    %15 = vector.load %arg4[%c0_14, %c0_15] : memref<32x32xbf16, #tpu.memory_space<vmem>>, vector<32x32xbf16>
    %cst_16 = arith.constant dense<0.000000e+00> : vector<16x32xf32>
    %16 = tpu.matmul %0, %15, %cst_16 {dimension_numbers = #tpu.dot_dimension_numbers<[1], [1], [0], [0], [0, 0, 1, 0], [], []>} : vector<16x32xbf16>, vector<32x32xbf16>, vector<16x32xf32> -> vector<16x32xf32>
    %c0_17 = arith.constant 0 : index
    %c0_18 = arith.constant 0 : index
    %17 = vector.load %arg7[%c0_17, %c0_18] : memref<1x32xf32, #tpu.memory_space<vmem>>, vector<1x32xf32>
    %18 = vector.broadcast %17 : vector<1x32xf32> to vector<16x32xf32>
    %19 = arith.addf %16, %18 : vector<16x32xf32>
    %20 = arith.truncf %19 : vector<16x32xf32> to vector<16x32xbf16>
    %c0_19 = arith.constant 0 : index
    %c0_20 = arith.constant 0 : index
    %21 = vector.load %arg10[%c0_19, %c0_20] : memref<16x32xbf16, #tpu.memory_space<vmem>>, vector<16x32xbf16>
    tpu.vector_store %arg10[%c0_19, %c0_20], %20 {strides = array<i32>} : memref<16x32xbf16, #tpu.memory_space<vmem>>, vector<16x32xbf16>,
    return
  }
  func.func @transform_0(%arg0: i32) -> (i32, i32) {
    %c0_i32 = arith.constant 0 : i32
    %c0_i32_0 = arith.constant 0 : i32
    return %arg0, %c0_i32 : i32, i32
  }
  func.func @transform_1(%arg0: i32) -> (i32, i32) {
    %c0_i32 = arith.constant 0 : i32
    %c0_i32_0 = arith.constant 0 : i32
    %c0_i32_1 = arith.constant 0 : i32
    return %c0_i32, %c0_i32_0 : i32, i32
  }
  func.func @transform_2(%arg0: i32) -> (i32, i32) {
    %c0_i32 = arith.constant 0 : i32
    %c0_i32_0 = arith.constant 0 : i32
    %c0_i32_1 = arith.constant 0 : i32
    return %c0_i32, %c0_i32_0 : i32, i32
  }
  func.func @transform_3(%arg0: i32) -> (i32, i32) {
    %c0_i32 = arith.constant 0 : i32
    %c0_i32_0 = arith.constant 0 : i32
    %c0_i32_1 = arith.constant 0 : i32
    return %c0_i32, %c0_i32_0 : i32, i32
  }
  func.func @transform_4(%arg0: i32) -> (i32, i32) {
    %c0_i32 = arith.constant 0 : i32
    %c0_i32_0 = arith.constant 0 : i32
    %c0_i32_1 = arith.constant 0 : i32
    return %c0_i32, %c0_i32_0 : i32, i32
  }
  func.func @transform_5(%arg0: i32) -> (i32, i32) {
    %c0_i32 = arith.constant 0 : i32
    %c0_i32_0 = arith.constant 0 : i32
    %c0_i32_1 = arith.constant 0 : i32
    return %c0_i32, %c0_i32_0 : i32, i32
  }
  func.func @transform_6(%arg0: i32) -> (i32, i32) {
    %c0_i32 = arith.constant 0 : i32
    %c0_i32_0 = arith.constant 0 : i32
    %c0_i32_1 = arith.constant 0 : i32
    return %c0_i32, %c0_i32_0 : i32, i32
  }
  func.func @transform_7(%arg0: i32) -> (i32, i32) {
    %c0_i32 = arith.constant 0 : i32
    %c0_i32_0 = arith.constant 0 : i32
    return %arg0, %c0_i32 : i32, i32
  }
  func.func @transform_8(%arg0: i32) -> (i32, i32) {
    %c0_i32 = arith.constant 0 : i32
    %c0_i32_0 = arith.constant 0 : i32
    return %arg0, %c0_i32 : i32, i32
  }
  func.func @transform_9(%arg0: i32) -> (i32, i32) {
    %c0_i32 = arith.constant 0 : i32
    %c0_i32_0 = arith.constant 0 : i32
    return %arg0, %c0_i32 : i32, i32
  }
}

module attributes {stable_mosaic.version = 11 : i64} {
  func.func @_linear_res_ln_kernel(%arg0: i32, %arg1: memref<16x16xbf16, #tpu.memory_space<vmem>>, %arg2: memref<32x16xbf16, #tpu.memory_space<vmem>>, %arg3: memref<1x32xf32, #tpu.memory_space<vmem>>, %arg4: memref<16x32xbf16, #tpu.memory_space<vmem>>, %arg5: memref<1x32xf32, #tpu.memory_space<vmem>>, %arg6: memref<1x32xf32, #tpu.memory_space<vmem>>, %arg7: memref<16x32xbf16, #tpu.memory_space<vmem>>) attributes {dimension_semantics = [#tpu.dimension_semantics<parallel>], iteration_bounds = array<i64: 1>, scalar_prefetch = 0 : i64, scratch_operands = 0 : i64, tpu.core_type = #tpu.core_type<tc>, window_params = [{transform_indices = @transform_0, window_bounds = array<i64: 16, 16>}, {pipeline_mode = #tpu.pipeline_mode<synchronous>, transform_indices = @transform_1, window_bounds = array<i64: 32, 16>}, {pipeline_mode = #tpu.pipeline_mode<synchronous>, transform_indices = @transform_2, window_bounds = array<i64: 1, 32>}, {transform_indices = @transform_3, window_bounds = array<i64: 16, 32>}, {pipeline_mode = #tpu.pipeline_mode<synchronous>, transform_indices = @transform_4, window_bounds = array<i64: 1, 32>}, {pipeline_mode = #tpu.pipeline_mode<synchronous>, transform_indices = @transform_5, window_bounds = array<i64: 1, 32>}, {transform_indices = @transform_6, window_bounds = array<i64: 16, 32>}]} {
    %c0 = arith.constant 0 : index
    %c0_0 = arith.constant 0 : index
    %0 = vector.load %arg1[%c0, %c0_0] : memref<16x16xbf16, #tpu.memory_space<vmem>>, vector<16x16xbf16>
    %c0_1 = arith.constant 0 : index
    %c0_2 = arith.constant 0 : index
    %1 = vector.load %arg2[%c0_1, %c0_2] : memref<32x16xbf16, #tpu.memory_space<vmem>>, vector<32x16xbf16>
    %cst = arith.constant dense<0.000000e+00> : vector<16x32xf32>
    %2 = tpu.matmul %0, %1, %cst {dimension_numbers = #tpu.dot_dimension_numbers<[1], [1], [0], [0], [0, 0, 1, 0], [], []>} : vector<16x16xbf16>, vector<32x16xbf16>, vector<16x32xf32> -> vector<16x32xf32>
    %c0_3 = arith.constant 0 : index
    %c0_4 = arith.constant 0 : index
    %3 = vector.load %arg3[%c0_3, %c0_4] : memref<1x32xf32, #tpu.memory_space<vmem>>, vector<1x32xf32>
    %4 = vector.broadcast %3 : vector<1x32xf32> to vector<16x32xf32>
    %5 = arith.addf %2, %4 : vector<16x32xf32>
    %c0_5 = arith.constant 0 : index
    %c0_6 = arith.constant 0 : index
    %6 = vector.load %arg4[%c0_5, %c0_6] : memref<16x32xbf16, #tpu.memory_space<vmem>>, vector<16x32xbf16>
    %7 = arith.extf %6 : vector<16x32xbf16> to vector<16x32xf32>
    %8 = arith.addf %5, %7 : vector<16x32xf32>
    %c0_7 = arith.constant 0 : index
    %c0_8 = arith.constant 0 : index
    %9 = vector.load %arg5[%c0_7, %c0_8] : memref<1x32xf32, #tpu.memory_space<vmem>>, vector<1x32xf32>
    %c0_9 = arith.constant 0 : index
    %c0_10 = arith.constant 0 : index
    %10 = vector.load %arg6[%c0_9, %c0_10] : memref<1x32xf32, #tpu.memory_space<vmem>>, vector<1x32xf32>
    %cst_11 = arith.constant dense<0.000000e+00> : vector<16xf32>
    %11 = vector.multi_reduction <add>, %8, %cst_11 [1] : vector<16x32xf32> to vector<16xf32>
    %12 = vector.shape_cast %11 : vector<16xf32> to vector<16x1xf32>
    %cst_12 = arith.constant 3.200000e+01 : f32
    %13 = vector.broadcast %cst_12 : f32 to vector<16x1xf32>
    %14 = arith.divf %12, %13 : vector<16x1xf32>
    %15 = vector.broadcast %14 : vector<16x1xf32> to vector<16x32xf32>
    %16 = arith.subf %8, %15 : vector<16x32xf32>
    %17 = arith.mulf %16, %16 : vector<16x32xf32>
    %cst_13 = arith.constant dense<0.000000e+00> : vector<16xf32>
    %18 = vector.multi_reduction <add>, %17, %cst_13 [1] : vector<16x32xf32> to vector<16xf32>
    %19 = vector.shape_cast %18 : vector<16xf32> to vector<16x1xf32>
    %cst_14 = arith.constant 3.200000e+01 : f32
    %20 = vector.broadcast %cst_14 : f32 to vector<16x1xf32>
    %21 = arith.divf %19, %20 : vector<16x1xf32>
    %cst_15 = arith.constant 9.99999996E-13 : f32
    %22 = vector.broadcast %cst_15 : f32 to vector<16x1xf32>
    %23 = arith.addf %21, %22 : vector<16x1xf32>
    %24 = math.rsqrt %23 : vector<16x1xf32>
    %25 = vector.broadcast %24 : vector<16x1xf32> to vector<16x32xf32>
    %26 = arith.mulf %16, %25 : vector<16x32xf32>
    %27 = vector.broadcast %9 : vector<1x32xf32> to vector<16x32xf32>
    %28 = arith.mulf %27, %26 : vector<16x32xf32>
    %29 = vector.broadcast %10 : vector<1x32xf32> to vector<16x32xf32>
    %30 = arith.addf %28, %29 : vector<16x32xf32>
    %31 = arith.truncf %30 : vector<16x32xf32> to vector<16x32xbf16>
    %c0_16 = arith.constant 0 : index
    %c0_17 = arith.constant 0 : index
    %32 = vector.load %arg7[%c0_16, %c0_17] : memref<16x32xbf16, #tpu.memory_space<vmem>>, vector<16x32xbf16>
    tpu.vector_store %arg7[%c0_16, %c0_17], %31 {strides = array<i32>} : memref<16x32xbf16, #tpu.memory_space<vmem>>, vector<16x32xbf16>,
    return
  }
  func.func @transform_0(%arg0: i32) -> (i32, i32) {
    %c0_i32 = arith.constant 0 : i32
    %c0_i32_0 = arith.constant 0 : i32
    return %arg0, %c0_i32 : i32, i32
  }
  func.func @transform_1(%arg0: i32) -> (i32, i32) {
    %c0_i32 = arith.constant 0 : i32
    %c0_i32_0 = arith.constant 0 : i32
    %c0_i32_1 = arith.constant 0 : i32
    return %c0_i32, %c0_i32_0 : i32, i32
  }
  func.func @transform_2(%arg0: i32) -> (i32, i32) {
    %c0_i32 = arith.constant 0 : i32
    %c0_i32_0 = arith.constant 0 : i32
    %c0_i32_1 = arith.constant 0 : i32
    return %c0_i32, %c0_i32_0 : i32, i32
  }
  func.func @transform_3(%arg0: i32) -> (i32, i32) {
    %c0_i32 = arith.constant 0 : i32
    %c0_i32_0 = arith.constant 0 : i32
    return %arg0, %c0_i32 : i32, i32
  }
  func.func @transform_4(%arg0: i32) -> (i32, i32) {
    %c0_i32 = arith.constant 0 : i32
    %c0_i32_0 = arith.constant 0 : i32
    %c0_i32_1 = arith.constant 0 : i32
    return %c0_i32, %c0_i32_0 : i32, i32
  }
  func.func @transform_5(%arg0: i32) -> (i32, i32) {
    %c0_i32 = arith.constant 0 : i32
    %c0_i32_0 = arith.constant 0 : i32
    %c0_i32_1 = arith.constant 0 : i32
    return %c0_i32, %c0_i32_0 : i32, i32
  }
  func.func @transform_6(%arg0: i32) -> (i32, i32) {
    %c0_i32 = arith.constant 0 : i32
    %c0_i32_0 = arith.constant 0 : i32
    return %arg0, %c0_i32 : i32, i32
  }
}

module attributes {stable_mosaic.version = 11 : i64} {
  func.func @_attention_kernel(%arg0: i32, %arg1: i32, %arg2: memref<8x32xbf16, #tpu.memory_space<vmem>>, %arg3: memref<8x32xbf16, #tpu.memory_space<vmem>>, %arg4: memref<8x32xbf16, #tpu.memory_space<vmem>>, %arg5: memref<1x1x8xf32, #tpu.memory_space<vmem>>, %arg6: memref<8x32xbf16, #tpu.memory_space<vmem>>) attributes {dimension_semantics = [#tpu.dimension_semantics<parallel>, #tpu.dimension_semantics<parallel>], iteration_bounds = array<i64: 2, 1>, scalar_prefetch = 0 : i64, scratch_operands = 0 : i64, tpu.core_type = #tpu.core_type<tc>, window_params = [{transform_indices = @transform_0, window_bounds = array<i64: 8, 32>}, {transform_indices = @transform_1, window_bounds = array<i64: 8, 32>}, {transform_indices = @transform_2, window_bounds = array<i64: 8, 32>}, {transform_indices = @transform_3, window_bounds = array<i64: 1, 1, 8>}, {transform_indices = @transform_4, window_bounds = array<i64: 8, 32>}]} {
    %c0 = arith.constant 0 : index
    %c0_0 = arith.constant 0 : index
    %0 = vector.load %arg2[%c0, %c0_0] : memref<8x32xbf16, #tpu.memory_space<vmem>>, vector<8x32xbf16>
    %c0_1 = arith.constant 0 : index
    %c0_2 = arith.constant 0 : index
    %1 = vector.load %arg3[%c0_1, %c0_2] : memref<8x32xbf16, #tpu.memory_space<vmem>>, vector<8x32xbf16>
    %c0_3 = arith.constant 0 : index
    %c0_4 = arith.constant 0 : index
    %2 = vector.load %arg4[%c0_3, %c0_4] : memref<8x32xbf16, #tpu.memory_space<vmem>>, vector<8x32xbf16>
    %c0_5 = arith.constant 0 : index
    %c0_6 = arith.constant 0 : index
    %c0_7 = arith.constant 0 : index
    %3 = vector.load %arg5[%c0_5, %c0_6, %c0_7] : memref<1x1x8xf32, #tpu.memory_space<vmem>>, vector<1x1x8xf32>
    %4 = vector.shape_cast %3 : vector<1x1x8xf32> to vector<1x8xf32>
    %5 = vector.extract_strided_slice %0 {offsets = [0, 0], sizes = [8, 8], strides = [1, 1]} : vector<8x32xbf16> to vector<8x8xbf16>
    %6 = vector.extract_strided_slice %1 {offsets = [0, 0], sizes = [8, 8], strides = [1, 1]} : vector<8x32xbf16> to vector<8x8xbf16>
    %cst = arith.constant dense<0.000000e+00> : vector<8x8xf32>
    %7 = tpu.matmul %5, %6, %cst {dimension_numbers = #tpu.dot_dimension_numbers<[1], [1], [0], [0], [0, 0, 1, 0], [], []>} : vector<8x8xbf16>, vector<8x8xbf16>, vector<8x8xf32> -> vector<8x8xf32>
    %cst_8 = arith.constant 0.353553385 : f32
    %8 = vector.broadcast %cst_8 : f32 to vector<8x8xf32>
    %9 = arith.mulf %7, %8 : vector<8x8xf32>
    %10 = vector.broadcast %4 : vector<1x8xf32> to vector<8x8xf32>
    %11 = arith.addf %9, %10 : vector<8x8xf32>
    %cst_9 = arith.constant dense<0xFF800000> : vector<8xf32>
    %12 = vector.multi_reduction <maximumf>, %11, %cst_9 [1] : vector<8x8xf32> to vector<8xf32>
    %13 = vector.shape_cast %12 : vector<8xf32> to vector<8x1xf32>
    %14 = vector.broadcast %13 : vector<8x1xf32> to vector<8x8xf32>
    %15 = arith.subf %11, %14 : vector<8x8xf32>
    %16 = math.exp %15 : vector<8x8xf32>
    %cst_10 = arith.constant dense<0.000000e+00> : vector<8xf32>
    %17 = vector.multi_reduction <add>, %16, %cst_10 [1] : vector<8x8xf32> to vector<8xf32>
    %18 = vector.shape_cast %17 : vector<8xf32> to vector<8x1xf32>
    %19 = tpu.reciprocal %18 {approx = true} : vector<8x1xf32> -> vector<8x1xf32>
    %20 = vector.broadcast %19 : vector<8x1xf32> to vector<8x8xf32>
    %21 = arith.mulf %16, %20 : vector<8x8xf32>
    %22 = arith.truncf %21 : vector<8x8xf32> to vector<8x8xbf16>
    %23 = vector.extract_strided_slice %2 {offsets = [0, 0], sizes = [8, 8], strides = [1, 1]} : vector<8x32xbf16> to vector<8x8xbf16>
    %cst_11 = arith.constant dense<0.000000e+00> : vector<8x8xf32>
    %24 = tpu.matmul %22, %23, %cst_11 {dimension_numbers = #tpu.dot_dimension_numbers<[1], [0], [0], [1], [0, 0, 1, 1], [], []>} : vector<8x8xbf16>, vector<8x8xbf16>, vector<8x8xf32> -> vector<8x8xf32>
    %25 = vector.extract_strided_slice %0 {offsets = [0, 8], sizes = [8, 8], strides = [1, 1]} : vector<8x32xbf16> to vector<8x8xbf16>
    %26 = vector.extract_strided_slice %1 {offsets = [0, 8], sizes = [8, 8], strides = [1, 1]} : vector<8x32xbf16> to vector<8x8xbf16>
    %cst_12 = arith.constant dense<0.000000e+00> : vector<8x8xf32>
    %27 = tpu.matmul %25, %26, %cst_12 {dimension_numbers = #tpu.dot_dimension_numbers<[1], [1], [0], [0], [0, 0, 1, 0], [], []>} : vector<8x8xbf16>, vector<8x8xbf16>, vector<8x8xf32> -> vector<8x8xf32>
    %cst_13 = arith.constant 0.353553385 : f32
    %28 = vector.broadcast %cst_13 : f32 to vector<8x8xf32>
    %29 = arith.mulf %27, %28 : vector<8x8xf32>
    %30 = vector.broadcast %4 : vector<1x8xf32> to vector<8x8xf32>
    %31 = arith.addf %29, %30 : vector<8x8xf32>
    %cst_14 = arith.constant dense<0xFF800000> : vector<8xf32>
    %32 = vector.multi_reduction <maximumf>, %31, %cst_14 [1] : vector<8x8xf32> to vector<8xf32>
    %33 = vector.shape_cast %32 : vector<8xf32> to vector<8x1xf32>
    %34 = vector.broadcast %33 : vector<8x1xf32> to vector<8x8xf32>
    %35 = arith.subf %31, %34 : vector<8x8xf32>
    %36 = math.exp %35 : vector<8x8xf32>
    %cst_15 = arith.constant dense<0.000000e+00> : vector<8xf32>
    %37 = vector.multi_reduction <add>, %36, %cst_15 [1] : vector<8x8xf32> to vector<8xf32>
    %38 = vector.shape_cast %37 : vector<8xf32> to vector<8x1xf32>
    %39 = tpu.reciprocal %38 {approx = true} : vector<8x1xf32> -> vector<8x1xf32>
    %40 = vector.broadcast %39 : vector<8x1xf32> to vector<8x8xf32>
    %41 = arith.mulf %36, %40 : vector<8x8xf32>
    %42 = arith.truncf %41 : vector<8x8xf32> to vector<8x8xbf16>
    %43 = vector.extract_strided_slice %2 {offsets = [0, 8], sizes = [8, 8], strides = [1, 1]} : vector<8x32xbf16> to vector<8x8xbf16>
    %cst_16 = arith.constant dense<0.000000e+00> : vector<8x8xf32>
    %44 = tpu.matmul %42, %43, %cst_16 {dimension_numbers = #tpu.dot_dimension_numbers<[1], [0], [0], [1], [0, 0, 1, 1], [], []>} : vector<8x8xbf16>, vector<8x8xbf16>, vector<8x8xf32> -> vector<8x8xf32>
    %45 = vector.extract_strided_slice %0 {offsets = [0, 16], sizes = [8, 8], strides = [1, 1]} : vector<8x32xbf16> to vector<8x8xbf16>
    %46 = vector.extract_strided_slice %1 {offsets = [0, 16], sizes = [8, 8], strides = [1, 1]} : vector<8x32xbf16> to vector<8x8xbf16>
    %cst_17 = arith.constant dense<0.000000e+00> : vector<8x8xf32>
    %47 = tpu.matmul %45, %46, %cst_17 {dimension_numbers = #tpu.dot_dimension_numbers<[1], [1], [0], [0], [0, 0, 1, 0], [], []>} : vector<8x8xbf16>, vector<8x8xbf16>, vector<8x8xf32> -> vector<8x8xf32>
    %cst_18 = arith.constant 0.353553385 : f32
    %48 = vector.broadcast %cst_18 : f32 to vector<8x8xf32>
    %49 = arith.mulf %47, %48 : vector<8x8xf32>
    %50 = vector.broadcast %4 : vector<1x8xf32> to vector<8x8xf32>
    %51 = arith.addf %49, %50 : vector<8x8xf32>
    %cst_19 = arith.constant dense<0xFF800000> : vector<8xf32>
    %52 = vector.multi_reduction <maximumf>, %51, %cst_19 [1] : vector<8x8xf32> to vector<8xf32>
    %53 = vector.shape_cast %52 : vector<8xf32> to vector<8x1xf32>
    %54 = vector.broadcast %53 : vector<8x1xf32> to vector<8x8xf32>
    %55 = arith.subf %51, %54 : vector<8x8xf32>
    %56 = math.exp %55 : vector<8x8xf32>
    %cst_20 = arith.constant dense<0.000000e+00> : vector<8xf32>
    %57 = vector.multi_reduction <add>, %56, %cst_20 [1] : vector<8x8xf32> to vector<8xf32>
    %58 = vector.shape_cast %57 : vector<8xf32> to vector<8x1xf32>
    %59 = tpu.reciprocal %58 {approx = true} : vector<8x1xf32> -> vector<8x1xf32>
    %60 = vector.broadcast %59 : vector<8x1xf32> to vector<8x8xf32>
    %61 = arith.mulf %56, %60 : vector<8x8xf32>
    %62 = arith.truncf %61 : vector<8x8xf32> to vector<8x8xbf16>
    %63 = vector.extract_strided_slice %2 {offsets = [0, 16], sizes = [8, 8], strides = [1, 1]} : vector<8x32xbf16> to vector<8x8xbf16>
    %cst_21 = arith.constant dense<0.000000e+00> : vector<8x8xf32>
    %64 = tpu.matmul %62, %63, %cst_21 {dimension_numbers = #tpu.dot_dimension_numbers<[1], [0], [0], [1], [0, 0, 1, 1], [], []>} : vector<8x8xbf16>, vector<8x8xbf16>, vector<8x8xf32> -> vector<8x8xf32>
    %65 = vector.extract_strided_slice %0 {offsets = [0, 24], sizes = [8, 8], strides = [1, 1]} : vector<8x32xbf16> to vector<8x8xbf16>
    %66 = vector.extract_strided_slice %1 {offsets = [0, 24], sizes = [8, 8], strides = [1, 1]} : vector<8x32xbf16> to vector<8x8xbf16>
    %cst_22 = arith.constant dense<0.000000e+00> : vector<8x8xf32>
    %67 = tpu.matmul %65, %66, %cst_22 {dimension_numbers = #tpu.dot_dimension_numbers<[1], [1], [0], [0], [0, 0, 1, 0], [], []>} : vector<8x8xbf16>, vector<8x8xbf16>, vector<8x8xf32> -> vector<8x8xf32>
    %cst_23 = arith.constant 0.353553385 : f32
    %68 = vector.broadcast %cst_23 : f32 to vector<8x8xf32>
    %69 = arith.mulf %67, %68 : vector<8x8xf32>
    %70 = vector.broadcast %4 : vector<1x8xf32> to vector<8x8xf32>
    %71 = arith.addf %69, %70 : vector<8x8xf32>
    %cst_24 = arith.constant dense<0xFF800000> : vector<8xf32>
    %72 = vector.multi_reduction <maximumf>, %71, %cst_24 [1] : vector<8x8xf32> to vector<8xf32>
    %73 = vector.shape_cast %72 : vector<8xf32> to vector<8x1xf32>
    %74 = vector.broadcast %73 : vector<8x1xf32> to vector<8x8xf32>
    %75 = arith.subf %71, %74 : vector<8x8xf32>
    %76 = math.exp %75 : vector<8x8xf32>
    %cst_25 = arith.constant dense<0.000000e+00> : vector<8xf32>
    %77 = vector.multi_reduction <add>, %76, %cst_25 [1] : vector<8x8xf32> to vector<8xf32>
    %78 = vector.shape_cast %77 : vector<8xf32> to vector<8x1xf32>
    %79 = tpu.reciprocal %78 {approx = true} : vector<8x1xf32> -> vector<8x1xf32>
    %80 = vector.broadcast %79 : vector<8x1xf32> to vector<8x8xf32>
    %81 = arith.mulf %76, %80 : vector<8x8xf32>
    %82 = arith.truncf %81 : vector<8x8xf32> to vector<8x8xbf16>
    %83 = vector.extract_strided_slice %2 {offsets = [0, 24], sizes = [8, 8], strides = [1, 1]} : vector<8x32xbf16> to vector<8x8xbf16>
    %cst_26 = arith.constant dense<0.000000e+00> : vector<8x8xf32>
    %84 = tpu.matmul %82, %83, %cst_26 {dimension_numbers = #tpu.dot_dimension_numbers<[1], [0], [0], [1], [0, 0, 1, 1], [], []>} : vector<8x8xbf16>, vector<8x8xbf16>, vector<8x8xf32> -> vector<8x8xf32>
    %85 = tpu.concatenate %24, %44, %64, %84 in 1 : vector<8x8xf32>, vector<8x8xf32>, vector<8x8xf32>, vector<8x8xf32> -> vector<8x32xf32>
    %86 = arith.truncf %85 : vector<8x32xf32> to vector<8x32xbf16>
    %c0_27 = arith.constant 0 : index
    %c0_28 = arith.constant 0 : index
    %87 = vector.load %arg6[%c0_27, %c0_28] : memref<8x32xbf16, #tpu.memory_space<vmem>>, vector<8x32xbf16>
    tpu.vector_store %arg6[%c0_27, %c0_28], %86 {strides = array<i32>} : memref<8x32xbf16, #tpu.memory_space<vmem>>, vector<8x32xbf16>,
    return
  }
  func.func @transform_0(%arg0: i32, %arg1: i32) -> (i32, i32) {
    %c0_i32 = arith.constant 0 : i32
    return %arg0, %arg1 : i32, i32
  }
  func.func @transform_1(%arg0: i32, %arg1: i32) -> (i32, i32) {
    %c0_i32 = arith.constant 0 : i32
    return %arg0, %arg1 : i32, i32
  }
  func.func @transform_2(%arg0: i32, %arg1: i32) -> (i32, i32) {
    %c0_i32 = arith.constant 0 : i32
    return %arg0, %arg1 : i32, i32
  }
  func.func @transform_3(%arg0: i32, %arg1: i32) -> (i32, i32, i32) {
    %c0_i32 = arith.constant 0 : i32
    %c0_i32_0 = arith.constant 0 : i32
    %c0_i32_1 = arith.constant 0 : i32
    return %arg0, %c0_i32, %c0_i32_0 : i32, i32, i32
  }
  func.func @transform_4(%arg0: i32, %arg1: i32) -> (i32, i32) {
    %c0_i32 = arith.constant 0 : i32
    return %arg0, %arg1 : i32, i32
  }
}

module attributes {stable_mosaic.version = 11 : i64} {
  func.func @_linear_res_ln_kernel(%arg0: i32, %arg1: memref<16x32xbf16, #tpu.memory_space<vmem>>, %arg2: memref<32x32xbf16, #tpu.memory_space<vmem>>, %arg3: memref<1x32xf32, #tpu.memory_space<vmem>>, %arg4: memref<16x32xbf16, #tpu.memory_space<vmem>>, %arg5: memref<1x32xf32, #tpu.memory_space<vmem>>, %arg6: memref<1x32xf32, #tpu.memory_space<vmem>>, %arg7: memref<16x32xbf16, #tpu.memory_space<vmem>>) attributes {dimension_semantics = [#tpu.dimension_semantics<parallel>], iteration_bounds = array<i64: 1>, scalar_prefetch = 0 : i64, scratch_operands = 0 : i64, tpu.core_type = #tpu.core_type<tc>, window_params = [{transform_indices = @transform_0, window_bounds = array<i64: 16, 32>}, {pipeline_mode = #tpu.pipeline_mode<synchronous>, transform_indices = @transform_1, window_bounds = array<i64: 32, 32>}, {pipeline_mode = #tpu.pipeline_mode<synchronous>, transform_indices = @transform_2, window_bounds = array<i64: 1, 32>}, {transform_indices = @transform_3, window_bounds = array<i64: 16, 32>}, {pipeline_mode = #tpu.pipeline_mode<synchronous>, transform_indices = @transform_4, window_bounds = array<i64: 1, 32>}, {pipeline_mode = #tpu.pipeline_mode<synchronous>, transform_indices = @transform_5, window_bounds = array<i64: 1, 32>}, {transform_indices = @transform_6, window_bounds = array<i64: 16, 32>}]} {
    %c0 = arith.constant 0 : index
    %c0_0 = arith.constant 0 : index
    %0 = vector.load %arg1[%c0, %c0_0] : memref<16x32xbf16, #tpu.memory_space<vmem>>, vector<16x32xbf16>
    %c0_1 = arith.constant 0 : index
    %c0_2 = arith.constant 0 : index
    %1 = vector.load %arg2[%c0_1, %c0_2] : memref<32x32xbf16, #tpu.memory_space<vmem>>, vector<32x32xbf16>
    %cst = arith.constant dense<0.000000e+00> : vector<16x32xf32>
    %2 = tpu.matmul %0, %1, %cst {dimension_numbers = #tpu.dot_dimension_numbers<[1], [1], [0], [0], [0, 0, 1, 0], [], []>} : vector<16x32xbf16>, vector<32x32xbf16>, vector<16x32xf32> -> vector<16x32xf32>
    %c0_3 = arith.constant 0 : index
    %c0_4 = arith.constant 0 : index
    %3 = vector.load %arg3[%c0_3, %c0_4] : memref<1x32xf32, #tpu.memory_space<vmem>>, vector<1x32xf32>
    %4 = vector.broadcast %3 : vector<1x32xf32> to vector<16x32xf32>
    %5 = arith.addf %2, %4 : vector<16x32xf32>
    %c0_5 = arith.constant 0 : index
    %c0_6 = arith.constant 0 : index
    %6 = vector.load %arg4[%c0_5, %c0_6] : memref<16x32xbf16, #tpu.memory_space<vmem>>, vector<16x32xbf16>
    %7 = arith.extf %6 : vector<16x32xbf16> to vector<16x32xf32>
    %8 = arith.addf %5, %7 : vector<16x32xf32>
    %c0_7 = arith.constant 0 : index
    %c0_8 = arith.constant 0 : index
    %9 = vector.load %arg5[%c0_7, %c0_8] : memref<1x32xf32, #tpu.memory_space<vmem>>, vector<1x32xf32>
    %c0_9 = arith.constant 0 : index
    %c0_10 = arith.constant 0 : index
    %10 = vector.load %arg6[%c0_9, %c0_10] : memref<1x32xf32, #tpu.memory_space<vmem>>, vector<1x32xf32>
    %cst_11 = arith.constant dense<0.000000e+00> : vector<16xf32>
    %11 = vector.multi_reduction <add>, %8, %cst_11 [1] : vector<16x32xf32> to vector<16xf32>
    %12 = vector.shape_cast %11 : vector<16xf32> to vector<16x1xf32>
    %cst_12 = arith.constant 3.200000e+01 : f32
    %13 = vector.broadcast %cst_12 : f32 to vector<16x1xf32>
    %14 = arith.divf %12, %13 : vector<16x1xf32>
    %15 = vector.broadcast %14 : vector<16x1xf32> to vector<16x32xf32>
    %16 = arith.subf %8, %15 : vector<16x32xf32>
    %17 = arith.mulf %16, %16 : vector<16x32xf32>
    %cst_13 = arith.constant dense<0.000000e+00> : vector<16xf32>
    %18 = vector.multi_reduction <add>, %17, %cst_13 [1] : vector<16x32xf32> to vector<16xf32>
    %19 = vector.shape_cast %18 : vector<16xf32> to vector<16x1xf32>
    %cst_14 = arith.constant 3.200000e+01 : f32
    %20 = vector.broadcast %cst_14 : f32 to vector<16x1xf32>
    %21 = arith.divf %19, %20 : vector<16x1xf32>
    %cst_15 = arith.constant 9.99999996E-13 : f32
    %22 = vector.broadcast %cst_15 : f32 to vector<16x1xf32>
    %23 = arith.addf %21, %22 : vector<16x1xf32>
    %24 = math.rsqrt %23 : vector<16x1xf32>
    %25 = vector.broadcast %24 : vector<16x1xf32> to vector<16x32xf32>
    %26 = arith.mulf %16, %25 : vector<16x32xf32>
    %27 = vector.broadcast %9 : vector<1x32xf32> to vector<16x32xf32>
    %28 = arith.mulf %27, %26 : vector<16x32xf32>
    %29 = vector.broadcast %10 : vector<1x32xf32> to vector<16x32xf32>
    %30 = arith.addf %28, %29 : vector<16x32xf32>
    %31 = arith.truncf %30 : vector<16x32xf32> to vector<16x32xbf16>
    %c0_16 = arith.constant 0 : index
    %c0_17 = arith.constant 0 : index
    %32 = vector.load %arg7[%c0_16, %c0_17] : memref<16x32xbf16, #tpu.memory_space<vmem>>, vector<16x32xbf16>
    tpu.vector_store %arg7[%c0_16, %c0_17], %31 {strides = array<i32>} : memref<16x32xbf16, #tpu.memory_space<vmem>>, vector<16x32xbf16>,
    return
  }
  func.func @transform_0(%arg0: i32) -> (i32, i32) {
    %c0_i32 = arith.constant 0 : i32
    %c0_i32_0 = arith.constant 0 : i32
    return %arg0, %c0_i32 : i32, i32
  }
  func.func @transform_1(%arg0: i32) -> (i32, i32) {
    %c0_i32 = arith.constant 0 : i32
    %c0_i32_0 = arith.constant 0 : i32
    %c0_i32_1 = arith.constant 0 : i32
    return %c0_i32, %c0_i32_0 : i32, i32
  }
  func.func @transform_2(%arg0: i32) -> (i32, i32) {
    %c0_i32 = arith.constant 0 : i32
    %c0_i32_0 = arith.constant 0 : i32
    %c0_i32_1 = arith.constant 0 : i32
    return %c0_i32, %c0_i32_0 : i32, i32
  }
  func.func @transform_3(%arg0: i32) -> (i32, i32) {
    %c0_i32 = arith.constant 0 : i32
    %c0_i32_0 = arith.constant 0 : i32
    return %arg0, %c0_i32 : i32, i32
  }
  func.func @transform_4(%arg0: i32) -> (i32, i32) {
    %c0_i32 = arith.constant 0 : i32
    %c0_i32_0 = arith.constant 0 : i32
    %c0_i32_1 = arith.constant 0 : i32
    return %c0_i32, %c0_i32_0 : i32, i32
  }
  func.func @transform_5(%arg0: i32) -> (i32, i32) {
    %c0_i32 = arith.constant 0 : i32
    %c0_i32_0 = arith.constant 0 : i32
    %c0_i32_1 = arith.constant 0 : i32
    return %c0_i32, %c0_i32_0 : i32, i32
  }
  func.func @transform_6(%arg0: i32) -> (i32, i32) {
    %c0_i32 = arith.constant 0 : i32
    %c0_i32_0 = arith.constant 0 : i32
    return %arg0, %c0_i32 : i32, i32
  }
}

module attributes {stable_mosaic.version = 11 : i64} {
  func.func @_linear_ln_kernel(%arg0: i32, %arg1: memref<16x32xbf16, #tpu.memory_space<vmem>>, %arg2: memref<32x32xbf16, #tpu.memory_space<vmem>>, %arg3: memref<1x32xf32, #tpu.memory_space<vmem>>, %arg4: memref<1x32xf32, #tpu.memory_space<vmem>>, %arg5: memref<1x32xf32, #tpu.memory_space<vmem>>, %arg6: memref<16x32xbf16, #tpu.memory_space<vmem>>) attributes {dimension_semantics = [#tpu.dimension_semantics<parallel>], iteration_bounds = array<i64: 1>, scalar_prefetch = 0 : i64, scratch_operands = 0 : i64, tpu.core_type = #tpu.core_type<tc>, window_params = [{transform_indices = @transform_0, window_bounds = array<i64: 16, 32>}, {pipeline_mode = #tpu.pipeline_mode<synchronous>, transform_indices = @transform_1, window_bounds = array<i64: 32, 32>}, {pipeline_mode = #tpu.pipeline_mode<synchronous>, transform_indices = @transform_2, window_bounds = array<i64: 1, 32>}, {pipeline_mode = #tpu.pipeline_mode<synchronous>, transform_indices = @transform_3, window_bounds = array<i64: 1, 32>}, {pipeline_mode = #tpu.pipeline_mode<synchronous>, transform_indices = @transform_4, window_bounds = array<i64: 1, 32>}, {transform_indices = @transform_5, window_bounds = array<i64: 16, 32>}]} {
    %c0 = arith.constant 0 : index
    %c0_0 = arith.constant 0 : index
    %0 = vector.load %arg1[%c0, %c0_0] : memref<16x32xbf16, #tpu.memory_space<vmem>>, vector<16x32xbf16>
    %c0_1 = arith.constant 0 : index
    %c0_2 = arith.constant 0 : index
    %1 = vector.load %arg2[%c0_1, %c0_2] : memref<32x32xbf16, #tpu.memory_space<vmem>>, vector<32x32xbf16>
    %cst = arith.constant dense<0.000000e+00> : vector<16x32xf32>
    %2 = tpu.matmul %0, %1, %cst {dimension_numbers = #tpu.dot_dimension_numbers<[1], [1], [0], [0], [0, 0, 1, 0], [], []>} : vector<16x32xbf16>, vector<32x32xbf16>, vector<16x32xf32> -> vector<16x32xf32>
    %c0_3 = arith.constant 0 : index
    %c0_4 = arith.constant 0 : index
    %3 = vector.load %arg3[%c0_3, %c0_4] : memref<1x32xf32, #tpu.memory_space<vmem>>, vector<1x32xf32>
    %4 = vector.broadcast %3 : vector<1x32xf32> to vector<16x32xf32>
    %5 = arith.addf %2, %4 : vector<16x32xf32>
    %cst_5 = arith.constant 5.000000e-01 : f32
    %6 = vector.broadcast %cst_5 : f32 to vector<16x32xf32>
    %7 = arith.mulf %6, %5 : vector<16x32xf32>
    %cst_6 = arith.constant 4.471500e-02 : f32
    %8 = vector.broadcast %cst_6 : f32 to vector<16x32xf32>
    %9 = arith.mulf %8, %5 : vector<16x32xf32>
    %10 = arith.mulf %9, %5 : vector<16x32xf32>
    %11 = arith.mulf %10, %5 : vector<16x32xf32>
    %12 = arith.addf %5, %11 : vector<16x32xf32>
    %cst_7 = arith.constant 0.797884583 : f32
    %13 = vector.broadcast %cst_7 : f32 to vector<16x32xf32>
    %14 = arith.mulf %13, %12 : vector<16x32xf32>
    %15 = math.tanh %14 : vector<16x32xf32>
    %cst_8 = arith.constant 1.000000e+00 : f32
    %16 = vector.broadcast %cst_8 : f32 to vector<16x32xf32>
    %17 = arith.addf %16, %15 : vector<16x32xf32>
    %18 = arith.mulf %7, %17 : vector<16x32xf32>
    %c0_9 = arith.constant 0 : index
    %c0_10 = arith.constant 0 : index
    %19 = vector.load %arg4[%c0_9, %c0_10] : memref<1x32xf32, #tpu.memory_space<vmem>>, vector<1x32xf32>
    %c0_11 = arith.constant 0 : index
    %c0_12 = arith.constant 0 : index
    %20 = vector.load %arg5[%c0_11, %c0_12] : memref<1x32xf32, #tpu.memory_space<vmem>>, vector<1x32xf32>
    %cst_13 = arith.constant dense<0.000000e+00> : vector<16xf32>
    %21 = vector.multi_reduction <add>, %18, %cst_13 [1] : vector<16x32xf32> to vector<16xf32>
    %22 = vector.shape_cast %21 : vector<16xf32> to vector<16x1xf32>
    %cst_14 = arith.constant 3.200000e+01 : f32
    %23 = vector.broadcast %cst_14 : f32 to vector<16x1xf32>
    %24 = arith.divf %22, %23 : vector<16x1xf32>
    %25 = vector.broadcast %24 : vector<16x1xf32> to vector<16x32xf32>
    %26 = arith.subf %18, %25 : vector<16x32xf32>
    %27 = arith.mulf %26, %26 : vector<16x32xf32>
    %cst_15 = arith.constant dense<0.000000e+00> : vector<16xf32>
    %28 = vector.multi_reduction <add>, %27, %cst_15 [1] : vector<16x32xf32> to vector<16xf32>
    %29 = vector.shape_cast %28 : vector<16xf32> to vector<16x1xf32>
    %cst_16 = arith.constant 3.200000e+01 : f32
    %30 = vector.broadcast %cst_16 : f32 to vector<16x1xf32>
    %31 = arith.divf %29, %30 : vector<16x1xf32>
    %cst_17 = arith.constant 9.99999996E-13 : f32
    %32 = vector.broadcast %cst_17 : f32 to vector<16x1xf32>
    %33 = arith.addf %31, %32 : vector<16x1xf32>
    %34 = math.rsqrt %33 : vector<16x1xf32>
    %35 = vector.broadcast %34 : vector<16x1xf32> to vector<16x32xf32>
    %36 = arith.mulf %26, %35 : vector<16x32xf32>
    %37 = vector.broadcast %19 : vector<1x32xf32> to vector<16x32xf32>
    %38 = arith.mulf %37, %36 : vector<16x32xf32>
    %39 = vector.broadcast %20 : vector<1x32xf32> to vector<16x32xf32>
    %40 = arith.addf %38, %39 : vector<16x32xf32>
    %41 = arith.truncf %40 : vector<16x32xf32> to vector<16x32xbf16>
    %c0_18 = arith.constant 0 : index
    %c0_19 = arith.constant 0 : index
    %42 = vector.load %arg6[%c0_18, %c0_19] : memref<16x32xbf16, #tpu.memory_space<vmem>>, vector<16x32xbf16>
    tpu.vector_store %arg6[%c0_18, %c0_19], %41 {strides = array<i32>} : memref<16x32xbf16, #tpu.memory_space<vmem>>, vector<16x32xbf16>,
    return
  }
  func.func @transform_0(%arg0: i32) -> (i32, i32) {
    %c0_i32 = arith.constant 0 : i32
    %c0_i32_0 = arith.constant 0 : i32
    return %arg0, %c0_i32 : i32, i32
  }
  func.func @transform_1(%arg0: i32) -> (i32, i32) {
    %c0_i32 = arith.constant 0 : i32
    %c0_i32_0 = arith.constant 0 : i32
    %c0_i32_1 = arith.constant 0 : i32
    return %c0_i32, %c0_i32_0 : i32, i32
  }
  func.func @transform_2(%arg0: i32) -> (i32, i32) {
    %c0_i32 = arith.constant 0 : i32
    %c0_i32_0 = arith.constant 0 : i32
    %c0_i32_1 = arith.constant 0 : i32
    return %c0_i32, %c0_i32_0 : i32, i32
  }
  func.func @transform_3(%arg0: i32) -> (i32, i32) {
    %c0_i32 = arith.constant 0 : i32
    %c0_i32_0 = arith.constant 0 : i32
    %c0_i32_1 = arith.constant 0 : i32
    return %c0_i32, %c0_i32_0 : i32, i32
  }
  func.func @transform_4(%arg0: i32) -> (i32, i32) {
    %c0_i32 = arith.constant 0 : i32
    %c0_i32_0 = arith.constant 0 : i32
    %c0_i32_1 = arith.constant 0 : i32
    return %c0_i32, %c0_i32_0 : i32, i32
  }
  func.func @transform_5(%arg0: i32) -> (i32, i32) {
    %c0_i32 = arith.constant 0 : i32
    %c0_i32_0 = arith.constant 0 : i32
    return %arg0, %c0_i32 : i32, i32
  }
}

module attributes {stable_mosaic.version = 11 : i64} {
  func.func @_linear_act_kernel(%arg0: i32, %arg1: i32, %arg2: memref<16x32xbf16, #tpu.memory_space<vmem>>, %arg3: memref<64x32xbf16, #tpu.memory_space<vmem>>, %arg4: memref<1x64xf32, #tpu.memory_space<vmem>>, %arg5: memref<16x64xbf16, #tpu.memory_space<vmem>>) attributes {dimension_semantics = [#tpu.dimension_semantics<parallel>, #tpu.dimension_semantics<parallel>], iteration_bounds = array<i64: 1, 1>, scalar_prefetch = 0 : i64, scratch_operands = 0 : i64, tpu.core_type = #tpu.core_type<tc>, window_params = [{transform_indices = @transform_0, window_bounds = array<i64: 16, 32>}, {transform_indices = @transform_1, window_bounds = array<i64: 64, 32>}, {transform_indices = @transform_2, window_bounds = array<i64: 1, 64>}, {transform_indices = @transform_3, window_bounds = array<i64: 16, 64>}]} {
    %c0 = arith.constant 0 : index
    %c0_0 = arith.constant 0 : index
    %0 = vector.load %arg2[%c0, %c0_0] : memref<16x32xbf16, #tpu.memory_space<vmem>>, vector<16x32xbf16>
    %c0_1 = arith.constant 0 : index
    %c0_2 = arith.constant 0 : index
    %1 = vector.load %arg3[%c0_1, %c0_2] : memref<64x32xbf16, #tpu.memory_space<vmem>>, vector<64x32xbf16>
    %cst = arith.constant dense<0.000000e+00> : vector<16x64xf32>
    %2 = tpu.matmul %0, %1, %cst {dimension_numbers = #tpu.dot_dimension_numbers<[1], [1], [0], [0], [0, 0, 1, 0], [], []>} : vector<16x32xbf16>, vector<64x32xbf16>, vector<16x64xf32> -> vector<16x64xf32>
    %c0_3 = arith.constant 0 : index
    %c0_4 = arith.constant 0 : index
    %3 = vector.load %arg4[%c0_3, %c0_4] : memref<1x64xf32, #tpu.memory_space<vmem>>, vector<1x64xf32>
    %4 = vector.broadcast %3 : vector<1x64xf32> to vector<16x64xf32>
    %5 = arith.addf %2, %4 : vector<16x64xf32>
    %cst_5 = arith.constant 5.000000e-01 : f32
    %6 = vector.broadcast %cst_5 : f32 to vector<16x64xf32>
    %7 = arith.mulf %6, %5 : vector<16x64xf32>
    %cst_6 = arith.constant 4.471500e-02 : f32
    %8 = vector.broadcast %cst_6 : f32 to vector<16x64xf32>
    %9 = arith.mulf %8, %5 : vector<16x64xf32>
    %10 = arith.mulf %9, %5 : vector<16x64xf32>
    %11 = arith.mulf %10, %5 : vector<16x64xf32>
    %12 = arith.addf %5, %11 : vector<16x64xf32>
    %cst_7 = arith.constant 0.797884583 : f32
    %13 = vector.broadcast %cst_7 : f32 to vector<16x64xf32>
    %14 = arith.mulf %13, %12 : vector<16x64xf32>
    %15 = math.tanh %14 : vector<16x64xf32>
    %cst_8 = arith.constant 1.000000e+00 : f32
    %16 = vector.broadcast %cst_8 : f32 to vector<16x64xf32>
    %17 = arith.addf %16, %15 : vector<16x64xf32>
    %18 = arith.mulf %7, %17 : vector<16x64xf32>
    %19 = arith.truncf %18 : vector<16x64xf32> to vector<16x64xbf16>
    %c0_9 = arith.constant 0 : index
    %c0_10 = arith.constant 0 : index
    %20 = vector.load %arg5[%c0_9, %c0_10] : memref<16x64xbf16, #tpu.memory_space<vmem>>, vector<16x64xbf16>
    tpu.vector_store %arg5[%c0_9, %c0_10], %19 {strides = array<i32>} : memref<16x64xbf16, #tpu.memory_space<vmem>>, vector<16x64xbf16>,
    return
  }
  func.func @transform_0(%arg0: i32, %arg1: i32) -> (i32, i32) {
    %c0_i32 = arith.constant 0 : i32
    %c0_i32_0 = arith.constant 0 : i32
    return %arg0, %c0_i32 : i32, i32
  }
  func.func @transform_1(%arg0: i32, %arg1: i32) -> (i32, i32) {
    %c0_i32 = arith.constant 0 : i32
    %c0_i32_0 = arith.constant 0 : i32
    return %arg1, %c0_i32 : i32, i32
  }
  func.func @transform_2(%arg0: i32, %arg1: i32) -> (i32, i32) {
    %c0_i32 = arith.constant 0 : i32
    %c0_i32_0 = arith.constant 0 : i32
    return %c0_i32, %arg1 : i32, i32
  }
  func.func @transform_3(%arg0: i32, %arg1: i32) -> (i32, i32) {
    %c0_i32 = arith.constant 0 : i32
    return %arg0, %arg1 : i32, i32
  }
}

module attributes {stable_mosaic.version = 11 : i64} {
  func.func @_linear_res_ln_kernel(%arg0: i32, %arg1: memref<16x64xbf16, #tpu.memory_space<vmem>>, %arg2: memref<32x64xbf16, #tpu.memory_space<vmem>>, %arg3: memref<1x32xf32, #tpu.memory_space<vmem>>, %arg4: memref<16x32xbf16, #tpu.memory_space<vmem>>, %arg5: memref<1x32xf32, #tpu.memory_space<vmem>>, %arg6: memref<1x32xf32, #tpu.memory_space<vmem>>, %arg7: memref<16x32xbf16, #tpu.memory_space<vmem>>) attributes {dimension_semantics = [#tpu.dimension_semantics<parallel>], iteration_bounds = array<i64: 1>, scalar_prefetch = 0 : i64, scratch_operands = 0 : i64, tpu.core_type = #tpu.core_type<tc>, window_params = [{transform_indices = @transform_0, window_bounds = array<i64: 16, 64>}, {pipeline_mode = #tpu.pipeline_mode<synchronous>, transform_indices = @transform_1, window_bounds = array<i64: 32, 64>}, {pipeline_mode = #tpu.pipeline_mode<synchronous>, transform_indices = @transform_2, window_bounds = array<i64: 1, 32>}, {transform_indices = @transform_3, window_bounds = array<i64: 16, 32>}, {pipeline_mode = #tpu.pipeline_mode<synchronous>, transform_indices = @transform_4, window_bounds = array<i64: 1, 32>}, {pipeline_mode = #tpu.pipeline_mode<synchronous>, transform_indices = @transform_5, window_bounds = array<i64: 1, 32>}, {transform_indices = @transform_6, window_bounds = array<i64: 16, 32>}]} {
    %c0 = arith.constant 0 : index
    %c0_0 = arith.constant 0 : index
    %0 = vector.load %arg1[%c0, %c0_0] : memref<16x64xbf16, #tpu.memory_space<vmem>>, vector<16x64xbf16>
    %c0_1 = arith.constant 0 : index
    %c0_2 = arith.constant 0 : index
    %1 = vector.load %arg2[%c0_1, %c0_2] : memref<32x64xbf16, #tpu.memory_space<vmem>>, vector<32x64xbf16>
    %cst = arith.constant dense<0.000000e+00> : vector<16x32xf32>
    %2 = tpu.matmul %0, %1, %cst {dimension_numbers = #tpu.dot_dimension_numbers<[1], [1], [0], [0], [0, 0, 1, 0], [], []>} : vector<16x64xbf16>, vector<32x64xbf16>, vector<16x32xf32> -> vector<16x32xf32>
    %c0_3 = arith.constant 0 : index
    %c0_4 = arith.constant 0 : index
    %3 = vector.load %arg3[%c0_3, %c0_4] : memref<1x32xf32, #tpu.memory_space<vmem>>, vector<1x32xf32>
    %4 = vector.broadcast %3 : vector<1x32xf32> to vector<16x32xf32>
    %5 = arith.addf %2, %4 : vector<16x32xf32>
    %c0_5 = arith.constant 0 : index
    %c0_6 = arith.constant 0 : index
    %6 = vector.load %arg4[%c0_5, %c0_6] : memref<16x32xbf16, #tpu.memory_space<vmem>>, vector<16x32xbf16>
    %7 = arith.extf %6 : vector<16x32xbf16> to vector<16x32xf32>
    %8 = arith.addf %5, %7 : vector<16x32xf32>
    %c0_7 = arith.constant 0 : index
    %c0_8 = arith.constant 0 : index
    %9 = vector.load %arg5[%c0_7, %c0_8] : memref<1x32xf32, #tpu.memory_space<vmem>>, vector<1x32xf32>
    %c0_9 = arith.constant 0 : index
    %c0_10 = arith.constant 0 : index
    %10 = vector.load %arg6[%c0_9, %c0_10] : memref<1x32xf32, #tpu.memory_space<vmem>>, vector<1x32xf32>
    %cst_11 = arith.constant dense<0.000000e+00> : vector<16xf32>
    %11 = vector.multi_reduction <add>, %8, %cst_11 [1] : vector<16x32xf32> to vector<16xf32>
    %12 = vector.shape_cast %11 : vector<16xf32> to vector<16x1xf32>
    %cst_12 = arith.constant 3.200000e+01 : f32
    %13 = vector.broadcast %cst_12 : f32 to vector<16x1xf32>
    %14 = arith.divf %12, %13 : vector<16x1xf32>
    %15 = vector.broadcast %14 : vector<16x1xf32> to vector<16x32xf32>
    %16 = arith.subf %8, %15 : vector<16x32xf32>
    %17 = arith.mulf %16, %16 : vector<16x32xf32>
    %cst_13 = arith.constant dense<0.000000e+00> : vector<16xf32>
    %18 = vector.multi_reduction <add>, %17, %cst_13 [1] : vector<16x32xf32> to vector<16xf32>
    %19 = vector.shape_cast %18 : vector<16xf32> to vector<16x1xf32>
    %cst_14 = arith.constant 3.200000e+01 : f32
    %20 = vector.broadcast %cst_14 : f32 to vector<16x1xf32>
    %21 = arith.divf %19, %20 : vector<16x1xf32>
    %cst_15 = arith.constant 9.99999996E-13 : f32
    %22 = vector.broadcast %cst_15 : f32 to vector<16x1xf32>
    %23 = arith.addf %21, %22 : vector<16x1xf32>
    %24 = math.rsqrt %23 : vector<16x1xf32>
    %25 = vector.broadcast %24 : vector<16x1xf32> to vector<16x32xf32>
    %26 = arith.mulf %16, %25 : vector<16x32xf32>
    %27 = vector.broadcast %9 : vector<1x32xf32> to vector<16x32xf32>
    %28 = arith.mulf %27, %26 : vector<16x32xf32>
    %29 = vector.broadcast %10 : vector<1x32xf32> to vector<16x32xf32>
    %30 = arith.addf %28, %29 : vector<16x32xf32>
    %31 = arith.truncf %30 : vector<16x32xf32> to vector<16x32xbf16>
    %c0_16 = arith.constant 0 : index
    %c0_17 = arith.constant 0 : index
    %32 = vector.load %arg7[%c0_16, %c0_17] : memref<16x32xbf16, #tpu.memory_space<vmem>>, vector<16x32xbf16>
    tpu.vector_store %arg7[%c0_16, %c0_17], %31 {strides = array<i32>} : memref<16x32xbf16, #tpu.memory_space<vmem>>, vector<16x32xbf16>,
    return
  }
  func.func @transform_0(%arg0: i32) -> (i32, i32) {
    %c0_i32 = arith.constant 0 : i32
    %c0_i32_0 = arith.constant 0 : i32
    return %arg0, %c0_i32 : i32, i32
  }
  func.func @transform_1(%arg0: i32) -> (i32, i32) {
    %c0_i32 = arith.constant 0 : i32
    %c0_i32_0 = arith.constant 0 : i32
    %c0_i32_1 = arith.constant 0 : i32
    return %c0_i32, %c0_i32_0 : i32, i32
  }
  func.func @transform_2(%arg0: i32) -> (i32, i32) {
    %c0_i32 = arith.constant 0 : i32
    %c0_i32_0 = arith.constant 0 : i32
    %c0_i32_1 = arith.constant 0 : i32
    return %c0_i32, %c0_i32_0 : i32, i32
  }
  func.func @transform_3(%arg0: i32) -> (i32, i32) {
    %c0_i32 = arith.constant 0 : i32
    %c0_i32_0 = arith.constant 0 : i32
    return %arg0, %c0_i32 : i32, i32
  }
  func.func @transform_4(%arg0: i32) -> (i32, i32) {
    %c0_i32 = arith.constant 0 : i32
    %c0_i32_0 = arith.constant 0 : i32
    %c0_i32_1 = arith.constant 0 : i32
    return %c0_i32, %c0_i32_0 : i32, i32
  }
  func.func @transform_5(%arg0: i32) -> (i32, i32) {
    %c0_i32 = arith.constant 0 : i32
    %c0_i32_0 = arith.constant 0 : i32
    %c0_i32_1 = arith.constant 0 : i32
    return %c0_i32, %c0_i32_0 : i32, i32
  }
  func.func @transform_6(%arg0: i32) -> (i32, i32) {
    %c0_i32 = arith.constant 0 : i32
    %c0_i32_0 = arith.constant 0 : i32
    return %arg0, %c0_i32 : i32, i32
  }
}

module attributes {stable_mosaic.version = 11 : i64} {
  func.func @_mlm_logits_kernel(%arg0: i32, %arg1: i32, %arg2: memref<16x32xbf16, #tpu.memory_space<vmem>>, %arg3: memref<32x16xbf16, #tpu.memory_space<vmem>>, %arg4: memref<64x16xbf16, #tpu.memory_space<vmem>>, %arg5: memref<1x64xf32, #tpu.memory_space<vmem>>, %arg6: memref<16x64xf32, #tpu.memory_space<vmem>>, %arg7: memref<16x16xbf16, #tpu.memory_space<vmem>>) attributes {dimension_semantics = [#tpu.dimension_semantics<parallel>, #tpu.dimension_semantics<arbitrary>], iteration_bounds = array<i64: 1, 1>, scalar_prefetch = 0 : i64, scratch_operands = 1 : i64, tpu.core_type = #tpu.core_type<tc>, window_params = [{transform_indices = @transform_0, window_bounds = array<i64: 16, 32>}, {pipeline_mode = #tpu.pipeline_mode<synchronous>, transform_indices = @transform_1, window_bounds = array<i64: 32, 16>}, {transform_indices = @transform_2, window_bounds = array<i64: 64, 16>}, {transform_indices = @transform_3, window_bounds = array<i64: 1, 64>}, {transform_indices = @transform_4, window_bounds = array<i64: 16, 64>}]} {
    %c0_i32 = arith.constant 0 : i32
    %0 = arith.cmpi eq, %arg1, %c0_i32 : i32
    %1 = arith.extui %0 : i1 to i32
    %c0_i32_0 = arith.constant 0 : i32
    %2 = arith.cmpi ne, %1, %c0_i32_0 : i32
    scf.if %2 {
      %c0_8 = arith.constant 0 : index
      %c0_9 = arith.constant 0 : index
      %10 = vector.load %arg2[%c0_8, %c0_9] : memref<16x32xbf16, #tpu.memory_space<vmem>>, vector<16x32xbf16>
      %c0_10 = arith.constant 0 : index
      %c0_11 = arith.constant 0 : index
      %11 = vector.load %arg3[%c0_10, %c0_11] : memref<32x16xbf16, #tpu.memory_space<vmem>>, vector<32x16xbf16>
      %cst_12 = arith.constant dense<0.000000e+00> : vector<16x16xf32>
      %12 = tpu.matmul %10, %11, %cst_12 {dimension_numbers = #tpu.dot_dimension_numbers<[1], [0], [0], [1], [0, 0, 1, 1], [], []>} : vector<16x32xbf16>, vector<32x16xbf16>, vector<16x16xf32> -> vector<16x16xf32>
      %13 = arith.truncf %12 : vector<16x16xf32> to vector<16x16xbf16>
      %c0_13 = arith.constant 0 : index
      %c0_14 = arith.constant 0 : index
      %14 = vector.load %arg7[%c0_13, %c0_14] : memref<16x16xbf16, #tpu.memory_space<vmem>>, vector<16x16xbf16>
      tpu.vector_store %arg7[%c0_13, %c0_14], %13 {strides = array<i32>} : memref<16x16xbf16, #tpu.memory_space<vmem>>, vector<16x16xbf16>,
    } else {
    }
    %c0 = arith.constant 0 : index
    %c0_1 = arith.constant 0 : index
    %3 = vector.load %arg7[%c0, %c0_1] : memref<16x16xbf16, #tpu.memory_space<vmem>>, vector<16x16xbf16>
    %c0_2 = arith.constant 0 : index
    %c0_3 = arith.constant 0 : index
    %4 = vector.load %arg4[%c0_2, %c0_3] : memref<64x16xbf16, #tpu.memory_space<vmem>>, vector<64x16xbf16>
    %cst = arith.constant dense<0.000000e+00> : vector<16x64xf32>
    %5 = tpu.matmul %3, %4, %cst {dimension_numbers = #tpu.dot_dimension_numbers<[1], [1], [0], [0], [0, 0, 1, 0], [], []>} : vector<16x16xbf16>, vector<64x16xbf16>, vector<16x64xf32> -> vector<16x64xf32>
    %c0_4 = arith.constant 0 : index
    %c0_5 = arith.constant 0 : index
    %6 = vector.load %arg5[%c0_4, %c0_5] : memref<1x64xf32, #tpu.memory_space<vmem>>, vector<1x64xf32>
    %7 = vector.broadcast %6 : vector<1x64xf32> to vector<16x64xf32>
    %8 = arith.addf %5, %7 : vector<16x64xf32>
    %c0_6 = arith.constant 0 : index
    %c0_7 = arith.constant 0 : index
    %9 = vector.load %arg6[%c0_6, %c0_7] : memref<16x64xf32, #tpu.memory_space<vmem>>, vector<16x64xf32>
    tpu.vector_store %arg6[%c0_6, %c0_7], %8 {strides = array<i32>} : memref<16x64xf32, #tpu.memory_space<vmem>>, vector<16x64xf32>,
    return
  }
  func.func @transform_0(%arg0: i32, %arg1: i32) -> (i32, i32) {
    %c0_i32 = arith.constant 0 : i32
    %c0_i32_0 = arith.constant 0 : i32
    return %arg0, %c0_i32 : i32, i32
  }
  func.func @transform_1(%arg0: i32, %arg1: i32) -> (i32, i32) {
    %c0_i32 = arith.constant 0 : i32
    %c0_i32_0 = arith.constant 0 : i32
    %c0_i32_1 = arith.constant 0 : i32
    return %c0_i32, %c0_i32_0 : i32, i32
  }
  func.func @transform_2(%arg0: i32, %arg1: i32) -> (i32, i32) {
    %c0_i32 = arith.constant 0 : i32
    %c0_i32_0 = arith.constant 0 : i32
    return %arg1, %c0_i32 : i32, i32
  }
  func.func @transform_3(%arg0: i32, %arg1: i32) -> (i32, i32) {
    %c0_i32 = arith.constant 0 : i32
    %c0_i32_0 = arith.constant 0 : i32
    return %c0_i32, %arg1 : i32, i32
  }
  func.func @transform_4(%arg0: i32, %arg1: i32) -> (i32, i32) {
    %c0_i32 = arith.constant 0 : i32
    return %arg0, %arg1 : i32, i32
  }
}

</mosaic_0001>

<llo_original>
// kernel: fwd.13
$region0: #{fwd.13}
  #allocation0 [shape = 'u32[]', space=smem, size = 0x4, offset = 0x4, fixed_abs, tag = 'smem constant byte address 0x4 - core index']
  #allocation1 [shape = 'u32[144,128]{1,0:T(1,128)}', space=vmem, size = 0x12000, scoped, tag = 'internal scratch']
  %s0 = inlined_call_operand.vmem [shape: bf16[16,16], index: 0, kind: input, shape index: {}]
  %s1 = inlined_call_operand.vmem [shape: bf16[32,16], index: 1, kind: input, shape index: {}]
  %s2 = inlined_call_operand.vmem [shape: f32[1,32], index: 2, kind: input, shape index: {}]
  %s3 = inlined_call_operand.vmem [shape: bf16[16,32], index: 3, kind: input, shape index: {}]
  %s4 = inlined_call_operand.vmem [shape: f32[1,32], index: 4, kind: input, shape index: {}]
  %s5 = inlined_call_operand.vmem [shape: f32[1,32], index: 5, kind: input, shape index: {}]
  %s6 = inlined_call_operand.vmem [shape: bf16[16,32], index: 6, kind: output, shape index: {}]
  %s7 = sld [smem:[#allocation0]]
  $region34: #{fwd.13} parent=0
    _
  %s9 = ssub.s32 1, %s7
  %s10 = scalar_select 0, %s9, %s7
  // Predicated region
  $region2: #{fwd.13} parent=0 // pred_check
    _
  $region3: #{fwd.13} parent=0 // pred_check_branch
    %12 = sbr.rel (0) target = $region5
  $region4: #{fwd.13} parent=0 // pred_region
    _
  $region5: #{fwd.13} parent=0 // pred_fallthru
    _
  // Predicated region
  $region6: #{fwd.13} parent=0 // pred_check
    _
  $region7: #{fwd.13} parent=0 // pred_check_branch
    %14 = sbr.rel (0) target = $region9
  $region8: #{fwd.13} parent=0 // pred_region
    _
  $region9: #{fwd.13} parent=0 // pred_fallthru
    _
  // Predicated region
  $region10: #{fwd.13} parent=0 // pred_check
    _
  $region11: #{fwd.13} parent=0 // pred_check_branch
    %16 = sbr.rel (0) target = $region13
  $region12: #{fwd.13} parent=0 // pred_region
    _
  $region13: #{fwd.13} parent=0 // pred_fallthru
    _
  // Predicated region
  $region14: #{fwd.13} parent=0 // pred_check
    _
  $region15: #{fwd.13} parent=0 // pred_check_branch
    %18 = sbr.rel (0) target = $region17
  $region16: #{fwd.13} parent=0 // pred_region
    _
  $region17: #{fwd.13} parent=0 // pred_fallthru
    _
  // Predicated region
  $region18: #{fwd.13} parent=0 // pred_check
    _
  $region19: #{fwd.13} parent=0 // pred_check_branch
    %20 = sbr.rel (0) target = $region21
  $region20: #{fwd.13} parent=0 // pred_region
    _
  $region21: #{fwd.13} parent=0 // pred_fallthru
    _
  // Predicated region
  $region22: #{fwd.13} parent=0 // pred_check
    _
  $region23: #{fwd.13} parent=0 // pred_check_branch
    %22 = sbr.rel (0) target = $region25
  $region24: #{fwd.13} parent=0 // pred_region
    _
  $region25: #{fwd.13} parent=0 // pred_fallthru
    _
  %v24 = vld [vmem:[%s0] sm:$0xf]
  %v25 = vld [vmem:[%s0 + $0x4] sm:$0xf]
  %v26 = vld [vmem:[%s1] sm:$0xf]
  %v27 = vld [vmem:[%s1 + $0x4] sm:$0xf]
  %v28 = vld [vmem:[%s1 + $0x8] sm:$0xf]
  %v29 = vld [vmem:[%s1 + $0xc] sm:$0xf]
  %v30 = vld [vmem:[%s2] sm:$0x1]
  %v32 = vlaneseq
  %v33 = vshrl.u32 %v32, 7
  %v34 = vsub.s32 0, %v33
  %v35 = vrot.slane %v30, %v34
  %v39 = vunpack.c.l.b16 %v24
  %v40 = vunpack.c.l.b16 %v25
  %v41 = vpack.c.b16 %v40, %v39
  %v46 = vunpack.c.l.b16 %v26
  %v47 = vunpack.c.l.b16 %v27
  %v48 = vunpack.c.l.b16 %v28
  %v49 = vunpack.c.l.b16 %v29
  %v50 = vpack.c.b16 %v47, %v46
  %v51 = vpack.c.b16 %v49, %v48
  %vm52 = vcmask 130048
  %v54 = vsel %vm52, %v41, 0
  %v57 = vsel %vm52, %v50, 0
  %v60 = vsel %vm52, %v51, 0
  %62 = vmatprep.subr.bf16.mxu0 0
  %63 = vmatpush1.bf16.xpose.msra.mxu0 %v57
  %64 = vmatprep.subr.bf16.mxu0 0
  %65 = vmatpush1.bf16.xpose.msra.mxu0 %v60
  %66 = vmatprep.subr.bf16.mxu0 0
  %67 = vmatpush1.bf16.xpose.msra.mxu0 0
  %68 = vmatprep.subr.bf16.mxu0 0
  %69 = vmatpush1.bf16.xpose.msra.mxu0 0
  %70 = vmatprep.subr.bf16.mxu0 0
  %71 = vmatpush1.bf16.xpose.msra.mxu0 0
  %72 = vmatprep.subr.bf16.mxu0 0
  %73 = vmatpush1.bf16.xpose.msra.mxu0 0
  %74 = vmatprep.subr.bf16.mxu0 0
  %75 = vmatpush1.bf16.xpose.msra.mxu0 0
  %76 = vmatprep.subr.bf16.mxu0 0
  %77 = vmatpush1.bf16.xpose.msra.mxu0 0
  %78 = vmatprep.subr.bf16.mxu0 0
  %79 = vmatpush1.bf16.xpose.msra.mxu0 0
  %80 = vmatprep.subr.bf16.mxu0 0
  %81 = vmatpush1.bf16.xpose.msra.mxu0 0
  %82 = vmatprep.subr.bf16.mxu0 0
  %83 = vmatpush1.bf16.xpose.msra.mxu0 0
  %84 = vmatprep.subr.bf16.mxu0 0
  %85 = vmatpush1.bf16.xpose.msra.mxu0 0
  %86 = vmatprep.subr.bf16.mxu0 0
  %87 = vmatpush1.bf16.xpose.msra.mxu0 0
  %88 = vmatprep.subr.bf16.mxu0 0
  %89 = vmatpush1.bf16.xpose.msra.mxu0 0
  %90 = vmatprep.subr.bf16.mxu0 0
  %91 = vmatpush1.bf16.xpose.msra.mxu0 0
  %92 = vmatprep.subr.bf16.mxu0 0
  %93 = vmatpush1.bf16.xpose.msra.mxu0 0
  %94 = vmatprep.mubr.bf16.mxu0 0
  %95 = vmatmul.mubr.bf16.gmra.mrb[0].mxu0 %v54
  %v96 = vpop.f32.mrb[0].mxu0
  %v97 = vadd.f32 %v35, %v96
  %v98 = vpop.f32.mrb[0].mxu0
  %v99 = vpop.f32.mrb[0].mxu0
  %v100 = vadd.f32 %v35, %v99
  %v101 = vpop.f32.mrb[0].mxu0
  %102 = vdwg.mxu0
  %v103 = vld [vmem:[%s3] sm:$0xf]
  %v104 = vld [vmem:[%s3 + $0x4] sm:$0xf]
  %v105 = vunpack.c.l.bf16 %v103
  %v106 = vunpack.c.l.bf16 %v104
  %v107 = vadd.f32 %v97, %v105
  %v108 = vadd.f32 %v100, %v106
  %v109 = vld [vmem:[%s4] sm:$0x1]
  %v110 = vld [vmem:[%s5] sm:$0x1]
  %vm111 = vcmask 261120
  %v112 = vsel %vm111, %v107, 0.0
  %113 = vadd.xlane.f32.xlu0 %v112
  %v114 = vpop.xlane.xlu0 %113
  %v115 = vsel %vm111, %v108, 0.0
  %116 = vadd.xlane.f32.xlu0 %v115
  %v117 = vpop.xlane.xlu0 %116
  %v118 = vrcp.pop 32.0
  %v119 = vmul.f32 %v114, %v118
  %v120 = vmul.f32 %v117, %v118
  %v121 = vsub.f32 %v107, %v119
  %v122 = vsub.f32 %v108, %v120
  %v123 = vmul.f32 %v121, %v121
  %v124 = vmul.f32 %v122, %v122
  %v125 = vsel %vm111, %v123, 0.0
  %126 = vadd.xlane.f32.xlu0 %v125
  %v127 = vpop.xlane.xlu0 %126
  %v128 = vsel %vm111, %v124, 0.0
  %129 = vadd.xlane.f32.xlu0 %v128
  %v130 = vpop.xlane.xlu0 %129
  %v131 = vmul.f32 %v127, %v118
  %v132 = vmul.f32 %v130, %v118
  %v133 = vadd.f32 %v131, 1e-12
  %v134 = vadd.f32 %v132, 1e-12
  %v135 = vrsqrt.pop %v133
  %v136 = vrsqrt.pop %v134
  %v137 = vmul.f32 %v121, %v135
  %v138 = vmul.f32 %v122, %v136
  %v140 = vlaneseq
  %v141 = vshrl.u32 %v140, 7
  %v142 = vsub.s32 0, %v141
  %v143 = vrot.slane %v109, %v142
  %v145 = vmul.f32 %v143, %v137
  %v146 = vmul.f32 %v143, %v138
  %v148 = vlaneseq
  %v149 = vshrl.u32 %v148, 7
  %v150 = vsub.s32 0, %v149
  %v151 = vrot.slane %v110, %v150
  %v153 = vadd.f32 %v145, %v151
  %v154 = vadd.f32 %v146, %v151
  %v155 = vpack.c.bf16 %v154, %v153
  %v157 = vunpack.c.l.b16 %v155
  %v158 = vunpack.c.h.b16 %v155
  %v159 = vpack.c.b16 %v157, %v157
  %v160 = vpack.c.b16 %v158, %v158
  %vm163 = vcmask 257024
  %164 = vst.msk [vmem:[%s6] sm:$0xf] %vm163, %v159
  %165 = vst.msk [vmem:[%s6 + $0x4] sm:$0xf] %vm163, %v160
  // Predicated region
  $region26: #{fwd.13} parent=0 // pred_check
    _
  $region27: #{fwd.13} parent=0 // pred_check_branch
    %167 = sbr.rel (0) target = $region29
  $region28: #{fwd.13} parent=0 // pred_region
    _
  $region29: #{fwd.13} parent=0 // pred_fallthru
    _
  // Predicated region
  $region30: #{fwd.13} parent=0 // pred_check
    _
  $region31: #{fwd.13} parent=0 // pred_check_branch
    %169 = sbr.rel (0) target = $region33
  $region32: #{fwd.13} parent=0 // pred_region
    _
  $region33: #{fwd.13} parent=0 // pred_fallthru
    _

// kernel: fwd.16
$region0: #{fwd.16}
  #allocation0 [shape = 'u32[]', space=smem, size = 0x4, offset = 0x4, fixed_abs, tag = 'smem constant byte address 0x4 - core index']
  #allocation1 [shape = 'u32[144,128]{1,0:T(1,128)}', space=vmem, size = 0x12000, scoped, tag = 'internal scratch']
  %s0 = inlined_call_operand.vmem [shape: bf16[16,32], index: 0, kind: input, shape index: {}]
  %s1 = inlined_call_operand.vmem [shape: bf16[32,32], index: 1, kind: input, shape index: {}]
  %s2 = inlined_call_operand.vmem [shape: f32[1,32], index: 2, kind: input, shape index: {}]
  %s3 = inlined_call_operand.vmem [shape: bf16[16,32], index: 3, kind: input, shape index: {}]
  %s4 = inlined_call_operand.vmem [shape: f32[1,32], index: 4, kind: input, shape index: {}]
  %s5 = inlined_call_operand.vmem [shape: f32[1,32], index: 5, kind: input, shape index: {}]
  %s6 = inlined_call_operand.vmem [shape: bf16[16,32], index: 6, kind: output, shape index: {}]
  %s7 = sld [smem:[#allocation0]]
  $region34: #{fwd.16} parent=0
    _
  %s9 = ssub.s32 1, %s7
  %s10 = scalar_select 0, %s9, %s7
  // Predicated region
  $region2: #{fwd.16} parent=0 // pred_check
    _
  $region3: #{fwd.16} parent=0 // pred_check_branch
    %12 = sbr.rel (0) target = $region5
  $region4: #{fwd.16} parent=0 // pred_region
    _
  $region5: #{fwd.16} parent=0 // pred_fallthru
    _
  // Predicated region
  $region6: #{fwd.16} parent=0 // pred_check
    _
  $region7: #{fwd.16} parent=0 // pred_check_branch
    %14 = sbr.rel (0) target = $region9
  $region8: #{fwd.16} parent=0 // pred_region
    _
  $region9: #{fwd.16} parent=0 // pred_fallthru
    _
  // Predicated region
  $region10: #{fwd.16} parent=0 // pred_check
    _
  $region11: #{fwd.16} parent=0 // pred_check_branch
    %16 = sbr.rel (0) target = $region13
  $region12: #{fwd.16} parent=0 // pred_region
    _
  $region13: #{fwd.16} parent=0 // pred_fallthru
    _
  // Predicated region
  $region14: #{fwd.16} parent=0 // pred_check
    _
  $region15: #{fwd.16} parent=0 // pred_check_branch
    %18 = sbr.rel (0) target = $region17
  $region16: #{fwd.16} parent=0 // pred_region
    _
  $region17: #{fwd.16} parent=0 // pred_fallthru
    _
  // Predicated region
  $region18: #{fwd.16} parent=0 // pred_check
    _
  $region19: #{fwd.16} parent=0 // pred_check_branch
    %20 = sbr.rel (0) target = $region21
  $region20: #{fwd.16} parent=0 // pred_region
    _
  $region21: #{fwd.16} parent=0 // pred_fallthru
    _
  // Predicated region
  $region22: #{fwd.16} parent=0 // pred_check
    _
  $region23: #{fwd.16} parent=0 // pred_check_branch
    %22 = sbr.rel (0) target = $region25
  $region24: #{fwd.16} parent=0 // pred_region
    _
  $region25: #{fwd.16} parent=0 // pred_fallthru
    _
  %v24 = vld [vmem:[%s0] sm:$0xf]
  %v25 = vld [vmem:[%s0 + $0x4] sm:$0xf]
  %v26 = vld [vmem:[%s1] sm:$0xf]
  %v27 = vld [vmem:[%s1 + $0x4] sm:$0xf]
  %v28 = vld [vmem:[%s1 + $0x8] sm:$0xf]
  %v29 = vld [vmem:[%s1 + $0xc] sm:$0xf]
  %v30 = vld [vmem:[%s2] sm:$0x1]
  %v32 = vlaneseq
  %v33 = vshrl.u32 %v32, 7
  %v34 = vsub.s32 0, %v33
  %v35 = vrot.slane %v30, %v34
  %v39 = vunpack.c.l.b16 %v24
  %v40 = vunpack.c.l.b16 %v25
  %v41 = vpack.c.b16 %v40, %v39
  %v46 = vunpack.c.l.b16 %v26
  %v47 = vunpack.c.l.b16 %v27
  %v48 = vunpack.c.l.b16 %v28
  %v49 = vunpack.c.l.b16 %v29
  %v50 = vpack.c.b16 %v47, %v46
  %v51 = vpack.c.b16 %v49, %v48
  %vm52 = vcmask 261120
  %v54 = vsel %vm52, %v41, 0
  %v57 = vsel %vm52, %v50, 0
  %v60 = vsel %vm52, %v51, 0
  %62 = vmatprep.subr.bf16.mxu0 0
  %63 = vmatpush1.bf16.xpose.msra.mxu0 %v57
  %64 = vmatprep.subr.bf16.mxu0 0
  %65 = vmatpush1.bf16.xpose.msra.mxu0 %v60
  %66 = vmatprep.subr.bf16.mxu0 0
  %67 = vmatpush1.bf16.xpose.msra.mxu0 0
  %68 = vmatprep.subr.bf16.mxu0 0
  %69 = vmatpush1.bf16.xpose.msra.mxu0 0
  %70 = vmatprep.subr.bf16.mxu0 0
  %71 = vmatpush1.bf16.xpose.msra.mxu0 0
  %72 = vmatprep.subr.bf16.mxu0 0
  %73 = vmatpush1.bf16.xpose.msra.mxu0 0
  %74 = vmatprep.subr.bf16.mxu0 0
  %75 = vmatpush1.bf16.xpose.msra.mxu0 0
  %76 = vmatprep.subr.bf16.mxu0 0
  %77 = vmatpush1.bf16.xpose.msra.mxu0 0
  %78 = vmatprep.subr.bf16.mxu0 0
  %79 = vmatpush1.bf16.xpose.msra.mxu0 0
  %80 = vmatprep.subr.bf16.mxu0 0
  %81 = vmatpush1.bf16.xpose.msra.mxu0 0
  %82 = vmatprep.subr.bf16.mxu0 0
  %83 = vmatpush1.bf16.xpose.msra.mxu0 0
  %84 = vmatprep.subr.bf16.mxu0 0
  %85 = vmatpush1.bf16.xpose.msra.mxu0 0
  %86 = vmatprep.subr.bf16.mxu0 0
  %87 = vmatpush1.bf16.xpose.msra.mxu0 0
  %88 = vmatprep.subr.bf16.mxu0 0
  %89 = vmatpush1.bf16.xpose.msra.mxu0 0
  %90 = vmatprep.subr.bf16.mxu0 0
  %91 = vmatpush1.bf16.xpose.msra.mxu0 0
  %92 = vmatprep.subr.bf16.mxu0 0
  %93 = vmatpush1.bf16.xpose.msra.mxu0 0
  %94 = vmatprep.mubr.bf16.mxu0 0
  %95 = vmatmul.mubr.bf16.gmra.mrb[0].mxu0 %v54
  %v96 = vpop.f32.mrb[0].mxu0
  %v97 = vadd.f32 %v35, %v96
  %v98 = vpop.f32.mrb[0].mxu0
  %v99 = vpop.f32.mrb[0].mxu0
  %v100 = vadd.f32 %v35, %v99
  %v101 = vpop.f32.mrb[0].mxu0
  %102 = vdwg.mxu0
  %v103 = vld [vmem:[%s3] sm:$0xf]
  %v104 = vld [vmem:[%s3 + $0x4] sm:$0xf]
  %v105 = vunpack.c.l.bf16 %v103
  %v106 = vunpack.c.l.bf16 %v104
  %v107 = vadd.f32 %v97, %v105
  %v108 = vadd.f32 %v100, %v106
  %v109 = vld [vmem:[%s4] sm:$0x1]
  %v110 = vld [vmem:[%s5] sm:$0x1]
  %v111 = vsel %vm52, %v107, 0.0
  %112 = vadd.xlane.f32.xlu0 %v111
  %v113 = vpop.xlane.xlu0 %112
  %v114 = vsel %vm52, %v108, 0.0
  %115 = vadd.xlane.f32.xlu0 %v114
  %v116 = vpop.xlane.xlu0 %115
  %v117 = vrcp.pop 32.0
  %v118 = vmul.f32 %v113, %v117
  %v119 = vmul.f32 %v116, %v117
  %v120 = vsub.f32 %v107, %v118
  %v121 = vsub.f32 %v108, %v119
  %v122 = vmul.f32 %v120, %v120
  %v123 = vmul.f32 %v121, %v121
  %v124 = vsel %vm52, %v122, 0.0
  %125 = vadd.xlane.f32.xlu0 %v124
  %v126 = vpop.xlane.xlu0 %125
  %v127 = vsel %vm52, %v123, 0.0
  %128 = vadd.xlane.f32.xlu0 %v127
  %v129 = vpop.xlane.xlu0 %128
  %v130 = vmul.f32 %v126, %v117
  %v131 = vmul.f32 %v129, %v117
  %v132 = vadd.f32 %v130, 1e-12
  %v133 = vadd.f32 %v131, 1e-12
  %v134 = vrsqrt.pop %v132
  %v135 = vrsqrt.pop %v133
  %v136 = vmul.f32 %v120, %v134
  %v137 = vmul.f32 %v121, %v135
  %v139 = vlaneseq
  %v140 = vshrl.u32 %v139, 7
  %v141 = vsub.s32 0, %v140
  %v142 = vrot.slane %v109, %v141
  %v144 = vmul.f32 %v142, %v136
  %v145 = vmul.f32 %v142, %v137
  %v147 = vlaneseq
  %v148 = vshrl.u32 %v147, 7
  %v149 = vsub.s32 0, %v148
  %v150 = vrot.slane %v110, %v149
  %v152 = vadd.f32 %v144, %v150
  %v153 = vadd.f32 %v145, %v150
  %v154 = vpack.c.bf16 %v153, %v152
  %v156 = vunpack.c.l.b16 %v154
  %v157 = vunpack.c.h.b16 %v154
  %v158 = vpack.c.b16 %v156, %v156
  %v159 = vpack.c.b16 %v157, %v157
  %vm162 = vcmask 257024
  %163 = vst.msk [vmem:[%s6] sm:$0xf] %vm162, %v158
  %164 = vst.msk [vmem:[%s6 + $0x4] sm:$0xf] %vm162, %v159
  // Predicated region
  $region26: #{fwd.16} parent=0 // pred_check
    _
  $region27: #{fwd.16} parent=0 // pred_check_branch
    %166 = sbr.rel (0) target = $region29
  $region28: #{fwd.16} parent=0 // pred_region
    _
  $region29: #{fwd.16} parent=0 // pred_fallthru
    _
  // Predicated region
  $region30: #{fwd.16} parent=0 // pred_check
    _
  $region31: #{fwd.16} parent=0 // pred_check_branch
    %168 = sbr.rel (0) target = $region33
  $region32: #{fwd.16} parent=0 // pred_region
    _
  $region33: #{fwd.16} parent=0 // pred_fallthru
    _

// kernel: fwd.14
$region0: #{fwd.14}
  #allocation0 [shape = 'u32[]', space=smem, size = 0x4, offset = 0x4, fixed_abs, tag = 'smem constant byte address 0x4 - core index']
  #allocation1 [shape = 'u32[144,128]{1,0:T(1,128)}', space=vmem, size = 0x12000, scoped, tag = 'internal scratch']
  %s0 = inlined_call_operand.vmem [shape: bf16[16,32], index: 0, kind: input, shape index: {}]
  %s1 = inlined_call_operand.vmem [shape: bf16[32,32], index: 1, kind: input, shape index: {}]
  %s2 = inlined_call_operand.vmem [shape: bf16[32,32], index: 2, kind: input, shape index: {}]
  %s3 = inlined_call_operand.vmem [shape: bf16[32,32], index: 3, kind: input, shape index: {}]
  %s4 = inlined_call_operand.vmem [shape: f32[1,32], index: 4, kind: input, shape index: {}]
  %s5 = inlined_call_operand.vmem [shape: f32[1,32], index: 5, kind: input, shape index: {}]
  %s6 = inlined_call_operand.vmem [shape: f32[1,32], index: 6, kind: input, shape index: {}]
  %s7 = inlined_call_operand.vmem [shape: bf16[16,32], index: 7, kind: output, shape index: {0}]
  %s8 = inlined_call_operand.vmem [shape: bf16[16,32], index: 8, kind: output, shape index: {1}]
  %s9 = inlined_call_operand.vmem [shape: bf16[16,32], index: 9, kind: output, shape index: {2}]
  %10 = xla_tuple %s7, %s8, %s9
  %s11 = sld [smem:[#allocation0]]
  $region54: #{fwd.14} parent=0
    _
  %s13 = ssub.s32 1, %s11
  %s14 = scalar_select 0, %s13, %s11
  // Predicated region
  $region2: #{fwd.14} parent=0 // pred_check
    _
  $region3: #{fwd.14} parent=0 // pred_check_branch
    %16 = sbr.rel (0) target = $region5
  $region4: #{fwd.14} parent=0 // pred_region
    _
  $region5: #{fwd.14} parent=0 // pred_fallthru
    _
  // Predicated region
  $region6: #{fwd.14} parent=0 // pred_check
    _
  $region7: #{fwd.14} parent=0 // pred_check_branch
    %18 = sbr.rel (0) target = $region9
  $region8: #{fwd.14} parent=0 // pred_region
    _
  $region9: #{fwd.14} parent=0 // pred_fallthru
    _
  // Predicated region
  $region10: #{fwd.14} parent=0 // pred_check
    _
  $region11: #{fwd.14} parent=0 // pred_check_branch
    %20 = sbr.rel (0) target = $region13
  $region12: #{fwd.14} parent=0 // pred_region
    _
  $region13: #{fwd.14} parent=0 // pred_fallthru
    _
  // Predicated region
  $region14: #{fwd.14} parent=0 // pred_check
    _
  $region15: #{fwd.14} parent=0 // pred_check_branch
    %22 = sbr.rel (0) target = $region17
  $region16: #{fwd.14} parent=0 // pred_region
    _
  $region17: #{fwd.14} parent=0 // pred_fallthru
    _
  // Predicated region
  $region18: #{fwd.14} parent=0 // pred_check
    _
  $region19: #{fwd.14} parent=0 // pred_check_branch
    %24 = sbr.rel (0) target = $region21
  $region20: #{fwd.14} parent=0 // pred_region
    _
  $region21: #{fwd.14} parent=0 // pred_fallthru
    _
  // Predicated region
  $region22: #{fwd.14} parent=0 // pred_check
    _
  $region23: #{fwd.14} parent=0 // pred_check_branch
    %26 = sbr.rel (0) target = $region25
  $region24: #{fwd.14} parent=0 // pred_region
    _
  $region25: #{fwd.14} parent=0 // pred_fallthru
    _
  // Predicated region
  $region26: #{fwd.14} parent=0 // pred_check
    _
  $region27: #{fwd.14} parent=0 // pred_check_branch
    %28 = sbr.rel (0) target = $region29
  $region28: #{fwd.14} parent=0 // pred_region
    _
  $region29: #{fwd.14} parent=0 // pred_fallthru
    _
  %v30 = vld [vmem:[%s0] sm:$0xf]
  %v31 = vld [vmem:[%s0 + $0x4] sm:$0xf]
  %v32 = vld [vmem:[%s1] sm:$0xf]
  %v33 = vld [vmem:[%s1 + $0x4] sm:$0xf]
  %v34 = vld [vmem:[%s1 + $0x8] sm:$0xf]
  %v35 = vld [vmem:[%s1 + $0xc] sm:$0xf]
  %v36 = vld [vmem:[%s4] sm:$0x1]
  %v38 = vlaneseq
  %v39 = vshrl.u32 %v38, 7
  %v40 = vsub.s32 0, %v39
  %v41 = vrot.slane %v36, %v40
  %v45 = vunpack.c.l.b16 %v30
  %v46 = vunpack.c.l.b16 %v31
  %v47 = vpack.c.b16 %v46, %v45
  %v52 = vunpack.c.l.b16 %v32
  %v53 = vunpack.c.l.b16 %v33
  %v54 = vunpack.c.l.b16 %v34
  %v55 = vunpack.c.l.b16 %v35
  %v56 = vpack.c.b16 %v53, %v52
  %v57 = vpack.c.b16 %v55, %v54
  %vm58 = vcmask 261120
  %v60 = vsel %vm58, %v47, 0
  %v63 = vsel %vm58, %v56, 0
  %v66 = vsel %vm58, %v57, 0
  %68 = vmatprep.subr.bf16.mxu0 0
  %69 = vmatpush1.bf16.xpose.msra.mxu0 %v63
  %70 = vmatprep.subr.bf16.mxu0 0
  %71 = vmatpush1.bf16.xpose.msra.mxu0 %v66
  %72 = vmatprep.subr.bf16.mxu0 0
  %73 = vmatpush1.bf16.xpose.msra.mxu0 0
  %74 = vmatprep.subr.bf16.mxu0 0
  %75 = vmatpush1.bf16.xpose.msra.mxu0 0
  %76 = vmatprep.subr.bf16.mxu0 0
  %77 = vmatpush1.bf16.xpose.msra.mxu0 0
  %78 = vmatprep.subr.bf16.mxu0 0
  %79 = vmatpush1.bf16.xpose.msra.mxu0 0
  %80 = vmatprep.subr.bf16.mxu0 0
  %81 = vmatpush1.bf16.xpose.msra.mxu0 0
  %82 = vmatprep.subr.bf16.mxu0 0
  %83 = vmatpush1.bf16.xpose.msra.mxu0 0
  %84 = vmatprep.subr.bf16.mxu0 0
  %85 = vmatpush1.bf16.xpose.msra.mxu0 0
  %86 = vmatprep.subr.bf16.mxu0 0
  %87 = vmatpush1.bf16.xpose.msra.mxu0 0
  %88 = vmatprep.subr.bf16.mxu0 0
  %89 = vmatpush1.bf16.xpose.msra.mxu0 0
  %90 = vmatprep.subr.bf16.mxu0 0
  %91 = vmatpush1.bf16.xpose.msra.mxu0 0
  %92 = vmatprep.subr.bf16.mxu0 0
  %93 = vmatpush1.bf16.xpose.msra.mxu0 0
  %94 = vmatprep.subr.bf16.mxu0 0
  %95 = vmatpush1.bf16.xpose.msra.mxu0 0
  %96 = vmatprep.subr.bf16.mxu0 0
  %97 = vmatpush1.bf16.xpose.msra.mxu0 0
  %98 = vmatprep.subr.bf16.mxu0 0
  %99 = vmatpush1.bf16.xpose.msra.mxu0 0
  %100 = vmatprep.mubr.bf16.mxu0 0
  %101 = vmatmul.mubr.bf16.gmra.mrb[0].mxu0 %v60
  %v102 = vpop.f32.mrb[0].mxu0
  %v103 = vadd.f32 %v41, %v102
  %v104 = vpop.f32.mrb[0].mxu0
  %v105 = vpop.f32.mrb[0].mxu0
  %v106 = vadd.f32 %v41, %v105
  %v107 = vpop.f32.mrb[0].mxu0
  %108 = vdwg.mxu0
  %v109 = vpack.c.bf16 %v106, %v103
  %v111 = vunpack.c.l.b16 %v109
  %v112 = vunpack.c.h.b16 %v109
  %v113 = vpack.c.b16 %v111, %v111
  %v114 = vpack.c.b16 %v112, %v112
  %vm117 = vcmask 257024
  %118 = vst.msk [vmem:[%s7] sm:$0xf] %vm117, %v113
  %119 = vst.msk [vmem:[%s7 + $0x4] sm:$0xf] %vm117, %v114
  %v120 = vld [vmem:[%s2] sm:$0xf]
  %v121 = vld [vmem:[%s2 + $0x4] sm:$0xf]
  %v122 = vld [vmem:[%s2 + $0x8] sm:$0xf]
  %v123 = vld [vmem:[%s2 + $0xc] sm:$0xf]
  %v124 = vld [vmem:[%s5] sm:$0x1]
  %v126 = vlaneseq
  %v127 = vshrl.u32 %v126, 7
  %v128 = vsub.s32 0, %v127
  %v129 = vrot.slane %v124, %v128
  %v135 = vunpack.c.l.b16 %v120
  %v136 = vunpack.c.l.b16 %v121
  %v137 = vunpack.c.l.b16 %v122
  %v138 = vunpack.c.l.b16 %v123
  %v139 = vpack.c.b16 %v136, %v135
  %v140 = vpack.c.b16 %v138, %v137
  %v142 = vsel %vm58, %v139, 0
  %v145 = vsel %vm58, %v140, 0
  %147 = vmatprep.subr.bf16.mxu0 0
  %148 = vmatpush1.bf16.xpose.msra.mxu0 %v142
  %149 = vmatprep.subr.bf16.mxu0 0
  %150 = vmatpush1.bf16.xpose.msra.mxu0 %v145
  %151 = vmatprep.subr.bf16.mxu0 0
  %152 = vmatpush1.bf16.xpose.msra.mxu0 0
  %153 = vmatprep.subr.bf16.mxu0 0
  %154 = vmatpush1.bf16.xpose.msra.mxu0 0
  %155 = vmatprep.subr.bf16.mxu0 0
  %156 = vmatpush1.bf16.xpose.msra.mxu0 0
  %157 = vmatprep.subr.bf16.mxu0 0
  %158 = vmatpush1.bf16.xpose.msra.mxu0 0
  %159 = vmatprep.subr.bf16.mxu0 0
  %160 = vmatpush1.bf16.xpose.msra.mxu0 0
  %161 = vmatprep.subr.bf16.mxu0 0
  %162 = vmatpush1.bf16.xpose.msra.mxu0 0
  %163 = vmatprep.subr.bf16.mxu0 0
  %164 = vmatpush1.bf16.xpose.msra.mxu0 0
  %165 = vmatprep.subr.bf16.mxu0 0
  %166 = vmatpush1.bf16.xpose.msra.mxu0 0
  %167 = vmatprep.subr.bf16.mxu0 0
  %168 = vmatpush1.bf16.xpose.msra.mxu0 0
  %169 = vmatprep.subr.bf16.mxu0 0
  %170 = vmatpush1.bf16.xpose.msra.mxu0 0
  %171 = vmatprep.subr.bf16.mxu0 0
  %172 = vmatpush1.bf16.xpose.msra.mxu0 0
  %173 = vmatprep.subr.bf16.mxu0 0
  %174 = vmatpush1.bf16.xpose.msra.mxu0 0
  %175 = vmatprep.subr.bf16.mxu0 0
  %176 = vmatpush1.bf16.xpose.msra.mxu0 0
  %177 = vmatprep.subr.bf16.mxu0 0
  %178 = vmatpush1.bf16.xpose.msra.mxu0 0
  %179 = vmatprep.mubr.bf16.mxu0 0
  %180 = vmatmul.mubr.bf16.gmra.mrb[0].mxu0 %v60
  %v181 = vpop.f32.mrb[0].mxu0
  %v182 = vadd.f32 %v129, %v181
  %v183 = vpop.f32.mrb[0].mxu0
  %v184 = vpop.f32.mrb[0].mxu0
  %v185 = vadd.f32 %v129, %v184
  %v186 = vpop.f32.mrb[0].mxu0
  %187 = vdwg.mxu0
  %v188 = vpack.c.bf16 %v185, %v182
  %v190 = vunpack.c.l.b16 %v188
  %v191 = vunpack.c.h.b16 %v188
  %v192 = vpack.c.b16 %v190, %v190
  %v193 = vpack.c.b16 %v191, %v191
  %196 = vst.msk [vmem:[%s8] sm:$0xf] %vm117, %v192
  %197 = vst.msk [vmem:[%s8 + $0x4] sm:$0xf] %vm117, %v193
  %v198 = vld [vmem:[%s3] sm:$0xf]
  %v199 = vld [vmem:[%s3 + $0x4] sm:$0xf]
  %v200 = vld [vmem:[%s3 + $0x8] sm:$0xf]
  %v201 = vld [vmem:[%s3 + $0xc] sm:$0xf]
  %v202 = vld [vmem:[%s6] sm:$0x1]
  %v204 = vlaneseq
  %v205 = vshrl.u32 %v204, 7
  %v206 = vsub.s32 0, %v205
  %v207 = vrot.slane %v202, %v206
  %v213 = vunpack.c.l.b16 %v198
  %v214 = vunpack.c.l.b16 %v199
  %v215 = vunpack.c.l.b16 %v200
  %v216 = vunpack.c.l.b16 %v201
  %v217 = vpack.c.b16 %v214, %v213
  %v218 = vpack.c.b16 %v216, %v215
  %v220 = vsel %vm58, %v217, 0
  %v223 = vsel %vm58, %v218, 0
  %225 = vmatprep.subr.bf16.mxu0 0
  %226 = vmatpush1.bf16.xpose.msra.mxu0 %v220
  %227 = vmatprep.subr.bf16.mxu0 0
  %228 = vmatpush1.bf16.xpose.msra.mxu0 %v223
  %229 = vmatprep.subr.bf16.mxu0 0
  %230 = vmatpush1.bf16.xpose.msra.mxu0 0
  %231 = vmatprep.subr.bf16.mxu0 0
  %232 = vmatpush1.bf16.xpose.msra.mxu0 0
  %233 = vmatprep.subr.bf16.mxu0 0
  %234 = vmatpush1.bf16.xpose.msra.mxu0 0
  %235 = vmatprep.subr.bf16.mxu0 0
  %236 = vmatpush1.bf16.xpose.msra.mxu0 0
  %237 = vmatprep.subr.bf16.mxu0 0
  %238 = vmatpush1.bf16.xpose.msra.mxu0 0
  %239 = vmatprep.subr.bf16.mxu0 0
  %240 = vmatpush1.bf16.xpose.msra.mxu0 0
  %241 = vmatprep.subr.bf16.mxu0 0
  %242 = vmatpush1.bf16.xpose.msra.mxu0 0
  %243 = vmatprep.subr.bf16.mxu0 0
  %244 = vmatpush1.bf16.xpose.msra.mxu0 0
  %245 = vmatprep.subr.bf16.mxu0 0
  %246 = vmatpush1.bf16.xpose.msra.mxu0 0
  %247 = vmatprep.subr.bf16.mxu0 0
  %248 = vmatpush1.bf16.xpose.msra.mxu0 0
  %249 = vmatprep.subr.bf16.mxu0 0
  %250 = vmatpush1.bf16.xpose.msra.mxu0 0
  %251 = vmatprep.subr.bf16.mxu0 0
  %252 = vmatpush1.bf16.xpose.msra.mxu0 0
  %253 = vmatprep.subr.bf16.mxu0 0
  %254 = vmatpush1.bf16.xpose.msra.mxu0 0
  %255 = vmatprep.subr.bf16.mxu0 0
  %256 = vmatpush1.bf16.xpose.msra.mxu0 0
  %257 = vmatprep.mubr.bf16.mxu0 0
  %258 = vmatmul.mubr.bf16.gmra.mrb[0].mxu0 %v60
  %v259 = vpop.f32.mrb[0].mxu0
  %v260 = vadd.f32 %v207, %v259
  %v261 = vpop.f32.mrb[0].mxu0
  %v262 = vpop.f32.mrb[0].mxu0
  %v263 = vadd.f32 %v207, %v262
  %v264 = vpop.f32.mrb[0].mxu0
  %265 = vdwg.mxu0
  %v266 = vpack.c.bf16 %v263, %v260
  %v268 = vunpack.c.l.b16 %v266
  %v269 = vunpack.c.h.b16 %v266
  %v270 = vpack.c.b16 %v268, %v268
  %v271 = vpack.c.b16 %v269, %v269
  %274 = vst.msk [vmem:[%s9] sm:$0xf] %vm117, %v270
  %275 = vst.msk [vmem:[%s9 + $0x4] sm:$0xf] %vm117, %v271
  // Predicated region
  $region30: #{fwd.14} parent=0 // pred_check
    _
  $region31: #{fwd.14} parent=0 // pred_check_branch
    %277 = sbr.rel (0) target = $region33
  $region32: #{fwd.14} parent=0 // pred_region
    _
  $region33: #{fwd.14} parent=0 // pred_fallthru
    _
  // Predicated region
  $region34: #{fwd.14} parent=0 // pred_check
    _
  $region35: #{fwd.14} parent=0 // pred_check_branch
    %279 = sbr.rel (0) target = $region37
  $region36: #{fwd.14} parent=0 // pred_region
    _
  $region37: #{fwd.14} parent=0 // pred_fallthru
    _
  // Predicated region
  $region38: #{fwd.14} parent=0 // pred_check
    _
  $region39: #{fwd.14} parent=0 // pred_check_branch
    %281 = sbr.rel (0) target = $region41
  $region40: #{fwd.14} parent=0 // pred_region
    _
  $region41: #{fwd.14} parent=0 // pred_fallthru
    _
  // Predicated region
  $region42: #{fwd.14} parent=0 // pred_check
    _
  $region43: #{fwd.14} parent=0 // pred_check_branch
    %283 = sbr.rel (0) target = $region45
  $region44: #{fwd.14} parent=0 // pred_region
    _
  $region45: #{fwd.14} parent=0 // pred_fallthru
    _
  // Predicated region
  $region46: #{fwd.14} parent=0 // pred_check
    _
  $region47: #{fwd.14} parent=0 // pred_check_branch
    %285 = sbr.rel (0) target = $region49
  $region48: #{fwd.14} parent=0 // pred_region
    _
  $region49: #{fwd.14} parent=0 // pred_fallthru
    _
  // Predicated region
  $region50: #{fwd.14} parent=0 // pred_check
    _
  $region51: #{fwd.14} parent=0 // pred_check_branch
    %287 = sbr.rel (0) target = $region53
  $region52: #{fwd.14} parent=0 // pred_region
    _
  $region53: #{fwd.14} parent=0 // pred_fallthru
    _

// kernel: fwd.15
$region0: #{fwd.15}
  #allocation0 [shape = 'u32[]', space=smem, size = 0x4, offset = 0x4, fixed_abs, tag = 'smem constant byte address 0x4 - core index']
  #allocation1 [shape = 'u32[144,128]{1,0:T(1,128)}', space=vmem, size = 0x12000, scoped, tag = 'internal scratch']
  %s0 = inlined_call_operand.vmem [shape: bf16[16,32], index: 0, kind: input, shape index: {}]
  %s1 = inlined_call_operand.vmem [shape: bf16[16,32], index: 1, kind: input, shape index: {}]
  %s2 = inlined_call_operand.vmem [shape: bf16[16,32], index: 2, kind: input, shape index: {}]
  %s3 = inlined_call_operand.vmem [shape: f32[2,1,8], index: 3, kind: input, shape index: {}]
  %s4 = inlined_call_operand.vmem [shape: bf16[16,32], index: 4, kind: output, shape index: {}]
  %s5 = sld [smem:[#allocation0]]
  $region49: #{fwd.15} parent=0
    _
  %s7 = ssub.s32 1, %s5
  %s8 = scalar_select 0, %s7, %s5
  loop: start=0, step=1, limit=4
  $region2: #{fwd.15} parent=0 // loop_pre_header
    _
  $region3: #{fwd.15} parent=0 // loop_header
    %s10 = sphi 0, %s14
    %p11 = scmp.ge.s32.totalorder %s10, 4
    %s17 = sphi 0, %s29
    %s18 = sphi 0, %s25
    %s19 = sphi 0, %s17
    %s20 = sphi 0, %s18
    %s21 = sphi 0, %s19
    %s22 = sphi 0, %s20
    %s34 = sphi 0, %s36
    %s37 = sphi 0, %s34
    %s38 = sphi 0, %s37
    %s54 = sphi 0, %s38
    %s62 = sphi 0, %s64
    %s65 = sphi 0, %s62
    %s66 = sphi 0, %s65
    %s82 = sphi 0, %s66
    %s90 = sphi 0, %s92
    %s93 = sphi 0, %s90
    %s94 = sphi 0, %s93
    %s110 = sphi 0, %s94
    %s116 = sphi 0, %s118
    %s119 = sphi 0, %s116
    %s120 = sphi 0, %s119
    %s136 = sphi 0, %s120
    %s144 = sphi 0, %s146
    %s147 = sphi 0, %s144
    %s148 = sphi 0, %s147
    %s164 = sphi 0, %s148
  $region4: #{fwd.15} parent=0 // loop_header_branch
    %13 = sbr.rel (%p11) target = $region8
  $region5: #{fwd.15} parent=0 // loop_body
    %s15 = ssub.s32 %s10, 1
    %s16 = ssub.s32 %s10, 2
    %s23 = sadd.s32 1, %s18
    %p24 = scmp.ge.s32.totalorder %s23, 1
    %s25 = scalar_select %p24, 0, %s23
    %s26 = sadd.s32 1, %s17
    %s27 = scalar_select %p24, %s26, %s17
    %p28 = scmp.ge.s32.totalorder %s27, 2
    %s29 = scalar_select %p28, 0, %s27
    %s30 = ssub.s32 %s17, %s29
    %s31 = ssub.s32 %s18, %s25
    %s32 = sor.u32 %s30, %s31
    %p33 = scmp.eq.s32.totalorder %s32, 0
    %s35 = sadd.s32 %s34, 1
    %s36 = scalar_select %p33, %s34, %s35
    %p39 = pneg %p33
    %p40 = scmp.eq.s32.totalorder %s10, 1
    %p41 = por %p39, %p40
    %p42 = scmp.ne.s32.totalorder %s34, %s37
    %p43 = scmp.eq.s32.totalorder %s10, 0
    %p44 = por %p42, %p43
    %p45 = scmp.ne.s32.totalorder %s34, %s37
    %p46 = scmp.eq.s32.totalorder %s15, 1
    %p47 = por %p45, %p46
    %p48 = scmp.ne.s32.totalorder %s37, %s38
    %p49 = scmp.eq.s32.totalorder %s15, 0
    %p50 = por %p48, %p49
    %p51 = scmp.ne.s32.totalorder %s37, %s38
    %p52 = scmp.eq.s32.totalorder %s16, 1
    %p53 = por %p51, %p52
    %p55 = scmp.ne.s32.totalorder %s38, %s54
    %p56 = scmp.eq.s32.totalorder %s16, 0
    %p57 = por %p55, %p56
    %s58 = ssub.s32 %s17, %s29
    %s59 = ssub.s32 %s18, %s25
    %s60 = sor.u32 %s58, %s59
    %p61 = scmp.eq.s32.totalorder %s60, 0
    %s63 = sadd.s32 %s62, 1
    %s64 = scalar_select %p61, %s62, %s63
    %p67 = pneg %p61
    %p68 = scmp.eq.s32.totalorder %s10, 1
    %p69 = por %p67, %p68
    %p70 = scmp.ne.s32.totalorder %s62, %s65
    %p71 = scmp.eq.s32.totalorder %s10, 0
    %p72 = por %p70, %p71
    %p73 = scmp.ne.s32.totalorder %s62, %s65
    %p74 = scmp.eq.s32.totalorder %s15, 1
    %p75 = por %p73, %p74
    %p76 = scmp.ne.s32.totalorder %s65, %s66
    %p77 = scmp.eq.s32.totalorder %s15, 0
    %p78 = por %p76, %p77
    %p79 = scmp.ne.s32.totalorder %s65, %s66
    %p80 = scmp.eq.s32.totalorder %s16, 1
    %p81 = por %p79, %p80
    %p83 = scmp.ne.s32.totalorder %s66, %s82
    %p84 = scmp.eq.s32.totalorder %s16, 0
    %p85 = por %p83, %p84
    %s86 = ssub.s32 %s17, %s29
    %s87 = ssub.s32 %s18, %s25
    %s88 = sor.u32 %s86, %s87
    %p89 = scmp.eq.s32.totalorder %s88, 0
    %s91 = sadd.s32 %s90, 1
    %s92 = scalar_select %p89, %s90, %s91
    %p95 = pneg %p89
    %p96 = scmp.eq.s32.totalorder %s10, 1
    %p97 = por %p95, %p96
    %p98 = scmp.ne.s32.totalorder %s90, %s93
    %p99 = scmp.eq.s32.totalorder %s10, 0
    %p100 = por %p98, %p99
    %p101 = scmp.ne.s32.totalorder %s90, %s93
    %p102 = scmp.eq.s32.totalorder %s15, 1
    %p103 = por %p101, %p102
    %p104 = scmp.ne.s32.totalorder %s93, %s94
    %p105 = scmp.eq.s32.totalorder %s15, 0
    %p106 = por %p104, %p105
    %p107 = scmp.ne.s32.totalorder %s93, %s94
    %p108 = scmp.eq.s32.totalorder %s16, 1
    %p109 = por %p107, %p108
    %p111 = scmp.ne.s32.totalorder %s94, %s110
    %p112 = scmp.eq.s32.totalorder %s16, 0
    %p113 = por %p111, %p112
    %s114 = ssub.s32 %s17, %s29
    %p115 = scmp.eq.s32.totalorder %s114, 0
    %s117 = sadd.s32 %s116, 1
    %s118 = scalar_select %p115, %s116, %s117
    %p121 = pneg %p115
    %p122 = scmp.eq.s32.totalorder %s10, 1
    %p123 = por %p121, %p122
    %p124 = scmp.ne.s32.totalorder %s116, %s119
    %p125 = scmp.eq.s32.totalorder %s10, 0
    %p126 = por %p124, %p125
    %p127 = scmp.ne.s32.totalorder %s116, %s119
    %p128 = scmp.eq.s32.totalorder %s15, 1
    %p129 = por %p127, %p128
    %p130 = scmp.ne.s32.totalorder %s119, %s120
    %p131 = scmp.eq.s32.totalorder %s15, 0
    %p132 = por %p130, %p131
    %p133 = scmp.ne.s32.totalorder %s119, %s120
    %p134 = scmp.eq.s32.totalorder %s16, 1
    %p135 = por %p133, %p134
    %p137 = scmp.ne.s32.totalorder %s120, %s136
    %p138 = scmp.eq.s32.totalorder %s16, 0
    %p139 = por %p137, %p138
    %s140 = ssub.s32 %s17, %s29
    %s141 = ssub.s32 %s18, %s25
    %s142 = sor.u32 %s140, %s141
    %p143 = scmp.eq.s32.totalorder %s142, 0
    %s145 = sadd.s32 %s144, 1
    %s146 = scalar_select %p143, %s144, %s145
    %p149 = pneg %p143
    %p150 = scmp.eq.s32.totalorder %s10, 1
    %p151 = por %p149, %p150
    %p152 = scmp.ne.s32.totalorder %s144, %s147
    %p153 = scmp.eq.s32.totalorder %s10, 0
    %p154 = por %p152, %p153
    %p155 = scmp.ne.s32.totalorder %s144, %s147
    %p156 = scmp.eq.s32.totalorder %s15, 1
    %p157 = por %p155, %p156
    %p158 = scmp.ne.s32.totalorder %s147, %s148
    %p159 = scmp.eq.s32.totalorder %s15, 0
    %p160 = por %p158, %p159
    %p161 = scmp.ne.s32.totalorder %s147, %s148
    %p162 = scmp.eq.s32.totalorder %s16, 1
    %p163 = por %p161, %p162
    %p165 = scmp.ne.s32.totalorder %s148, %s164
    %p166 = scmp.eq.s32.totalorder %s16, 0
    %p167 = por %p165, %p166
    %p168 = scmp.le.s32.totalorder 1, %s10
    %p169 = scmp.lt.s32.totalorder %s10, 3
    %p170 = pnand %p168, %p169
    %p171 = pneg %p170
    // Predicated region
    $region9: #{fwd.15} parent=5 // pred_check
      _
    $region10: #{fwd.15} parent=5 // pred_check_branch
      %173 = sbr.rel (%p170) target = $region12
    $region11: #{fwd.15} parent=5 // pred_region
      %s174 = ssub.s32 %s10, 1
    $region12: #{fwd.15} parent=5 // pred_fallthru
      _
    %p175 = scmp.lt.s32.totalorder %s10, 2
    // Predicated region
    $region13: #{fwd.15} parent=5 // pred_check
      %p176 = pneg %p175
    $region14: #{fwd.15} parent=5 // pred_check_branch
      %178 = sbr.rel (%p176) target = $region16
    $region15: #{fwd.15} parent=5 // pred_region
      // Predicated region
      $region17: #{fwd.15} parent=15 // pred_check
        %p179 = pneg %p44
      $region18: #{fwd.15} parent=15 // pred_check_branch
        %181 = sbr.rel (%p179) target = $region20
      $region19: #{fwd.15} parent=15 // pred_region
        %p182 = scmp.lt.s32.totalorder %s17, 1
        %s183 = scalar_select %p182, %s17, 1
        %p184 = scmp.lt.s32.totalorder %s18, 0
        %s185 = scalar_select %p184, %s18, 0
        %s186 = sadd.s32 %s185, %s183
        %s187 = smul.addr %s186, 4
        %s188 = scalar_lea.vmem %s0, %s187
      $region20: #{fwd.15} parent=15 // pred_fallthru
        _
      // Predicated region
      $region21: #{fwd.15} parent=15 // pred_check
        %p189 = pneg %p72
      $region22: #{fwd.15} parent=15 // pred_check_branch
        %191 = sbr.rel (%p189) target = $region24
      $region23: #{fwd.15} parent=15 // pred_region
        %p192 = scmp.lt.s32.totalorder %s17, 1
        %s193 = scalar_select %p192, %s17, 1
        %p194 = scmp.lt.s32.totalorder %s18, 0
        %s195 = scalar_select %p194, %s18, 0
        %s196 = sadd.s32 %s195, %s193
        %s197 = smul.addr %s196, 4
        %s198 = scalar_lea.vmem %s1, %s197
      $region24: #{fwd.15} parent=15 // pred_fallthru
        _
      // Predicated region
      $region25: #{fwd.15} parent=15 // pred_check
        %p199 = pneg %p100
      $region26: #{fwd.15} parent=15 // pred_check_branch
        %201 = sbr.rel (%p199) target = $region28
      $region27: #{fwd.15} parent=15 // pred_region
        %p202 = scmp.lt.s32.totalorder %s17, 1
        %s203 = scalar_select %p202, %s17, 1
        %p204 = scmp.lt.s32.totalorder %s18, 0
        %s205 = scalar_select %p204, %s18, 0
        %s206 = sadd.s32 %s205, %s203
        %s207 = smul.addr %s206, 4
        %s208 = scalar_lea.vmem %s2, %s207
      $region28: #{fwd.15} parent=15 // pred_fallthru
        _
      // Predicated region
      $region29: #{fwd.15} parent=15 // pred_check
        %p209 = pneg %p126
      $region30: #{fwd.15} parent=15 // pred_check_branch
        %211 = sbr.rel (%p209) target = $region32
      $region31: #{fwd.15} parent=15 // pred_region
        %p212 = scmp.lt.s32.totalorder %s17, 1
        %s213 = scalar_select %p212, %s17, 1
        %s214 = scalar_lea.vmem %s3, %s213
      $region32: #{fwd.15} parent=15 // pred_fallthru
        _
    $region16: #{fwd.15} parent=5 // pred_fallthru
      _
    %p215 = scmp.le.s32.totalorder 1, %s10
    %p216 = scmp.lt.s32.totalorder %s10, 3
    %p217 = pnand %p215, %p216
    %p218 = pneg %p217
    // Predicated region
    $region33: #{fwd.15} parent=5 // pred_check
      _
    $region34: #{fwd.15} parent=5 // pred_check_branch
      %220 = sbr.rel (%p217) target = $region36
    $region35: #{fwd.15} parent=5 // pred_region
      %s221 = ssub.s32 %s10, 1
      %p222 = scmp.lt.s32.totalorder %s19, 1
      %s223 = scalar_select %p222, %s19, 1
      %p224 = scmp.lt.s32.totalorder %s20, 0
      %s225 = scalar_select %p224, %s20, 0
      %s226 = sadd.s32 %s225, %s223
      %s227 = smul.addr %s226, 4
      %s228 = scalar_lea.vmem %s0, %s227
      %p229 = pneg %p50
      %p230 = pneg %p47
      %p231 = scmp.lt.s32.totalorder %s19, 1
      %s232 = scalar_select %p231, %s19, 1
      %p233 = scmp.lt.s32.totalorder %s20, 0
      %s234 = scalar_select %p233, %s20, 0
      %s235 = sadd.s32 %s234, %s232
      %s236 = smul.addr %s235, 4
      %s237 = scalar_lea.vmem %s1, %s236
      %p238 = pneg %p78
      %p239 = pneg %p75
      %p240 = scmp.lt.s32.totalorder %s19, 1
      %s241 = scalar_select %p240, %s19, 1
      %p242 = scmp.lt.s32.totalorder %s20, 0
      %s243 = scalar_select %p242, %s20, 0
      %s244 = sadd.s32 %s243, %s241
      %s245 = smul.addr %s244, 4
      %s246 = scalar_lea.vmem %s2, %s245
      %p247 = pneg %p106
      %p248 = pneg %p103
      %p249 = scmp.lt.s32.totalorder %s19, 1
      %s250 = scalar_select %p249, %s19, 1
      %s251 = scalar_lea.vmem %s3, %s250
      %p252 = pneg %p132
      %p253 = pneg %p129
      %p254 = pneg %p160
      %p255 = pneg %p157
      %p256 = scmp.lt.s32.totalorder %s19, 1
      %s257 = scalar_select %p256, %s19, 1
      %p258 = scmp.lt.s32.totalorder %s20, 0
      %s259 = scalar_select %p258, %s20, 0
      %s260 = sadd.s32 %s259, %s257
      %s261 = smul.addr %s260, 4
      %s262 = scalar_lea.vmem %s4, %s261
      %p263 = scmp.lt.s32.totalorder %s19, 1
      %s264 = scalar_select %p263, %s19, 1
      %p265 = scmp.lt.s32.totalorder %s20, 0
      %s266 = scalar_select %p265, %s20, 0
      %s267 = sadd.s32 %s266, %s264
      %s268 = smul.addr %s267, 4
      %s269 = scalar_lea.vmem %s0, %s268
      %p270 = scmp.lt.s32.totalorder %s19, 1
      %s271 = scalar_select %p270, %s19, 1
      %p272 = scmp.lt.s32.totalorder %s20, 0
      %s273 = scalar_select %p272, %s20, 0
      %s274 = sadd.s32 %s273, %s271
      %s275 = smul.addr %s274, 4
      %s276 = scalar_lea.vmem %s1, %s275
      %p277 = scmp.lt.s32.totalorder %s19, 1
      %s278 = scalar_select %p277, %s19, 1
      %p279 = scmp.lt.s32.totalorder %s20, 0
      %s280 = scalar_select %p279, %s20, 0
      %s281 = sadd.s32 %s280, %s278
      %s282 = smul.addr %s281, 4
      %s283 = scalar_lea.vmem %s2, %s282
      %p284 = scmp.lt.s32.totalorder %s19, 1
      %s285 = scalar_select %p284, %s19, 1
      %s286 = scalar_lea.vmem %s3, %s285
      %p287 = scmp.lt.s32.totalorder %s19, 1
      %s288 = scalar_select %p287, %s19, 1
      %p289 = scmp.lt.s32.totalorder %s20, 0
      %s290 = scalar_select %p289, %s20, 0
      %s291 = sadd.s32 %s290, %s288
      %s292 = smul.addr %s291, 4
      %s293 = scalar_lea.vmem %s4, %s292
      %v295 = vld [vmem:[%s269] sm:$0xf]
      %v296 = vld [vmem:[%s276] sm:$0xf]
      %v297 = vld [vmem:[%s283] sm:$0xf]
      %v298 = vld [vmem:[%s286] sm:$0x1]
      %vm299 = vcmask 64512
      %v301 = vsel %vm299, %v295, 0
      %v304 = vsel %vm299, %v296, 0
      %306 = vmatprep.subr.bf16.mxu0 0
      %307 = vmatpush1.bf16.xpose.msra.mxu0 %v304
      %308 = vmatprep.subr.bf16.mxu0 0
      %309 = vmatpush1.bf16.xpose.msra.mxu0 0
      %310 = vmatprep.subr.bf16.mxu0 0
      %311 = vmatpush1.bf16.xpose.msra.mxu0 0
      %312 = vmatprep.subr.bf16.mxu0 0
      %313 = vmatpush1.bf16.xpose.msra.mxu0 0
      %314 = vmatprep.subr.bf16.mxu0 0
      %315 = vmatpush1.bf16.xpose.msra.mxu0 0
      %316 = vmatprep.subr.bf16.mxu0 0
      %317 = vmatpush1.bf16.xpose.msra.mxu0 0
      %318 = vmatprep.subr.bf16.mxu0 0
      %319 = vmatpush1.bf16.xpose.msra.mxu0 0
      %320 = vmatprep.subr.bf16.mxu0 0
      %321 = vmatpush1.bf16.xpose.msra.mxu0 0
      %322 = vmatprep.subr.bf16.mxu0 0
      %323 = vmatpush1.bf16.xpose.msra.mxu0 0
      %324 = vmatprep.subr.bf16.mxu0 0
      %325 = vmatpush1.bf16.xpose.msra.mxu0 0
      %326 = vmatprep.subr.bf16.mxu0 0
      %327 = vmatpush1.bf16.xpose.msra.mxu0 0
      %328 = vmatprep.subr.bf16.mxu0 0
      %329 = vmatpush1.bf16.xpose.msra.mxu0 0
      %330 = vmatprep.subr.bf16.mxu0 0
      %331 = vmatpush1.bf16.xpose.msra.mxu0 0
      %332 = vmatprep.subr.bf16.mxu0 0
      %333 = vmatpush1.bf16.xpose.msra.mxu0 0
      %334 = vmatprep.subr.bf16.mxu0 0
      %335 = vmatpush1.bf16.xpose.msra.mxu0 0
      %336 = vmatprep.subr.bf16.mxu0 0
      %337 = vmatpush1.bf16.xpose.msra.mxu0 0
      %338 = vmatprep.mubr.bf16.mxu0 0
      %339 = vmatmul.mubr.bf16.gmra.mrb[0].mxu0 %v301
      %v340 = vpop.f32.mrb[0].mxu0
      %v341 = vadd.f32 0.0, %v340
      %v342 = vpop.f32.mrb[0].mxu0
      %v343 = vpop.f32.mrb[0].mxu0
      %v344 = vpop.f32.mrb[0].mxu0
      %345 = vdwg.mxu0
      %v346 = vmul.f32 %v341, 0.35355338
      %v348 = vlaneseq
      %v349 = vshrl.u32 %v348, 7
      %v350 = vsub.s32 0, %v349
      %v351 = vrot.slane %v298, %v350
      %v353 = vadd.f32 %v346, %v351
      %v354 = vsel %vm299, %v353, -inf
      %355 = vmax.xlane.f32.xlu0 %v354
      %v356 = vpop.xlane.xlu0 %355
      %v357 = vsub.f32 %v353, %v356
      %v358 = vmul.f32 %v357, 1.442695
      %v359 = vpow.pop %v358
      %v360 = vsel %vm299, %v359, 0.0
      %361 = vadd.xlane.f32.xlu0 %v360
      %v362 = vpop.xlane.xlu0 %361
      %v363 = vrcp.pop %v362
      %v364 = vmul.f32 %v359, %v363
      %v365 = vpack.c.bf16 %v364, %v364
      %v367 = vsel %vm299, %v365, 0
      %vm369 = vcmask 1043456
      %v371 = vsel %vm369, %v297, 0
      %373 = vmatprep.subr.bf16.mxu0 0
      %374 = vmatpush1.bf16.msra.mxu0 %v371
      %375 = vmatprep.subr.bf16.mxu0 0
      %376 = vmatpush1.bf16.msra.mxu0 0
      %377 = vmatprep.subr.bf16.mxu0 0
      %378 = vmatpush1.bf16.msra.mxu0 0
      %379 = vmatprep.subr.bf16.mxu0 0
      %380 = vmatpush1.bf16.msra.mxu0 0
      %381 = vmatprep.subr.bf16.mxu0 0
      %382 = vmatpush1.bf16.msra.mxu0 0
      %383 = vmatprep.subr.bf16.mxu0 0
      %384 = vmatpush1.bf16.msra.mxu0 0
      %385 = vmatprep.subr.bf16.mxu0 0
      %386 = vmatpush1.bf16.msra.mxu0 0
      %387 = vmatprep.subr.bf16.mxu0 0
      %388 = vmatpush1.bf16.msra.mxu0 0
      %389 = vmatprep.subr.bf16.mxu0 0
      %390 = vmatpush1.bf16.msra.mxu0 0
      %391 = vmatprep.subr.bf16.mxu0 0
      %392 = vmatpush1.bf16.msra.mxu0 0
      %393 = vmatprep.subr.bf16.mxu0 0
      %394 = vmatpush1.bf16.msra.mxu0 0
      %395 = vmatprep.subr.bf16.mxu0 0
      %396 = vmatpush1.bf16.msra.mxu0 0
      %397 = vmatprep.subr.bf16.mxu0 0
      %398 = vmatpush1.bf16.msra.mxu0 0
      %399 = vmatprep.subr.bf16.mxu0 0
      %400 = vmatpush1.bf16.msra.mxu0 0
      %401 = vmatprep.subr.bf16.mxu0 0
      %402 = vmatpush1.bf16.msra.mxu0 0
      %403 = vmatprep.subr.bf16.mxu0 0
      %404 = vmatpush1.bf16.msra.mxu0 0
      %405 = vmatprep.mubr.bf16.mxu0 0
      %406 = vmatmul.mubr.bf16.gmra.mrb[0].mxu0 %v367
      %v407 = vpop.f32.mrb[0].mxu0
      %v408 = vadd.f32 0.0, %v407
      %v409 = vpop.f32.mrb[0].mxu0
      %v410 = vpop.f32.mrb[0].mxu0
      %v411 = vpop.f32.mrb[0].mxu0
      %412 = vdwg.mxu0
      %v414 = vunpack.c.l.b16 %v295
      %v415 = vpack.c.b16 %v414, %v414
      %416 = vrot.lane.b32.xlu0 %v415, 120
      %v417 = vpop.permute.xlu0 %416
      %v419 = vunpack.c.l.b16 %v296
      %v420 = vpack.c.b16 %v419, %v419
      %421 = vrot.lane.b32.xlu0 %v420, 120
      %v422 = vpop.permute.xlu0 %421
      %v424 = vsel %vm299, %v417, 0
      %v427 = vsel %vm299, %v422, 0
      %429 = vmatprep.subr.bf16.mxu0 0
      %430 = vmatpush1.bf16.xpose.msra.mxu0 %v427
      %431 = vmatprep.subr.bf16.mxu0 0
      %432 = vmatpush1.bf16.xpose.msra.mxu0 0
      %433 = vmatprep.subr.bf16.mxu0 0
      %434 = vmatpush1.bf16.xpose.msra.mxu0 0
      %435 = vmatprep.subr.bf16.mxu0 0
      %436 = vmatpush1.bf16.xpose.msra.mxu0 0
      %437 = vmatprep.subr.bf16.mxu0 0
      %438 = vmatpush1.bf16.xpose.msra.mxu0 0
      %439 = vmatprep.subr.bf16.mxu0 0
      %440 = vmatpush1.bf16.xpose.msra.mxu0 0
      %441 = vmatprep.subr.bf16.mxu0 0
      %442 = vmatpush1.bf16.xpose.msra.mxu0 0
      %443 = vmatprep.subr.bf16.mxu0 0
      %444 = vmatpush1.bf16.xpose.msra.mxu0 0
      %445 = vmatprep.subr.bf16.mxu0 0
      %446 = vmatpush1.bf16.xpose.msra.mxu0 0
      %447 = vmatprep.subr.bf16.mxu0 0
      %448 = vmatpush1.bf16.xpose.msra.mxu0 0
      %449 = vmatprep.subr.bf16.mxu0 0
      %450 = vmatpush1.bf16.xpose.msra.mxu0 0
      %451 = vmatprep.subr.bf16.mxu0 0
      %452 = vmatpush1.bf16.xpose.msra.mxu0 0
      %453 = vmatprep.subr.bf16.mxu0 0
      %454 = vmatpush1.bf16.xpose.msra.mxu0 0
      %455 = vmatprep.subr.bf16.mxu0 0
      %456 = vmatpush1.bf16.xpose.msra.mxu0 0
      %457 = vmatprep.subr.bf16.mxu0 0
      %458 = vmatpush1.bf16.xpose.msra.mxu0 0
      %459 = vmatprep.subr.bf16.mxu0 0
      %460 = vmatpush1.bf16.xpose.msra.mxu0 0
      %461 = vmatprep.mubr.bf16.mxu0 0
      %462 = vmatmul.mubr.bf16.gmra.mrb[0].mxu0 %v424
      %v463 = vpop.f32.mrb[0].mxu0
      %v464 = vadd.f32 0.0, %v463
      %v465 = vpop.f32.mrb[0].mxu0
      %v466 = vpop.f32.mrb[0].mxu0
      %v467 = vpop.f32.mrb[0].mxu0
      %468 = vdwg.mxu0
      %v469 = vmul.f32 %v464, 0.35355338
      %v470 = vadd.f32 %v469, %v351
      %v471 = vsel %vm299, %v470, -inf
      %472 = vmax.xlane.f32.xlu0 %v471
      %v473 = vpop.xlane.xlu0 %472
      %v474 = vsub.f32 %v470, %v473
      %v475 = vmul.f32 %v474, 1.442695
      %v476 = vpow.pop %v475
      %v477 = vsel %vm299, %v476, 0.0
      %478 = vadd.xlane.f32.xlu0 %v477
      %v479 = vpop.xlane.xlu0 %478
      %v480 = vrcp.pop %v479
      %v481 = vmul.f32 %v476, %v480
      %v482 = vpack.c.bf16 %v481, %v481
      %v484 = vunpack.c.l.b16 %v297
      %v485 = vpack.c.b16 %v484, %v484
      %486 = vrot.lane.b32.xlu0 %v485, 120
      %v487 = vpop.permute.xlu0 %486
      %v489 = vsel %vm299, %v482, 0
      %v492 = vsel %vm369, %v487, 0
      %494 = vmatprep.subr.bf16.mxu0 0
      %495 = vmatpush1.bf16.msra.mxu0 %v492
      %496 = vmatprep.subr.bf16.mxu0 0
      %497 = vmatpush1.bf16.msra.mxu0 0
      %498 = vmatprep.subr.bf16.mxu0 0
      %499 = vmatpush1.bf16.msra.mxu0 0
      %500 = vmatprep.subr.bf16.mxu0 0
      %501 = vmatpush1.bf16.msra.mxu0 0
      %502 = vmatprep.subr.bf16.mxu0 0
      %503 = vmatpush1.bf16.msra.mxu0 0
      %504 = vmatprep.subr.bf16.mxu0 0
      %505 = vmatpush1.bf16.msra.mxu0 0
      %506 = vmatprep.subr.bf16.mxu0 0
      %507 = vmatpush1.bf16.msra.mxu0 0
      %508 = vmatprep.subr.bf16.mxu0 0
      %509 = vmatpush1.bf16.msra.mxu0 0
      %510 = vmatprep.subr.bf16.mxu0 0
      %511 = vmatpush1.bf16.msra.mxu0 0
      %512 = vmatprep.subr.bf16.mxu0 0
      %513 = vmatpush1.bf16.msra.mxu0 0
      %514 = vmatprep.subr.bf16.mxu0 0
      %515 = vmatpush1.bf16.msra.mxu0 0
      %516 = vmatprep.subr.bf16.mxu0 0
      %517 = vmatpush1.bf16.msra.mxu0 0
      %518 = vmatprep.subr.bf16.mxu0 0
      %519 = vmatpush1.bf16.msra.mxu0 0
      %520 = vmatprep.subr.bf16.mxu0 0
      %521 = vmatpush1.bf16.msra.mxu0 0
      %522 = vmatprep.subr.bf16.mxu0 0
      %523 = vmatpush1.bf16.msra.mxu0 0
      %524 = vmatprep.subr.bf16.mxu0 0
      %525 = vmatpush1.bf16.msra.mxu0 0
      %526 = vmatprep.mubr.bf16.mxu0 0
      %527 = vmatmul.mubr.bf16.gmra.mrb[0].mxu0 %v489
      %v528 = vpop.f32.mrb[0].mxu0
      %v529 = vadd.f32 0.0, %v528
      %v530 = vpop.f32.mrb[0].mxu0
      %v531 = vpop.f32.mrb[0].mxu0
      %v532 = vpop.f32.mrb[0].mxu0
      %533 = vdwg.mxu0
      %534 = vrot.lane.b32.xlu0 %v415, 112
      %v535 = vpop.permute.xlu0 %534
      %536 = vrot.lane.b32.xlu0 %v420, 112
      %v537 = vpop.permute.xlu0 %536
      %v539 = vsel %vm299, %v535, 0
      %v542 = vsel %vm299, %v537, 0
      %544 = vmatprep.subr.bf16.mxu0 0
      %545 = vmatpush1.bf16.xpose.msra.mxu0 %v542
      %546 = vmatprep.subr.bf16.mxu0 0
      %547 = vmatpush1.bf16.xpose.msra.mxu0 0
      %548 = vmatprep.subr.bf16.mxu0 0
      %549 = vmatpush1.bf16.xpose.msra.mxu0 0
      %550 = vmatprep.subr.bf16.mxu0 0
      %551 = vmatpush1.bf16.xpose.msra.mxu0 0
      %552 = vmatprep.subr.bf16.mxu0 0
      %553 = vmatpush1.bf16.xpose.msra.mxu0 0
      %554 = vmatprep.subr.bf16.mxu0 0
      %555 = vmatpush1.bf16.xpose.msra.mxu0 0
      %556 = vmatprep.subr.bf16.mxu0 0
      %557 = vmatpush1.bf16.xpose.msra.mxu0 0
      %558 = vmatprep.subr.bf16.mxu0 0
      %559 = vmatpush1.bf16.xpose.msra.mxu0 0
      %560 = vmatprep.subr.bf16.mxu0 0
      %561 = vmatpush1.bf16.xpose.msra.mxu0 0
      %562 = vmatprep.subr.bf16.mxu0 0
      %563 = vmatpush1.bf16.xpose.msra.mxu0 0
      %564 = vmatprep.subr.bf16.mxu0 0
      %565 = vmatpush1.bf16.xpose.msra.mxu0 0
      %566 = vmatprep.subr.bf16.mxu0 0
      %567 = vmatpush1.bf16.xpose.msra.mxu0 0
      %568 = vmatprep.subr.bf16.mxu0 0
      %569 = vmatpush1.bf16.xpose.msra.mxu0 0
      %570 = vmatprep.subr.bf16.mxu0 0
      %571 = vmatpush1.bf16.xpose.msra.mxu0 0
      %572 = vmatprep.subr.bf16.mxu0 0
      %573 = vmatpush1.bf16.xpose.msra.mxu0 0
      %574 = vmatprep.subr.bf16.mxu0 0
      %575 = vmatpush1.bf16.xpose.msra.mxu0 0
      %576 = vmatprep.mubr.bf16.mxu0 0
      %577 = vmatmul.mubr.bf16.gmra.mrb[0].mxu0 %v539
      %v578 = vpop.f32.mrb[0].mxu0
      %v579 = vadd.f32 0.0, %v578
      %v580 = vpop.f32.mrb[0].mxu0
      %v581 = vpop.f32.mrb[0].mxu0
      %v582 = vpop.f32.mrb[0].mxu0
      %583 = vdwg.mxu0
      %v584 = vmul.f32 %v579, 0.35355338
      %v585 = vadd.f32 %v584, %v351
      %v586 = vsel %vm299, %v585, -inf
      %587 = vmax.xlane.f32.xlu0 %v586
      %v588 = vpop.xlane.xlu0 %587
      %v589 = vsub.f32 %v585, %v588
      %v590 = vmul.f32 %v589, 1.442695
      %v591 = vpow.pop %v590
      %v592 = vsel %vm299, %v591, 0.0
      %593 = vadd.xlane.f32.xlu0 %v592
      %v594 = vpop.xlane.xlu0 %593
      %v595 = vrcp.pop %v594
      %v596 = vmul.f32 %v591, %v595
      %v597 = vpack.c.bf16 %v596, %v596
      %598 = vrot.lane.b32.xlu0 %v485, 112
      %v599 = vpop.permute.xlu0 %598
      %v601 = vsel %vm299, %v597, 0
      %v604 = vsel %vm369, %v599, 0
      %606 = vmatprep.subr.bf16.mxu0 0
      %607 = vmatpush1.bf16.msra.mxu0 %v604
      %608 = vmatprep.subr.bf16.mxu0 0
      %609 = vmatpush1.bf16.msra.mxu0 0
      %610 = vmatprep.subr.bf16.mxu0 0
      %611 = vmatpush1.bf16.msra.mxu0 0
      %612 = vmatprep.subr.bf16.mxu0 0
      %613 = vmatpush1.bf16.msra.mxu0 0
      %614 = vmatprep.subr.bf16.mxu0 0
      %615 = vmatpush1.bf16.msra.mxu0 0
      %616 = vmatprep.subr.bf16.mxu0 0
      %617 = vmatpush1.bf16.msra.mxu0 0
      %618 = vmatprep.subr.bf16.mxu0 0
      %619 = vmatpush1.bf16.msra.mxu0 0
      %620 = vmatprep.subr.bf16.mxu0 0
      %621 = vmatpush1.bf16.msra.mxu0 0
      %622 = vmatprep.subr.bf16.mxu0 0
      %623 = vmatpush1.bf16.msra.mxu0 0
      %624 = vmatprep.subr.bf16.mxu0 0
      %625 = vmatpush1.bf16.msra.mxu0 0
      %626 = vmatprep.subr.bf16.mxu0 0
      %627 = vmatpush1.bf16.msra.mxu0 0
      %628 = vmatprep.subr.bf16.mxu0 0
      %629 = vmatpush1.bf16.msra.mxu0 0
      %630 = vmatprep.subr.bf16.mxu0 0
      %631 = vmatpush1.bf16.msra.mxu0 0
      %632 = vmatprep.subr.bf16.mxu0 0
      %633 = vmatpush1.bf16.msra.mxu0 0
      %634 = vmatprep.subr.bf16.mxu0 0
      %635 = vmatpush1.bf16.msra.mxu0 0
      %636 = vmatprep.subr.bf16.mxu0 0
      %637 = vmatpush1.bf16.msra.mxu0 0
      %638 = vmatprep.mubr.bf16.mxu0 0
      %639 = vmatmul.mubr.bf16.gmra.mrb[0].mxu0 %v601
      %v640 = vpop.f32.mrb[0].mxu0
      %v641 = vadd.f32 0.0, %v640
      %v642 = vpop.f32.mrb[0].mxu0
      %v643 = vpop.f32.mrb[0].mxu0
      %v644 = vpop.f32.mrb[0].mxu0
      %645 = vdwg.mxu0
      %646 = vrot.lane.b32.xlu0 %v415, 104
      %v647 = vpop.permute.xlu0 %646
      %648 = vrot.lane.b32.xlu0 %v420, 104
      %v649 = vpop.permute.xlu0 %648
      %v651 = vsel %vm299, %v647, 0
      %v654 = vsel %vm299, %v649, 0
      %656 = vmatprep.subr.bf16.mxu0 0
      %657 = vmatpush1.bf16.xpose.msra.mxu0 %v654
      %658 = vmatprep.subr.bf16.mxu0 0
      %659 = vmatpush1.bf16.xpose.msra.mxu0 0
      %660 = vmatprep.subr.bf16.mxu0 0
      %661 = vmatpush1.bf16.xpose.msra.mxu0 0
      %662 = vmatprep.subr.bf16.mxu0 0
      %663 = vmatpush1.bf16.xpose.msra.mxu0 0
      %664 = vmatprep.subr.bf16.mxu0 0
      %665 = vmatpush1.bf16.xpose.msra.mxu0 0
      %666 = vmatprep.subr.bf16.mxu0 0
      %667 = vmatpush1.bf16.xpose.msra.mxu0 0
      %668 = vmatprep.subr.bf16.mxu0 0
      %669 = vmatpush1.bf16.xpose.msra.mxu0 0
      %670 = vmatprep.subr.bf16.mxu0 0
      %671 = vmatpush1.bf16.xpose.msra.mxu0 0
      %672 = vmatprep.subr.bf16.mxu0 0
      %673 = vmatpush1.bf16.xpose.msra.mxu0 0
      %674 = vmatprep.subr.bf16.mxu0 0
      %675 = vmatpush1.bf16.xpose.msra.mxu0 0
      %676 = vmatprep.subr.bf16.mxu0 0
      %677 = vmatpush1.bf16.xpose.msra.mxu0 0
      %678 = vmatprep.subr.bf16.mxu0 0
      %679 = vmatpush1.bf16.xpose.msra.mxu0 0
      %680 = vmatprep.subr.bf16.mxu0 0
      %681 = vmatpush1.bf16.xpose.msra.mxu0 0
      %682 = vmatprep.subr.bf16.mxu0 0
      %683 = vmatpush1.bf16.xpose.msra.mxu0 0
      %684 = vmatprep.subr.bf16.mxu0 0
      %685 = vmatpush1.bf16.xpose.msra.mxu0 0
      %686 = vmatprep.subr.bf16.mxu0 0
      %687 = vmatpush1.bf16.xpose.msra.mxu0 0
      %688 = vmatprep.mubr.bf16.mxu0 0
      %689 = vmatmul.mubr.bf16.gmra.mrb[0].mxu0 %v651
      %v690 = vpop.f32.mrb[0].mxu0
      %v691 = vadd.f32 0.0, %v690
      %v692 = vpop.f32.mrb[0].mxu0
      %v693 = vpop.f32.mrb[0].mxu0
      %v694 = vpop.f32.mrb[0].mxu0
      %695 = vdwg.mxu0
      %v696 = vmul.f32 %v691, 0.35355338
      %v697 = vadd.f32 %v696, %v351
      %v698 = vsel %vm299, %v697, -inf
      %699 = vmax.xlane.f32.xlu0 %v698
      %v700 = vpop.xlane.xlu0 %699
      %v701 = vsub.f32 %v697, %v700
      %v702 = vmul.f32 %v701, 1.442695
      %v703 = vpow.pop %v702
      %v704 = vsel %vm299, %v703, 0.0
      %705 = vadd.xlane.f32.xlu0 %v704
      %v706 = vpop.xlane.xlu0 %705
      %v707 = vrcp.pop %v706
      %v708 = vmul.f32 %v703, %v707
      %v709 = vpack.c.bf16 %v708, %v708
      %710 = vrot.lane.b32.xlu0 %v485, 104
      %v711 = vpop.permute.xlu0 %710
      %v713 = vsel %vm299, %v709, 0
      %v716 = vsel %vm369, %v711, 0
      %718 = vmatprep.subr.bf16.mxu0 0
      %719 = vmatpush1.bf16.msra.mxu0 %v716
      %720 = vmatprep.subr.bf16.mxu0 0
      %721 = vmatpush1.bf16.msra.mxu0 0
      %722 = vmatprep.subr.bf16.mxu0 0
      %723 = vmatpush1.bf16.msra.mxu0 0
      %724 = vmatprep.subr.bf16.mxu0 0
      %725 = vmatpush1.bf16.msra.mxu0 0
      %726 = vmatprep.subr.bf16.mxu0 0
      %727 = vmatpush1.bf16.msra.mxu0 0
      %728 = vmatprep.subr.bf16.mxu0 0
      %729 = vmatpush1.bf16.msra.mxu0 0
      %730 = vmatprep.subr.bf16.mxu0 0
      %731 = vmatpush1.bf16.msra.mxu0 0
      %732 = vmatprep.subr.bf16.mxu0 0
      %733 = vmatpush1.bf16.msra.mxu0 0
      %734 = vmatprep.subr.bf16.mxu0 0
      %735 = vmatpush1.bf16.msra.mxu0 0
      %736 = vmatprep.subr.bf16.mxu0 0
      %737 = vmatpush1.bf16.msra.mxu0 0
      %738 = vmatprep.subr.bf16.mxu0 0
      %739 = vmatpush1.bf16.msra.mxu0 0
      %740 = vmatprep.subr.bf16.mxu0 0
      %741 = vmatpush1.bf16.msra.mxu0 0
      %742 = vmatprep.subr.bf16.mxu0 0
      %743 = vmatpush1.bf16.msra.mxu0 0
      %744 = vmatprep.subr.bf16.mxu0 0
      %745 = vmatpush1.bf16.msra.mxu0 0
      %746 = vmatprep.subr.bf16.mxu0 0
      %747 = vmatpush1.bf16.msra.mxu0 0
      %748 = vmatprep.subr.bf16.mxu0 0
      %749 = vmatpush1.bf16.msra.mxu0 0
      %750 = vmatprep.mubr.bf16.mxu0 0
      %751 = vmatmul.mubr.bf16.gmra.mrb[0].mxu0 %v713
      %v752 = vpop.f32.mrb[0].mxu0
      %v753 = vadd.f32 0.0, %v752
      %v754 = vpop.f32.mrb[0].mxu0
      %v755 = vpop.f32.mrb[0].mxu0
      %v756 = vpop.f32.mrb[0].mxu0
      %757 = vdwg.mxu0
      %759 = vrot.lane.b32.xlu0 %v529, 8
      %v760 = vpop.permute.xlu0 %759
      %763 = vrot.lane.b32.xlu0 %v641, 16
      %v764 = vpop.permute.xlu0 %763
      %767 = vrot.lane.b32.xlu0 %v753, 24
      %v768 = vpop.permute.xlu0 %767
      %v770 = vsel %vm299, %v408, %v760
      %vm771 = vcmask 130048
      %v772 = vsel %vm771, %v770, %v764
      %vm773 = vcmask 195584
      %v774 = vsel %vm773, %v772, %v768
      %v775 = vpack.c.bf16 %v774, %v774
      %vm776 = vcmask 257024
      %777 = vst.msk [vmem:[%s293] sm:$0xf] %vm776, %v775
      %p778 = scmp.lt.s32.totalorder %s19, 1
      %s779 = scalar_select %p778, %s19, 1
      %p780 = scmp.lt.s32.totalorder %s20, 0
      %s781 = scalar_select %p780, %s20, 0
      %s782 = sadd.s32 %s781, %s779
      %s783 = smul.addr %s782, 4
      %s784 = scalar_lea.vmem %s4, %s783
      // Predicated region
      $region37: #{fwd.15} parent=35 // pred_check
        %p785 = pneg %p157
      $region38: #{fwd.15} parent=35 // pred_check_branch
        %787 = sbr.rel (%p785) target = $region40
      $region39: #{fwd.15} parent=35 // pred_region
        _
      $region40: #{fwd.15} parent=35 // pred_fallthru
        _
    $region36: #{fwd.15} parent=5 // pred_fallthru
      _
    %p788 = scmp.le.s32.totalorder 2, %s10
    // Predicated region
    $region41: #{fwd.15} parent=5 // pred_check
      %p789 = pneg %p788
    $region42: #{fwd.15} parent=5 // pred_check_branch
      %791 = sbr.rel (%p789) target = $region44
    $region43: #{fwd.15} parent=5 // pred_region
      %s792 = ssub.s32 %s10, 2
      // Predicated region
      $region45: #{fwd.15} parent=43 // pred_check
        %p793 = pneg %p163
      $region46: #{fwd.15} parent=43 // pred_check_branch
        %795 = sbr.rel (%p793) target = $region48
      $region47: #{fwd.15} parent=43 // pred_region
        %p796 = scmp.lt.s32.totalorder %s21, 1
        %s797 = scalar_select %p796, %s21, 1
        %p798 = scmp.lt.s32.totalorder %s22, 0
        %s799 = scalar_select %p798, %s22, 0
        %s800 = sadd.s32 %s799, %s797
        %s801 = smul.addr %s800, 4
        %s802 = scalar_lea.vmem %s4, %s801
      $region48: #{fwd.15} parent=43 // pred_fallthru
        _
    $region44: #{fwd.15} parent=5 // pred_fallthru
      _
  $region6: #{fwd.15} parent=0 // loop_footer
    %s14 = sadd.s32 1, %s10
  $region7: #{fwd.15} parent=0 // loop_footer_branch
    %9 = sbr.rel target = $region3
  $region8: #{fwd.15} parent=0 // loop_exit
    _

// kernel: fwd.17
$region0: #{fwd.17}
  #allocation0 [shape = 'u32[]', space=smem, size = 0x4, offset = 0x4, fixed_abs, tag = 'smem constant byte address 0x4 - core index']
  #allocation1 [shape = 'u32[144,128]{1,0:T(1,128)}', space=vmem, size = 0x12000, scoped, tag = 'internal scratch']
  %s0 = inlined_call_operand.vmem [shape: bf16[16,32], index: 0, kind: input, shape index: {}]
  %s1 = inlined_call_operand.vmem [shape: bf16[64,32], index: 1, kind: input, shape index: {}]
  %s2 = inlined_call_operand.vmem [shape: f32[1,64], index: 2, kind: input, shape index: {}]
  %s3 = inlined_call_operand.vmem [shape: bf16[16,64], index: 3, kind: output, shape index: {}]
  %s4 = sld [smem:[#allocation0]]
  $region22: #{fwd.17} parent=0
    _
  %s6 = ssub.s32 1, %s4
  %s7 = scalar_select 0, %s6, %s4
  // Predicated region
  $region2: #{fwd.17} parent=0 // pred_check
    _
  $region3: #{fwd.17} parent=0 // pred_check_branch
    %9 = sbr.rel (0) target = $region5
  $region4: #{fwd.17} parent=0 // pred_region
    _
  $region5: #{fwd.17} parent=0 // pred_fallthru
    _
  // Predicated region
  $region6: #{fwd.17} parent=0 // pred_check
    _
  $region7: #{fwd.17} parent=0 // pred_check_branch
    %11 = sbr.rel (0) target = $region9
  $region8: #{fwd.17} parent=0 // pred_region
    _
  $region9: #{fwd.17} parent=0 // pred_fallthru
    _
  // Predicated region
  $region10: #{fwd.17} parent=0 // pred_check
    _
  $region11: #{fwd.17} parent=0 // pred_check_branch
    %13 = sbr.rel (0) target = $region13
  $region12: #{fwd.17} parent=0 // pred_region
    _
  $region13: #{fwd.17} parent=0 // pred_fallthru
    _
  %v15 = vld [vmem:[%s0] sm:$0xf]
  %v16 = vld [vmem:[%s0 + $0x4] sm:$0xf]
  %v17 = vld [vmem:[%s1] sm:$0xf]
  %v18 = vld [vmem:[%s1 + $0x4] sm:$0xf]
  %v19 = vld [vmem:[%s1 + $0x8] sm:$0xf]
  %v20 = vld [vmem:[%s1 + $0xc] sm:$0xf]
  %v21 = vld [vmem:[%s1 + $0x10] sm:$0xf]
  %v22 = vld [vmem:[%s1 + $0x14] sm:$0xf]
  %v23 = vld [vmem:[%s1 + $0x18] sm:$0xf]
  %v24 = vld [vmem:[%s1 + $0x1c] sm:$0xf]
  %v25 = vld [vmem:[%s2] sm:$0x1]
  %v27 = vlaneseq
  %v28 = vshrl.u32 %v27, 7
  %v29 = vsub.s32 0, %v28
  %v30 = vrot.slane %v25, %v29
  %v34 = vunpack.c.l.b16 %v15
  %v35 = vunpack.c.l.b16 %v16
  %v36 = vpack.c.b16 %v35, %v34
  %v45 = vunpack.c.l.b16 %v17
  %v46 = vunpack.c.l.b16 %v18
  %v47 = vunpack.c.l.b16 %v19
  %v48 = vunpack.c.l.b16 %v20
  %v49 = vunpack.c.l.b16 %v21
  %v50 = vunpack.c.l.b16 %v22
  %v51 = vunpack.c.l.b16 %v23
  %v52 = vunpack.c.l.b16 %v24
  %v53 = vpack.c.b16 %v46, %v45
  %v54 = vpack.c.b16 %v48, %v47
  %v55 = vpack.c.b16 %v50, %v49
  %v56 = vpack.c.b16 %v52, %v51
  %vm57 = vcmask 261120
  %v59 = vsel %vm57, %v36, 0
  %v62 = vsel %vm57, %v53, 0
  %v65 = vsel %vm57, %v54, 0
  %v68 = vsel %vm57, %v55, 0
  %v71 = vsel %vm57, %v56, 0
  %73 = vmatprep.subr.bf16.mxu0 0
  %74 = vmatpush1.bf16.xpose.msra.mxu0 %v62
  %75 = vmatprep.subr.bf16.mxu0 0
  %76 = vmatpush1.bf16.xpose.msra.mxu0 %v65
  %77 = vmatprep.subr.bf16.mxu0 0
  %78 = vmatpush1.bf16.xpose.msra.mxu0 %v68
  %79 = vmatprep.subr.bf16.mxu0 0
  %80 = vmatpush1.bf16.xpose.msra.mxu0 %v71
  %81 = vmatprep.subr.bf16.mxu0 0
  %82 = vmatpush1.bf16.xpose.msra.mxu0 0
  %83 = vmatprep.subr.bf16.mxu0 0
  %84 = vmatpush1.bf16.xpose.msra.mxu0 0
  %85 = vmatprep.subr.bf16.mxu0 0
  %86 = vmatpush1.bf16.xpose.msra.mxu0 0
  %87 = vmatprep.subr.bf16.mxu0 0
  %88 = vmatpush1.bf16.xpose.msra.mxu0 0
  %89 = vmatprep.subr.bf16.mxu0 0
  %90 = vmatpush1.bf16.xpose.msra.mxu0 0
  %91 = vmatprep.subr.bf16.mxu0 0
  %92 = vmatpush1.bf16.xpose.msra.mxu0 0
  %93 = vmatprep.subr.bf16.mxu0 0
  %94 = vmatpush1.bf16.xpose.msra.mxu0 0
  %95 = vmatprep.subr.bf16.mxu0 0
  %96 = vmatpush1.bf16.xpose.msra.mxu0 0
  %97 = vmatprep.subr.bf16.mxu0 0
  %98 = vmatpush1.bf16.xpose.msra.mxu0 0
  %99 = vmatprep.subr.bf16.mxu0 0
  %100 = vmatpush1.bf16.xpose.msra.mxu0 0
  %101 = vmatprep.subr.bf16.mxu0 0
  %102 = vmatpush1.bf16.xpose.msra.mxu0 0
  %103 = vmatprep.subr.bf16.mxu0 0
  %104 = vmatpush1.bf16.xpose.msra.mxu0 0
  %105 = vmatprep.mubr.bf16.mxu0 0
  %106 = vmatmul.mubr.bf16.gmra.mrb[0].mxu0 %v59
  %v107 = vpop.f32.mrb[0].mxu0
  %v108 = vadd.f32 %v30, %v107
  %v109 = vpop.f32.mrb[0].mxu0
  %v110 = vpop.f32.mrb[0].mxu0
  %v111 = vadd.f32 %v30, %v110
  %v112 = vpop.f32.mrb[0].mxu0
  %113 = vdwg.mxu0
  %v114 = vmul.f32 %v108, 0.5
  %v115 = vmul.f32 %v111, 0.5
  %v116 = vmul.f32 %v108, 0.044715
  %v117 = vmul.f32 %v111, 0.044715
  %v118 = vmul.f32 %v116, %v108
  %v119 = vmul.f32 %v117, %v111
  %v120 = vmul.f32 %v118, %v108
  %v121 = vmul.f32 %v119, %v111
  %v122 = vadd.f32 %v108, %v120
  %v123 = vadd.f32 %v111, %v121
  %v124 = vmul.f32 %v122, 0.7978846
  %v125 = vmul.f32 %v123, 0.7978846
  %v126 = vtanh.pop %v124
  %v127 = vtanh.pop %v125
  %v128 = vadd.f32 %v126, 1.0
  %v129 = vadd.f32 %v127, 1.0
  %v130 = vmul.f32 %v114, %v128
  %v131 = vmul.f32 %v115, %v129
  %v132 = vpack.c.bf16 %v131, %v130
  %v134 = vunpack.c.l.b16 %v132
  %v135 = vunpack.c.h.b16 %v132
  %v136 = vpack.c.b16 %v134, %v134
  %v137 = vpack.c.b16 %v135, %v135
  %vm140 = vcmask 519168
  %141 = vst.msk [vmem:[%s3] sm:$0xf] %vm140, %v136
  %142 = vst.msk [vmem:[%s3 + $0x4] sm:$0xf] %vm140, %v137
  // Predicated region
  $region14: #{fwd.17} parent=0 // pred_check
    _
  $region15: #{fwd.17} parent=0 // pred_check_branch
    %144 = sbr.rel (0) target = $region17
  $region16: #{fwd.17} parent=0 // pred_region
    _
  $region17: #{fwd.17} parent=0 // pred_fallthru
    _
  // Predicated region
  $region18: #{fwd.17} parent=0 // pred_check
    _
  $region19: #{fwd.17} parent=0 // pred_check_branch
    %146 = sbr.rel (0) target = $region21
  $region20: #{fwd.17} parent=0 // pred_region
    _
  $region21: #{fwd.17} parent=0 // pred_fallthru
    _

// kernel: fwd.24
$region0: #{fwd.24}
  #allocation0 [shape = 'u32[]', space=smem, size = 0x4, offset = 0x4, fixed_abs, tag = 'smem constant byte address 0x4 - core index']
  #allocation1 [shape = 'u32[144,128]{1,0:T(1,128)}', space=vmem, size = 0x12000, scoped, tag = 'internal scratch']
  %s0 = inlined_call_operand.vmem [shape: bf16[16,32], index: 0, kind: input, shape index: {}]
  %s1 = inlined_call_operand.vmem [shape: bf16[32,32], index: 1, kind: input, shape index: {}]
  %s2 = inlined_call_operand.vmem [shape: f32[1,32], index: 2, kind: input, shape index: {}]
  %s3 = inlined_call_operand.vmem [shape: f32[1,32], index: 3, kind: input, shape index: {}]
  %s4 = inlined_call_operand.vmem [shape: f32[1,32], index: 4, kind: input, shape index: {}]
  %s5 = inlined_call_operand.vmem [shape: bf16[16,32], index: 5, kind: output, shape index: {}]
  %s6 = sld [smem:[#allocation0]]
  $region30: #{fwd.24} parent=0
    _
  %s8 = ssub.s32 1, %s6
  %s9 = scalar_select 0, %s8, %s6
  // Predicated region
  $region2: #{fwd.24} parent=0 // pred_check
    _
  $region3: #{fwd.24} parent=0 // pred_check_branch
    %11 = sbr.rel (0) target = $region5
  $region4: #{fwd.24} parent=0 // pred_region
    _
  $region5: #{fwd.24} parent=0 // pred_fallthru
    _
  // Predicated region
  $region6: #{fwd.24} parent=0 // pred_check
    _
  $region7: #{fwd.24} parent=0 // pred_check_branch
    %13 = sbr.rel (0) target = $region9
  $region8: #{fwd.24} parent=0 // pred_region
    _
  $region9: #{fwd.24} parent=0 // pred_fallthru
    _
  // Predicated region
  $region10: #{fwd.24} parent=0 // pred_check
    _
  $region11: #{fwd.24} parent=0 // pred_check_branch
    %15 = sbr.rel (0) target = $region13
  $region12: #{fwd.24} parent=0 // pred_region
    _
  $region13: #{fwd.24} parent=0 // pred_fallthru
    _
  // Predicated region
  $region14: #{fwd.24} parent=0 // pred_check
    _
  $region15: #{fwd.24} parent=0 // pred_check_branch
    %17 = sbr.rel (0) target = $region17
  $region16: #{fwd.24} parent=0 // pred_region
    _
  $region17: #{fwd.24} parent=0 // pred_fallthru
    _
  // Predicated region
  $region18: #{fwd.24} parent=0 // pred_check
    _
  $region19: #{fwd.24} parent=0 // pred_check_branch
    %19 = sbr.rel (0) target = $region21
  $region20: #{fwd.24} parent=0 // pred_region
    _
  $region21: #{fwd.24} parent=0 // pred_fallthru
    _
  %v21 = vld [vmem:[%s0] sm:$0xf]
  %v22 = vld [vmem:[%s0 + $0x4] sm:$0xf]
  %v23 = vld [vmem:[%s1] sm:$0xf]
  %v24 = vld [vmem:[%s1 + $0x4] sm:$0xf]
  %v25 = vld [vmem:[%s1 + $0x8] sm:$0xf]
  %v26 = vld [vmem:[%s1 + $0xc] sm:$0xf]
  %v27 = vld [vmem:[%s2] sm:$0x1]
  %v29 = vlaneseq
  %v30 = vshrl.u32 %v29, 7
  %v31 = vsub.s32 0, %v30
  %v32 = vrot.slane %v27, %v31
  %v36 = vunpack.c.l.b16 %v21
  %v37 = vunpack.c.l.b16 %v22
  %v38 = vpack.c.b16 %v37, %v36
  %v43 = vunpack.c.l.b16 %v23
  %v44 = vunpack.c.l.b16 %v24
  %v45 = vunpack.c.l.b16 %v25
  %v46 = vunpack.c.l.b16 %v26
  %v47 = vpack.c.b16 %v44, %v43
  %v48 = vpack.c.b16 %v46, %v45
  %vm49 = vcmask 261120
  %v51 = vsel %vm49, %v38, 0
  %v54 = vsel %vm49, %v47, 0
  %v57 = vsel %vm49, %v48, 0
  %59 = vmatprep.subr.bf16.mxu0 0
  %60 = vmatpush1.bf16.xpose.msra.mxu0 %v54
  %61 = vmatprep.subr.bf16.mxu0 0
  %62 = vmatpush1.bf16.xpose.msra.mxu0 %v57
  %63 = vmatprep.subr.bf16.mxu0 0
  %64 = vmatpush1.bf16.xpose.msra.mxu0 0
  %65 = vmatprep.subr.bf16.mxu0 0
  %66 = vmatpush1.bf16.xpose.msra.mxu0 0
  %67 = vmatprep.subr.bf16.mxu0 0
  %68 = vmatpush1.bf16.xpose.msra.mxu0 0
  %69 = vmatprep.subr.bf16.mxu0 0
  %70 = vmatpush1.bf16.xpose.msra.mxu0 0
  %71 = vmatprep.subr.bf16.mxu0 0
  %72 = vmatpush1.bf16.xpose.msra.mxu0 0
  %73 = vmatprep.subr.bf16.mxu0 0
  %74 = vmatpush1.bf16.xpose.msra.mxu0 0
  %75 = vmatprep.subr.bf16.mxu0 0
  %76 = vmatpush1.bf16.xpose.msra.mxu0 0
  %77 = vmatprep.subr.bf16.mxu0 0
  %78 = vmatpush1.bf16.xpose.msra.mxu0 0
  %79 = vmatprep.subr.bf16.mxu0 0
  %80 = vmatpush1.bf16.xpose.msra.mxu0 0
  %81 = vmatprep.subr.bf16.mxu0 0
  %82 = vmatpush1.bf16.xpose.msra.mxu0 0
  %83 = vmatprep.subr.bf16.mxu0 0
  %84 = vmatpush1.bf16.xpose.msra.mxu0 0
  %85 = vmatprep.subr.bf16.mxu0 0
  %86 = vmatpush1.bf16.xpose.msra.mxu0 0
  %87 = vmatprep.subr.bf16.mxu0 0
  %88 = vmatpush1.bf16.xpose.msra.mxu0 0
  %89 = vmatprep.subr.bf16.mxu0 0
  %90 = vmatpush1.bf16.xpose.msra.mxu0 0
  %91 = vmatprep.mubr.bf16.mxu0 0
  %92 = vmatmul.mubr.bf16.gmra.mrb[0].mxu0 %v51
  %v93 = vpop.f32.mrb[0].mxu0
  %v94 = vadd.f32 %v32, %v93
  %v95 = vpop.f32.mrb[0].mxu0
  %v96 = vpop.f32.mrb[0].mxu0
  %v97 = vadd.f32 %v32, %v96
  %v98 = vpop.f32.mrb[0].mxu0
  %99 = vdwg.mxu0
  %v100 = vmul.f32 %v94, 0.5
  %v101 = vmul.f32 %v97, 0.5
  %v102 = vmul.f32 %v94, 0.044715
  %v103 = vmul.f32 %v97, 0.044715
  %v104 = vmul.f32 %v102, %v94
  %v105 = vmul.f32 %v103, %v97
  %v106 = vmul.f32 %v104, %v94
  %v107 = vmul.f32 %v105, %v97
  %v108 = vadd.f32 %v94, %v106
  %v109 = vadd.f32 %v97, %v107
  %v110 = vmul.f32 %v108, 0.7978846
  %v111 = vmul.f32 %v109, 0.7978846
  %v112 = vtanh.pop %v110
  %v113 = vtanh.pop %v111
  %v114 = vadd.f32 %v112, 1.0
  %v115 = vadd.f32 %v113, 1.0
  %v116 = vmul.f32 %v100, %v114
  %v117 = vmul.f32 %v101, %v115
  %v118 = vld [vmem:[%s3] sm:$0x1]
  %v119 = vld [vmem:[%s4] sm:$0x1]
  %v120 = vsel %vm49, %v116, 0.0
  %121 = vadd.xlane.f32.xlu0 %v120
  %v122 = vpop.xlane.xlu0 %121
  %v123 = vsel %vm49, %v117, 0.0
  %124 = vadd.xlane.f32.xlu0 %v123
  %v125 = vpop.xlane.xlu0 %124
  %v126 = vrcp.pop 32.0
  %v127 = vmul.f32 %v122, %v126
  %v128 = vmul.f32 %v125, %v126
  %v129 = vsub.f32 %v116, %v127
  %v130 = vsub.f32 %v117, %v128
  %v131 = vmul.f32 %v129, %v129
  %v132 = vmul.f32 %v130, %v130
  %v133 = vsel %vm49, %v131, 0.0
  %134 = vadd.xlane.f32.xlu0 %v133
  %v135 = vpop.xlane.xlu0 %134
  %v136 = vsel %vm49, %v132, 0.0
  %137 = vadd.xlane.f32.xlu0 %v136
  %v138 = vpop.xlane.xlu0 %137
  %v139 = vmul.f32 %v135, %v126
  %v140 = vmul.f32 %v138, %v126
  %v141 = vadd.f32 %v139, 1e-12
  %v142 = vadd.f32 %v140, 1e-12
  %v143 = vrsqrt.pop %v141
  %v144 = vrsqrt.pop %v142
  %v145 = vmul.f32 %v129, %v143
  %v146 = vmul.f32 %v130, %v144
  %v148 = vlaneseq
  %v149 = vshrl.u32 %v148, 7
  %v150 = vsub.s32 0, %v149
  %v151 = vrot.slane %v118, %v150
  %v153 = vmul.f32 %v151, %v145
  %v154 = vmul.f32 %v151, %v146
  %v156 = vlaneseq
  %v157 = vshrl.u32 %v156, 7
  %v158 = vsub.s32 0, %v157
  %v159 = vrot.slane %v119, %v158
  %v161 = vadd.f32 %v153, %v159
  %v162 = vadd.f32 %v154, %v159
  %v163 = vpack.c.bf16 %v162, %v161
  %v165 = vunpack.c.l.b16 %v163
  %v166 = vunpack.c.h.b16 %v163
  %v167 = vpack.c.b16 %v165, %v165
  %v168 = vpack.c.b16 %v166, %v166
  %vm171 = vcmask 257024
  %172 = vst.msk [vmem:[%s5] sm:$0xf] %vm171, %v167
  %173 = vst.msk [vmem:[%s5 + $0x4] sm:$0xf] %vm171, %v168
  // Predicated region
  $region22: #{fwd.24} parent=0 // pred_check
    _
  $region23: #{fwd.24} parent=0 // pred_check_branch
    %175 = sbr.rel (0) target = $region25
  $region24: #{fwd.24} parent=0 // pred_region
    _
  $region25: #{fwd.24} parent=0 // pred_fallthru
    _
  // Predicated region
  $region26: #{fwd.24} parent=0 // pred_check
    _
  $region27: #{fwd.24} parent=0 // pred_check_branch
    %177 = sbr.rel (0) target = $region29
  $region28: #{fwd.24} parent=0 // pred_region
    _
  $region29: #{fwd.24} parent=0 // pred_fallthru
    _

// kernel: fwd.18
$region0: #{fwd.18}
  #allocation0 [shape = 'u32[]', space=smem, size = 0x4, offset = 0x4, fixed_abs, tag = 'smem constant byte address 0x4 - core index']
  #allocation1 [shape = 'u32[144,128]{1,0:T(1,128)}', space=vmem, size = 0x12000, scoped, tag = 'internal scratch']
  %s0 = inlined_call_operand.vmem [shape: bf16[16,64], index: 0, kind: input, shape index: {}]
  %s1 = inlined_call_operand.vmem [shape: bf16[32,64], index: 1, kind: input, shape index: {}]
  %s2 = inlined_call_operand.vmem [shape: f32[1,32], index: 2, kind: input, shape index: {}]
  %s3 = inlined_call_operand.vmem [shape: bf16[16,32], index: 3, kind: input, shape index: {}]
  %s4 = inlined_call_operand.vmem [shape: f32[1,32], index: 4, kind: input, shape index: {}]
  %s5 = inlined_call_operand.vmem [shape: f32[1,32], index: 5, kind: input, shape index: {}]
  %s6 = inlined_call_operand.vmem [shape: bf16[16,32], index: 6, kind: output, shape index: {}]
  %s7 = sld [smem:[#allocation0]]
  $region34: #{fwd.18} parent=0
    _
  %s9 = ssub.s32 1, %s7
  %s10 = scalar_select 0, %s9, %s7
  // Predicated region
  $region2: #{fwd.18} parent=0 // pred_check
    _
  $region3: #{fwd.18} parent=0 // pred_check_branch
    %12 = sbr.rel (0) target = $region5
  $region4: #{fwd.18} parent=0 // pred_region
    _
  $region5: #{fwd.18} parent=0 // pred_fallthru
    _
  // Predicated region
  $region6: #{fwd.18} parent=0 // pred_check
    _
  $region7: #{fwd.18} parent=0 // pred_check_branch
    %14 = sbr.rel (0) target = $region9
  $region8: #{fwd.18} parent=0 // pred_region
    _
  $region9: #{fwd.18} parent=0 // pred_fallthru
    _
  // Predicated region
  $region10: #{fwd.18} parent=0 // pred_check
    _
  $region11: #{fwd.18} parent=0 // pred_check_branch
    %16 = sbr.rel (0) target = $region13
  $region12: #{fwd.18} parent=0 // pred_region
    _
  $region13: #{fwd.18} parent=0 // pred_fallthru
    _
  // Predicated region
  $region14: #{fwd.18} parent=0 // pred_check
    _
  $region15: #{fwd.18} parent=0 // pred_check_branch
    %18 = sbr.rel (0) target = $region17
  $region16: #{fwd.18} parent=0 // pred_region
    _
  $region17: #{fwd.18} parent=0 // pred_fallthru
    _
  // Predicated region
  $region18: #{fwd.18} parent=0 // pred_check
    _
  $region19: #{fwd.18} parent=0 // pred_check_branch
    %20 = sbr.rel (0) target = $region21
  $region20: #{fwd.18} parent=0 // pred_region
    _
  $region21: #{fwd.18} parent=0 // pred_fallthru
    _
  // Predicated region
  $region22: #{fwd.18} parent=0 // pred_check
    _
  $region23: #{fwd.18} parent=0 // pred_check_branch
    %22 = sbr.rel (0) target = $region25
  $region24: #{fwd.18} parent=0 // pred_region
    _
  $region25: #{fwd.18} parent=0 // pred_fallthru
    _
  %v24 = vld [vmem:[%s0] sm:$0xf]
  %v25 = vld [vmem:[%s0 + $0x4] sm:$0xf]
  %v26 = vld [vmem:[%s1] sm:$0xf]
  %v27 = vld [vmem:[%s1 + $0x4] sm:$0xf]
  %v28 = vld [vmem:[%s1 + $0x8] sm:$0xf]
  %v29 = vld [vmem:[%s1 + $0xc] sm:$0xf]
  %v30 = vld [vmem:[%s2] sm:$0x1]
  %v32 = vlaneseq
  %v33 = vshrl.u32 %v32, 7
  %v34 = vsub.s32 0, %v33
  %v35 = vrot.slane %v30, %v34
  %v39 = vunpack.c.l.b16 %v24
  %v40 = vunpack.c.l.b16 %v25
  %v41 = vpack.c.b16 %v40, %v39
  %v46 = vunpack.c.l.b16 %v26
  %v47 = vunpack.c.l.b16 %v27
  %v48 = vunpack.c.l.b16 %v28
  %v49 = vunpack.c.l.b16 %v29
  %v50 = vpack.c.b16 %v47, %v46
  %v51 = vpack.c.b16 %v49, %v48
  %vm52 = vcmask 523264
  %v54 = vsel %vm52, %v41, 0
  %v57 = vsel %vm52, %v50, 0
  %v60 = vsel %vm52, %v51, 0
  %62 = vmatprep.subr.bf16.mxu0 0
  %63 = vmatpush1.bf16.xpose.msra.mxu0 %v57
  %64 = vmatprep.subr.bf16.mxu0 0
  %65 = vmatpush1.bf16.xpose.msra.mxu0 %v60
  %66 = vmatprep.subr.bf16.mxu0 0
  %67 = vmatpush1.bf16.xpose.msra.mxu0 0
  %68 = vmatprep.subr.bf16.mxu0 0
  %69 = vmatpush1.bf16.xpose.msra.mxu0 0
  %70 = vmatprep.subr.bf16.mxu0 0
  %71 = vmatpush1.bf16.xpose.msra.mxu0 0
  %72 = vmatprep.subr.bf16.mxu0 0
  %73 = vmatpush1.bf16.xpose.msra.mxu0 0
  %74 = vmatprep.subr.bf16.mxu0 0
  %75 = vmatpush1.bf16.xpose.msra.mxu0 0
  %76 = vmatprep.subr.bf16.mxu0 0
  %77 = vmatpush1.bf16.xpose.msra.mxu0 0
  %78 = vmatprep.subr.bf16.mxu0 0
  %79 = vmatpush1.bf16.xpose.msra.mxu0 0
  %80 = vmatprep.subr.bf16.mxu0 0
  %81 = vmatpush1.bf16.xpose.msra.mxu0 0
  %82 = vmatprep.subr.bf16.mxu0 0
  %83 = vmatpush1.bf16.xpose.msra.mxu0 0
  %84 = vmatprep.subr.bf16.mxu0 0
  %85 = vmatpush1.bf16.xpose.msra.mxu0 0
  %86 = vmatprep.subr.bf16.mxu0 0
  %87 = vmatpush1.bf16.xpose.msra.mxu0 0
  %88 = vmatprep.subr.bf16.mxu0 0
  %89 = vmatpush1.bf16.xpose.msra.mxu0 0
  %90 = vmatprep.subr.bf16.mxu0 0
  %91 = vmatpush1.bf16.xpose.msra.mxu0 0
  %92 = vmatprep.subr.bf16.mxu0 0
  %93 = vmatpush1.bf16.xpose.msra.mxu0 0
  %94 = vmatprep.mubr.bf16.mxu0 0
  %95 = vmatmul.mubr.bf16.gmra.mrb[0].mxu0 %v54
  %v96 = vpop.f32.mrb[0].mxu0
  %v97 = vadd.f32 %v35, %v96
  %v98 = vpop.f32.mrb[0].mxu0
  %v99 = vpop.f32.mrb[0].mxu0
  %v100 = vadd.f32 %v35, %v99
  %v101 = vpop.f32.mrb[0].mxu0
  %102 = vdwg.mxu0
  %v103 = vld [vmem:[%s3] sm:$0xf]
  %v104 = vld [vmem:[%s3 + $0x4] sm:$0xf]
  %v105 = vunpack.c.l.bf16 %v103
  %v106 = vunpack.c.l.bf16 %v104
  %v107 = vadd.f32 %v97, %v105
  %v108 = vadd.f32 %v100, %v106
  %v109 = vld [vmem:[%s4] sm:$0x1]
  %v110 = vld [vmem:[%s5] sm:$0x1]
  %vm111 = vcmask 261120
  %v112 = vsel %vm111, %v107, 0.0
  %113 = vadd.xlane.f32.xlu0 %v112
  %v114 = vpop.xlane.xlu0 %113
  %v115 = vsel %vm111, %v108, 0.0
  %116 = vadd.xlane.f32.xlu0 %v115
  %v117 = vpop.xlane.xlu0 %116
  %v118 = vrcp.pop 32.0
  %v119 = vmul.f32 %v114, %v118
  %v120 = vmul.f32 %v117, %v118
  %v121 = vsub.f32 %v107, %v119
  %v122 = vsub.f32 %v108, %v120
  %v123 = vmul.f32 %v121, %v121
  %v124 = vmul.f32 %v122, %v122
  %v125 = vsel %vm111, %v123, 0.0
  %126 = vadd.xlane.f32.xlu0 %v125
  %v127 = vpop.xlane.xlu0 %126
  %v128 = vsel %vm111, %v124, 0.0
  %129 = vadd.xlane.f32.xlu0 %v128
  %v130 = vpop.xlane.xlu0 %129
  %v131 = vmul.f32 %v127, %v118
  %v132 = vmul.f32 %v130, %v118
  %v133 = vadd.f32 %v131, 1e-12
  %v134 = vadd.f32 %v132, 1e-12
  %v135 = vrsqrt.pop %v133
  %v136 = vrsqrt.pop %v134
  %v137 = vmul.f32 %v121, %v135
  %v138 = vmul.f32 %v122, %v136
  %v140 = vlaneseq
  %v141 = vshrl.u32 %v140, 7
  %v142 = vsub.s32 0, %v141
  %v143 = vrot.slane %v109, %v142
  %v145 = vmul.f32 %v143, %v137
  %v146 = vmul.f32 %v143, %v138
  %v148 = vlaneseq
  %v149 = vshrl.u32 %v148, 7
  %v150 = vsub.s32 0, %v149
  %v151 = vrot.slane %v110, %v150
  %v153 = vadd.f32 %v145, %v151
  %v154 = vadd.f32 %v146, %v151
  %v155 = vpack.c.bf16 %v154, %v153
  %v157 = vunpack.c.l.b16 %v155
  %v158 = vunpack.c.h.b16 %v155
  %v159 = vpack.c.b16 %v157, %v157
  %v160 = vpack.c.b16 %v158, %v158
  %vm163 = vcmask 257024
  %164 = vst.msk [vmem:[%s6] sm:$0xf] %vm163, %v159
  %165 = vst.msk [vmem:[%s6 + $0x4] sm:$0xf] %vm163, %v160
  // Predicated region
  $region26: #{fwd.18} parent=0 // pred_check
    _
  $region27: #{fwd.18} parent=0 // pred_check_branch
    %167 = sbr.rel (0) target = $region29
  $region28: #{fwd.18} parent=0 // pred_region
    _
  $region29: #{fwd.18} parent=0 // pred_fallthru
    _
  // Predicated region
  $region30: #{fwd.18} parent=0 // pred_check
    _
  $region31: #{fwd.18} parent=0 // pred_check_branch
    %169 = sbr.rel (0) target = $region33
  $region32: #{fwd.18} parent=0 // pred_region
    _
  $region33: #{fwd.18} parent=0 // pred_fallthru
    _

// kernel: fwd.25
$region0: #{fwd.25}
  #allocation0 [shape = 'u32[]', space=smem, size = 0x4, offset = 0x4, fixed_abs, tag = 'smem constant byte address 0x4 - core index']
  #allocation1 [shape = 'u32[144,128]{1,0:T(1,128)}', space=vmem, size = 0x12000, scoped, tag = 'internal scratch']
  #allocation2 [shape = 'bf16[16,16]{1,0:T(16,128)(2,1)}', space=vmem, size = 0x1000, scoped, tag = 'scratch operand']
  %s0 = inlined_call_operand.vmem [shape: bf16[16,32], index: 0, kind: input, shape index: {}]
  %s1 = inlined_call_operand.vmem [shape: bf16[32,16], index: 1, kind: input, shape index: {}]
  %s2 = inlined_call_operand.vmem [shape: bf16[64,16], index: 2, kind: input, shape index: {}]
  %s3 = inlined_call_operand.vmem [shape: f32[1,64], index: 3, kind: input, shape index: {}]
  %s4 = inlined_call_operand.hbm [shape: f32[16,64], index: 4, kind: output, shape index: {}]
  %s5 = sld [smem:[#allocation0]]
  $region30: #{fwd.25} parent=0
    _
  %s7 = ssub.s32 1, %s5
  %s8 = scalar_select 0, %s7, %s5
  $region1: #{fwd.25} parent=0
    #allocation3 [shape = 'u8[8192]{0}', space=vmem, size = 0x2000, scoped, tag = 'output window, operand 0, single buffered']
    #allocation4 [shape = 's32[1]{0}', space=sflag, size = 0x4, scoped, tag = 'scoped memory for fwd.25']
    %9 = vsyncpa [#allocation4], 0
    // Predicated region
    $region2: #{fwd.25} parent=1 // pred_check
      _
    $region3: #{fwd.25} parent=1 // pred_check_branch
      %11 = sbr.rel (0) target = $region5
    $region4: #{fwd.25} parent=1 // pred_region
      _
    $region5: #{fwd.25} parent=1 // pred_fallthru
      _
    // Predicated region
    $region6: #{fwd.25} parent=1 // pred_check
      _
    $region7: #{fwd.25} parent=1 // pred_check_branch
      %13 = sbr.rel (0) target = $region9
    $region8: #{fwd.25} parent=1 // pred_region
      _
    $region9: #{fwd.25} parent=1 // pred_fallthru
      _
    // Predicated region
    $region10: #{fwd.25} parent=1 // pred_check
      _
    $region11: #{fwd.25} parent=1 // pred_check_branch
      %15 = sbr.rel (0) target = $region13
    $region12: #{fwd.25} parent=1 // pred_region
      _
    $region13: #{fwd.25} parent=1 // pred_fallthru
      _
    // Predicated region
    $region14: #{fwd.25} parent=1 // pred_check
      _
    $region15: #{fwd.25} parent=1 // pred_check_branch
      %17 = sbr.rel (0) target = $region17
    $region16: #{fwd.25} parent=1 // pred_region
      _
    $region17: #{fwd.25} parent=1 // pred_fallthru
      _
    %p19 = scmp.eq.s32.totalorder 0, 0
    // Predicated region
    $region18: #{fwd.25} parent=1 // pred_check
      %p20 = pneg %p19
    $region19: #{fwd.25} parent=1 // pred_check_branch
      %22 = sbr.rel (%p20) target = $region21
    $region20: #{fwd.25} parent=1 // pred_region
      %v23 = vld [vmem:[%s0] sm:$0xf]
      %v24 = vld [vmem:[%s0 + $0x4] sm:$0xf]
      %v25 = vld [vmem:[%s1] sm:$0xf]
      %v26 = vld [vmem:[%s1 + $0x4] sm:$0xf]
      %v27 = vld [vmem:[%s1 + $0x8] sm:$0xf]
      %v28 = vld [vmem:[%s1 + $0xc] sm:$0xf]
      %v31 = vunpack.c.l.b16 %v23
      %v32 = vunpack.c.l.b16 %v24
      %v33 = vpack.c.b16 %v32, %v31
      %v38 = vunpack.c.l.b16 %v25
      %v39 = vunpack.c.l.b16 %v26
      %v40 = vunpack.c.l.b16 %v27
      %v41 = vunpack.c.l.b16 %v28
      %v42 = vpack.c.b16 %v39, %v38
      %v43 = vpack.c.b16 %v41, %v40
      %vm46 = vcmask 261120
      %v48 = vsel %vm46, %v33, 0
      %50 = vmatprep.subr.bf16.mxu0 0
      %51 = vmatpush1.bf16.msra.mxu0 %v42
      %52 = vmatprep.subr.bf16.mxu0 0
      %53 = vmatpush1.bf16.msra.mxu0 %v43
      %54 = vmatprep.subr.bf16.mxu0 0
      %55 = vmatpush1.bf16.msra.mxu0 0
      %56 = vmatprep.subr.bf16.mxu0 0
      %57 = vmatpush1.bf16.msra.mxu0 0
      %58 = vmatprep.subr.bf16.mxu0 0
      %59 = vmatpush1.bf16.msra.mxu0 0
      %60 = vmatprep.subr.bf16.mxu0 0
      %61 = vmatpush1.bf16.msra.mxu0 0
      %62 = vmatprep.subr.bf16.mxu0 0
      %63 = vmatpush1.bf16.msra.mxu0 0
      %64 = vmatprep.subr.bf16.mxu0 0
      %65 = vmatpush1.bf16.msra.mxu0 0
      %66 = vmatprep.subr.bf16.mxu0 0
      %67 = vmatpush1.bf16.msra.mxu0 0
      %68 = vmatprep.subr.bf16.mxu0 0
      %69 = vmatpush1.bf16.msra.mxu0 0
      %70 = vmatprep.subr.bf16.mxu0 0
      %71 = vmatpush1.bf16.msra.mxu0 0
      %72 = vmatprep.subr.bf16.mxu0 0
      %73 = vmatpush1.bf16.msra.mxu0 0
      %74 = vmatprep.subr.bf16.mxu0 0
      %75 = vmatpush1.bf16.msra.mxu0 0
      %76 = vmatprep.subr.bf16.mxu0 0
      %77 = vmatpush1.bf16.msra.mxu0 0
      %78 = vmatprep.subr.bf16.mxu0 0
      %79 = vmatpush1.bf16.msra.mxu0 0
      %80 = vmatprep.subr.bf16.mxu0 0
      %81 = vmatpush1.bf16.msra.mxu0 0
      %82 = vmatprep.mubr.bf16.mxu0 0
      %83 = vmatmul.mubr.bf16.gmra.mrb[0].mxu0 %v48
      %v84 = vpop.f32.mrb[0].mxu0
      %v85 = vadd.f32 0.0, %v84
      %v86 = vpop.f32.mrb[0].mxu0
      %v87 = vpop.f32.mrb[0].mxu0
      %v88 = vadd.f32 0.0, %v87
      %v89 = vpop.f32.mrb[0].mxu0
      %90 = vdwg.mxu0
      %v91 = vpack.c.bf16 %v88, %v85
      %vm92 = vcmask 130048
      %93 = vst.msk [vmem:[#allocation2] sm:$0xff] %vm92, %v91
    $region21: #{fwd.25} parent=1 // pred_fallthru
      _
    %v94 = vld [vmem:[#allocation2] sm:$0xff]
    %v95 = vld [vmem:[%s2] sm:$0xf]
    %v96 = vld [vmem:[%s2 + $0x4] sm:$0xf]
    %v97 = vld [vmem:[%s2 + $0x8] sm:$0xf]
    %v98 = vld [vmem:[%s2 + $0xc] sm:$0xf]
    %v99 = vld [vmem:[%s2 + $0x10] sm:$0xf]
    %v100 = vld [vmem:[%s2 + $0x14] sm:$0xf]
    %v101 = vld [vmem:[%s2 + $0x18] sm:$0xf]
    %v102 = vld [vmem:[%s2 + $0x1c] sm:$0xf]
    %v103 = vld [vmem:[%s3] sm:$0x1]
    %v105 = vlaneseq
    %v106 = vshrl.u32 %v105, 7
    %v107 = vsub.s32 0, %v106
    %v108 = vrot.slane %v103, %v107
    %v118 = vunpack.c.l.b16 %v95
    %v119 = vunpack.c.l.b16 %v96
    %v120 = vunpack.c.l.b16 %v97
    %v121 = vunpack.c.l.b16 %v98
    %v122 = vunpack.c.l.b16 %v99
    %v123 = vunpack.c.l.b16 %v100
    %v124 = vunpack.c.l.b16 %v101
    %v125 = vunpack.c.l.b16 %v102
    %v126 = vpack.c.b16 %v119, %v118
    %v127 = vpack.c.b16 %v121, %v120
    %v128 = vpack.c.b16 %v123, %v122
    %v129 = vpack.c.b16 %v125, %v124
    %vm130 = vcmask 130048
    %v132 = vsel %vm130, %v94, 0
    %v135 = vsel %vm130, %v126, 0
    %v138 = vsel %vm130, %v127, 0
    %v141 = vsel %vm130, %v128, 0
    %v144 = vsel %vm130, %v129, 0
    %146 = vmatprep.subr.bf16.mxu0 0
    %147 = vmatpush1.bf16.xpose.msra.mxu0 %v135
    %148 = vmatprep.subr.bf16.mxu0 0
    %149 = vmatpush1.bf16.xpose.msra.mxu0 %v138
    %150 = vmatprep.subr.bf16.mxu0 0
    %151 = vmatpush1.bf16.xpose.msra.mxu0 %v141
    %152 = vmatprep.subr.bf16.mxu0 0
    %153 = vmatpush1.bf16.xpose.msra.mxu0 %v144
    %154 = vmatprep.subr.bf16.mxu0 0
    %155 = vmatpush1.bf16.xpose.msra.mxu0 0
    %156 = vmatprep.subr.bf16.mxu0 0
    %157 = vmatpush1.bf16.xpose.msra.mxu0 0
    %158 = vmatprep.subr.bf16.mxu0 0
    %159 = vmatpush1.bf16.xpose.msra.mxu0 0
    %160 = vmatprep.subr.bf16.mxu0 0
    %161 = vmatpush1.bf16.xpose.msra.mxu0 0
    %162 = vmatprep.subr.bf16.mxu0 0
    %163 = vmatpush1.bf16.xpose.msra.mxu0 0
    %164 = vmatprep.subr.bf16.mxu0 0
    %165 = vmatpush1.bf16.xpose.msra.mxu0 0
    %166 = vmatprep.subr.bf16.mxu0 0
    %167 = vmatpush1.bf16.xpose.msra.mxu0 0
    %168 = vmatprep.subr.bf16.mxu0 0
    %169 = vmatpush1.bf16.xpose.msra.mxu0 0
    %170 = vmatprep.subr.bf16.mxu0 0
    %171 = vmatpush1.bf16.xpose.msra.mxu0 0
    %172 = vmatprep.subr.bf16.mxu0 0
    %173 = vmatpush1.bf16.xpose.msra.mxu0 0
    %174 = vmatprep.subr.bf16.mxu0 0
    %175 = vmatpush1.bf16.xpose.msra.mxu0 0
    %176 = vmatprep.subr.bf16.mxu0 0
    %177 = vmatpush1.bf16.xpose.msra.mxu0 0
    %178 = vmatprep.mubr.bf16.mxu0 0
    %179 = vmatmul.mubr.bf16.gmra.mrb[0].mxu0 %v132
    %v180 = vpop.f32.mrb[0].mxu0
    %v181 = vadd.f32 %v108, %v180
    %v182 = vpop.f32.mrb[0].mxu0
    %v183 = vpop.f32.mrb[0].mxu0
    %v184 = vadd.f32 %v108, %v183
    %v185 = vpop.f32.mrb[0].mxu0
    %186 = vdwg.mxu0
    %vm187 = vcmask 523264
    %188 = vst.msk [vmem:[#allocation3] sm:$0xff] %vm187, %v181
    %189 = vst.msk [vmem:[#allocation3 + $0x8] sm:$0xff] %vm187, %v184
    // Predicated region
    $region22: #{fwd.25} parent=1 // pred_check
      _
    $region23: #{fwd.25} parent=1 // pred_check_branch
      %191 = sbr.rel (0) target = $region25
    $region24: #{fwd.25} parent=1 // pred_region
      %s193 = ssub.s32 256, 256
      %194 = vsyncadd [#allocation4], %s193
      %s195 = sshll.u32 [#allocation3], 4
      %s196 = int_to_ptr.vmem [resolvable:$true] %s195
      %201 = dma.vmem_to_hbm [thread:$0]  %s196, 256, %s4, [#allocation4], 128, 128, 8
    $region25: #{fwd.25} parent=1 // pred_fallthru
      _
    // Predicated region
    $region26: #{fwd.25} parent=1 // pred_check
      _
    $region27: #{fwd.25} parent=1 // pred_check_branch
      %203 = sbr.rel (0) target = $region29
    $region28: #{fwd.25} parent=1 // pred_region
      %204 = dma.done [#allocation4], 256
    $region29: #{fwd.25} parent=1 // pred_fallthru
      _
    %205 = vsyncpa [#allocation4], 1

</llo_original>
